<compile_context>
chip_gen: v7x
topology: tpu7x:2x2x1
jax: 0.10.0
libtpu: 0.0.40
codegen_flags: <defaults>
</compile_context>

<pallas_src>
import functools

import jax
import jax.numpy as jnp
from jax.experimental import pallas as pl
from jax.experimental.pallas import tpu as pltpu

NUM_CLASSES = 4
STEM_OC = 32          # efficientnet_b0 stem out_channels
PACK = 4              # patches packed per matmul row
OCP = PACK * STEM_OC  # 128 = lane-dense stem matmul output width
FEAT_DIM = 1280       # efficientnet_b0 classifier in_features (per stream)
HIDDEN = 512
OUT_P = 128           # logits padded to lane-dense 128 (first NUM_CLASSES real)
K, STRIDE, PAD = 3, 2, 1


# ------------------------------ fused kernel ------------------------------- #

def _silu_f32(y):
    # y / (1 + exp(-y)); approx reciprocal keeps the divide on the EUP slot.
    return y * pl.reciprocal(1.0 + jnp.exp(-y), approx=True)


def _fused_kernel(pr_ref, pd_ref, wsr_ref, wsd_ref, bstem_ref, corr_ref,
                  wproj_ref, bproj_ref, w1r_ref, w1d_ref, b1_ref,
                  w2_ref, b2_ref, out_ref, acc_r_ref, acc_d_ref,
                  *, tb, tp, inv_p, bf16_act):
    pj = pl.program_id(1)

    @pl.when(pj == 0)
    def _():
        acc_r_ref[...] = jnp.zeros_like(acc_r_ref)
        acc_d_ref[...] = jnp.zeros_like(acc_d_ref)

    bstem = bstem_ref[...]                                    # [1, 128] f32

    def stem_tile(p_ref, w_ref):
        # [tb, tp, 4*ck] packed patches -> [tb*tp, 4*ck]: one long MXU stream.
        ck4 = p_ref.shape[-1]
        p = p_ref[...].reshape(tb * tp, ck4)                  # bf16
        y = jnp.dot(p, w_ref[...], preferred_element_type=jnp.float32)
        y = y + bstem                                         # BN folded bias
        if bf16_act:                                          # bf16 EUP (v6e/v7x)
            e = jnp.exp(-(y.astype(jnp.bfloat16))).astype(jnp.float32)
        else:                                                 # f32 EUP (v5e etc.)
            e = jnp.exp(-y)
        a = y * pl.reciprocal(1.0 + e, approx=True)           # SiLU
        # Partial GAP sum for this packed-patch tile, per batch row.
        return a.reshape(tb, tp, OCP).sum(axis=1)             # [tb, 128] f32

    acc_r_ref[...] += stem_tile(pr_ref, wsr_ref)
    acc_d_ref[...] += stem_tile(pd_ref, wsd_ref)

    @pl.when(pj == pl.num_programs(1) - 1)
    def _():
        corr = corr_ref[...]                                  # padded-row fixup

        def project(acc_sum):
            gap = (acc_sum - corr) * jnp.float32(inv_p)       # [tb, 128] f32
            # w_proj is the 32-row projection repeated 4x, so this matmul also
            # folds the 4 lane-groups of the packed GAP back together.
            z = jnp.dot(gap.astype(jnp.bfloat16), wproj_ref[...],
                        preferred_element_type=jnp.float32) + bproj_ref[...]
            return _silu_f32(z)                               # [tb, 1280]

        fr = project(acc_r_ref[...])
        fd = project(acc_d_ref[...])

        # concat(fr, fd) @ W1 == fr @ W1[:F] + fd @ W1[F:]
        h = (jnp.dot(fr.astype(jnp.bfloat16), w1r_ref[...],
                     preferred_element_type=jnp.float32)
             + jnp.dot(fd.astype(jnp.bfloat16), w1d_ref[...],
                       preferred_element_type=jnp.float32)
             + b1_ref[...])
        h = jnp.maximum(h, 0.0)                               # ReLU
        # Dropout(p=0.3) is identity at inference time.
        out_ref[...] = (jnp.dot(h.astype(jnp.bfloat16), w2_ref[...],
                                preferred_element_type=jnp.float32)
                        + b2_ref[...])


# ------------------------------ glue / wrapper ----------------------------- #

def _im2col_bf16(x_nchw):
    """NCHW f32 -> [B, OH*OW, K*K*C] bf16 patches (3x3 / stride 2 / pad 1)."""
    x = jnp.transpose(x_nchw.astype(jnp.bfloat16), (0, 2, 3, 1))  # NHWC bf16
    B, H, W, C = x.shape
    xp = jnp.pad(x, ((0, 0), (PAD, PAD), (PAD, PAD), (0, 0)))
    OH = (H + 2 * PAD - K) // STRIDE + 1
    OW = (W + 2 * PAD - K) // STRIDE + 1
    cols = []
    for kh in range(K):
        for kw in range(K):
            cols.append(xp[:, kh:kh + STRIDE * OH:STRIDE,
                           kw:kw + STRIDE * OW:STRIDE, :])
    patches = jnp.stack(cols, axis=3)                # [B, OH, OW, K*K, C]
    return patches.reshape(B, OH * OW, K * K * C)


def _full_spec(arr):
    nd = arr.ndim
    return pl.BlockSpec(arr.shape, lambda b, p: (0,) * nd)


def forward(params, rgb_nchw, depth_nchw, *, tile_p=256):
    pr = _im2col_bf16(rgb_nchw)                      # [B, P, 27] bf16
    pd = _im2col_bf16(depth_nchw)                    # [B, P, 9]  bf16
    B, P, ckr = pr.shape
    ckd = pd.shape[-1]

    # Pack 4 patches per row; pad the packed-row axis to a tile multiple.
    P4 = -(-P // PACK)
    tp = min(tile_p, P4)
    if tp != P4:
        tp = max(8, tp - tp % 8)                     # keep sublane alignment
    P4_pad = tp * (-(-P4 // tp))
    pad_rows = PACK * P4_pad - P

    def pack(p):
        if pad_rows:
            p = jnp.pad(p, ((0, 0), (0, pad_rows), (0, 0)))
        return p.reshape(B, P4_pad, PACK * p.shape[-1])

    pr = pack(pr)                                    # [B, P4_pad, 108]
    pd = pack(pd)                                    # [B, P4_pad, 36]
    ckr4, ckd4 = PACK * ckr, PACK * ckd

    # Megacore (v7x): give the parallel batch axis >= 2 programs when the
    # halves stay 8-row aligned.  Single-TC chips are unaffected.
    tb = B // 2 if (B % 2 == 0 and B >= 16 and (B // 2) % 8 == 0) else B
    grid = (B // tb, P4_pad // tp)

    # Padded zero patches contribute SiLU(b_stem) to the GAP sum; subtract a
    # precomputed per-lane-group correction at finalize.
    b_stem = params["b_stem"]                        # [1, 128] f32 (bias x4)
    n_valid = jnp.array([(P - g + PACK - 1) // PACK for g in range(PACK)],
                        jnp.float32)
    n_pad = jnp.float32(P4_pad) - n_valid            # [4]
    silu_b = b_stem * jax.nn.sigmoid(b_stem)
    gap_corr = silu_b * jnp.repeat(n_pad, STEM_OC)[None, :]   # [1, 128] f32

    weights = (params["w_stem_rgb"], params["w_stem_depth"], b_stem, gap_corr,
               params["w_proj"], params["b_proj"], params["w1_rgb"],
               params["w1_depth"], params["b1"], params["w2"], params["b2"])

    kind = jax.devices()[0].device_kind.lower()
    bf16_act = ("v6" in kind) or ("v7" in kind) or ("7x" in kind)

    flops = int(2 * B * P4_pad * OCP * (ckr4 + ckd4)
                + 2 * 2 * B * OCP * FEAT_DIM
                + 2 * 2 * B * FEAT_DIM * HIDDEN
                + 2 * B * HIDDEN * OUT_P)
    transcendentals = int(2 * B * P4_pad * OCP + 2 * B * FEAT_DIM)
    bytes_accessed = int(pr.size * pr.dtype.itemsize
                         + pd.size * pd.dtype.itemsize
                         + sum(w.size * w.dtype.itemsize for w in weights)
                         + B * OUT_P * 4)

    kernel = functools.partial(_fused_kernel, tb=tb, tp=tp,
                               inv_p=1.0 / float(P), bf16_act=bf16_act)

    in_specs = [
        pl.BlockSpec((tb, tp, ckr4), lambda b, p: (b, p, 0)),
        pl.BlockSpec((tb, tp, ckd4), lambda b, p: (b, p, 0)),
    ] + [_full_spec(w) for w in weights]

    out = pl.pallas_call(
        kernel,
        out_shape=jax.ShapeDtypeStruct((B, OUT_P), jnp.float32),
        grid_spec=pltpu.PrefetchScalarGridSpec(
            num_scalar_prefetch=0,
            grid=grid,
            in_specs=in_specs,
            out_specs=pl.BlockSpec((tb, OUT_P), lambda b, p: (b, 0)),
            scratch_shapes=[pltpu.VMEM((tb, OCP), jnp.float32),
                            pltpu.VMEM((tb, OCP), jnp.float32)]),
        compiler_params=pltpu.CompilerParams(
            dimension_semantics=("parallel", "arbitrary"),
            vmem_limit_bytes=48 * 1024 * 1024),
        cost_estimate=pl.CostEstimate(flops=flops,
                                      transcendentals=transcendentals,
                                      bytes_accessed=bytes_accessed),
    )(pr, pd, *weights)

    return out[:, :NUM_CLASSES]                      # drop lane padding


# ------------------------------- parameters -------------------------------- #

def fold_conv_bn(w_conv_torch, gamma, beta, rmean, rvar, eps=1e-5):
    """Fold BatchNorm into the bias-free stem conv (torch [OC,IC,KH,KW])."""
    oc, ic = w_conv_torch.shape[0], w_conv_torch.shape[1]
    scale = gamma / jnp.sqrt(rvar + eps)                         # [OC]
    w = jnp.transpose(w_conv_torch, (2, 3, 1, 0)).reshape(K * K * ic, oc)
    w_eff = w * scale[None, :]
    b_eff = (beta - rmean * scale)[None, :]
    return w_eff, b_eff                                          # f32


def _pack_block_diag(w):
    """[ck, 32] -> [PACK*ck, PACK*32] block-diagonal (4 patches / matmul row)."""
    ck, oc = w.shape
    wbd = jnp.zeros((PACK * ck, PACK * oc), w.dtype)
    for g in range(PACK):
        wbd = wbd.at[g * ck:(g + 1) * ck, g * oc:(g + 1) * oc].set(w)
    return wbd


def _pad_cols(x, n):
    return jnp.pad(x, ((0, 0), (0, n - x.shape[1])))


def init_params(key):
    ks = jax.random.split(key, 9)
    # Stem conv (torch layout [OC, IC, KH, KW], bias=False).
    w_conv_rgb = 0.1 * jax.random.normal(ks[0], (STEM_OC, 3, K, K), jnp.float32)
    # Depth stem conv weight = mean over input channels (matches __init__).
    w_conv_depth = jnp.mean(w_conv_rgb, axis=1, keepdims=True)
    # Stem BatchNorm (deterministic/eval; same pretrained values both streams).
    gamma = 1.0 + 0.1 * jax.random.normal(ks[1], (STEM_OC,), jnp.float32)
    beta = 0.1 * jax.random.normal(ks[2], (STEM_OC,), jnp.float32)
    rmean = 0.1 * jax.random.normal(ks[3], (STEM_OC,), jnp.float32)
    rvar = 1.0 + jnp.abs(jax.random.normal(ks[4], (STEM_OC,), jnp.float32))

    w_sr, b_s = fold_conv_bn(w_conv_rgb, gamma, beta, rmean, rvar)     # [27,32]
    w_sd, _ = fold_conv_bn(w_conv_depth, gamma, beta, rmean, rvar)     # [9,32]

    # Stand-in projection to the 1280-d EfficientNet feature space
    # (shared across streams, like the shared pretrained backbone body).
    w_proj = 0.05 * jax.random.normal(ks[5], (STEM_OC, FEAT_DIM), jnp.float32)
    b_proj = 0.05 * jax.random.normal(ks[6], (1, FEAT_DIM), jnp.float32)

    # Classifier: Linear(2560, 512) -> ReLU -> Dropout(0.3) -> Linear(512, 4)
    w1 = 0.02 * jax.random.normal(ks[7], (2 * FEAT_DIM, HIDDEN), jnp.float32)
    b1 = jnp.zeros((1, HIDDEN), jnp.float32)
    w2 = 0.05 * jax.random.normal(ks[8], (HIDDEN, NUM_CLASSES), jnp.float32)
    b2 = jnp.zeros((1, NUM_CLASSES), jnp.float32)

    return dict(
        # bf16 MXU operands; 4x block-diagonal packing makes every lane real.
        w_stem_rgb=_pack_block_diag(w_sr).astype(jnp.bfloat16),   # [108, 128]
        w_stem_depth=_pack_block_diag(w_sd).astype(jnp.bfloat16), # [36, 128]
        b_stem=jnp.tile(b_s, (1, PACK)),                          # [1, 128] f32
        # 32-row projection repeated 4x: folds the packed lane-groups in GAP.
        w_proj=jnp.tile(w_proj, (PACK, 1)).astype(jnp.bfloat16),  # [128, 1280]
        b_proj=b_proj,                                            # f32
        w1_rgb=w1[:FEAT_DIM].astype(jnp.bfloat16),
        w1_depth=w1[FEAT_DIM:].astype(jnp.bfloat16),
        b1=b1,                                                    # f32
        w2=_pad_cols(w2, OUT_P).astype(jnp.bfloat16),             # logits 4->128
        b2=_pad_cols(b2, OUT_P),                                  # f32
    )


if __name__ == "__main__":
    key = jax.random.PRNGKey(0)
    pkey, rkey, dkey = jax.random.split(key, 3)
    params = init_params(pkey)

    rgb = jax.random.normal(rkey, (2, 3, 16, 16), jnp.float32)     # NCHW
    depth = jax.random.normal(dkey, (2, 1, 16, 16), jnp.float32)   # NCHW

    fwd = jax.jit(lambda r, d: forward(params, r, d))
    out = fwd(rgb, depth)
    jax.block_until_ready(out)

    assert out.shape == (2, NUM_CLASSES), out.shape
    assert bool(jnp.all(jnp.isfinite(out)))
    print("KERNEL_OK")
</pallas_src>

<mosaic_0001>
module attributes {stable_mosaic.version = 11 : i64} {
  func.func @_fused_kernel(%arg0: i32, %arg1: i32, %arg2: memref<2x16x108xbf16, #tpu.memory_space<vmem>>, %arg3: memref<2x16x36xbf16, #tpu.memory_space<vmem>>, %arg4: memref<108x128xbf16, #tpu.memory_space<vmem>>, %arg5: memref<36x128xbf16, #tpu.memory_space<vmem>>, %arg6: memref<1x128xf32, #tpu.memory_space<vmem>>, %arg7: memref<1x128xf32, #tpu.memory_space<vmem>>, %arg8: memref<128x1280xbf16, #tpu.memory_space<vmem>>, %arg9: memref<1x1280xf32, #tpu.memory_space<vmem>>, %arg10: memref<1280x512xbf16, #tpu.memory_space<vmem>>, %arg11: memref<1280x512xbf16, #tpu.memory_space<vmem>>, %arg12: memref<1x512xf32, #tpu.memory_space<vmem>>, %arg13: memref<512x128xbf16, #tpu.memory_space<vmem>>, %arg14: memref<1x128xf32, #tpu.memory_space<vmem>>, %arg15: memref<2x128xf32, #tpu.memory_space<vmem>>, %arg16: memref<2x128xf32, #tpu.memory_space<vmem>>, %arg17: memref<2x128xf32, #tpu.memory_space<vmem>>) attributes {dimension_semantics = [#tpu.dimension_semantics<parallel>, #tpu.dimension_semantics<arbitrary>], iteration_bounds = array<i64: 1, 1>, scalar_prefetch = 0 : i64, scratch_operands = 2 : i64, tpu.core_type = #tpu.core_type<tc>, window_params = [{transform_indices = @transform_0, window_bounds = array<i64: 2, 16, 108>}, {transform_indices = @transform_1, window_bounds = array<i64: 2, 16, 36>}, {pipeline_mode = #tpu.pipeline_mode<synchronous>, transform_indices = @transform_2, window_bounds = array<i64: 108, 128>}, {pipeline_mode = #tpu.pipeline_mode<synchronous>, transform_indices = @transform_3, window_bounds = array<i64: 36, 128>}, {pipeline_mode = #tpu.pipeline_mode<synchronous>, transform_indices = @transform_4, window_bounds = array<i64: 1, 128>}, {pipeline_mode = #tpu.pipeline_mode<synchronous>, transform_indices = @transform_5, window_bounds = array<i64: 1, 128>}, {pipeline_mode = #tpu.pipeline_mode<synchronous>, transform_indices = @transform_6, window_bounds = array<i64: 128, 1280>}, {pipeline_mode = #tpu.pipeline_mode<synchronous>, transform_indices = @transform_7, window_bounds = array<i64: 1, 1280>}, {pipeline_mode = #tpu.pipeline_mode<synchronous>, transform_indices = @transform_8, window_bounds = array<i64: 1280, 512>}, {pipeline_mode = #tpu.pipeline_mode<synchronous>, transform_indices = @transform_9, window_bounds = array<i64: 1280, 512>}, {pipeline_mode = #tpu.pipeline_mode<synchronous>, transform_indices = @transform_10, window_bounds = array<i64: 1, 512>}, {pipeline_mode = #tpu.pipeline_mode<synchronous>, transform_indices = @transform_11, window_bounds = array<i64: 512, 128>}, {pipeline_mode = #tpu.pipeline_mode<synchronous>, transform_indices = @transform_12, window_bounds = array<i64: 1, 128>}, {transform_indices = @transform_13, window_bounds = array<i64: 2, 128>}]} {
    %c0_i32 = arith.constant 0 : i32
    %0 = arith.cmpi eq, %arg1, %c0_i32 : i32
    %1 = arith.extui %0 : i1 to i32
    %c0_i32_0 = arith.constant 0 : i32
    %2 = arith.cmpi ne, %1, %c0_i32_0 : i32
    scf.if %2 {
      %cst_29 = arith.constant 0.000000e+00 : f32
      %43 = vector.broadcast %cst_29 : f32 to vector<2x128xf32>
      %c0_30 = arith.constant 0 : index
      %c0_31 = arith.constant 0 : index
      %44 = vector.load %arg16[%c0_30, %c0_31] : memref<2x128xf32, #tpu.memory_space<vmem>>, vector<2x128xf32>
      tpu.vector_store %arg16[%c0_30, %c0_31], %43 {strides = array<i32>} : memref<2x128xf32, #tpu.memory_space<vmem>>, vector<2x128xf32>,
      %cst_32 = arith.constant 0.000000e+00 : f32
      %45 = vector.broadcast %cst_32 : f32 to vector<2x128xf32>
      %c0_33 = arith.constant 0 : index
      %c0_34 = arith.constant 0 : index
      %46 = vector.load %arg17[%c0_33, %c0_34] : memref<2x128xf32, #tpu.memory_space<vmem>>, vector<2x128xf32>
      tpu.vector_store %arg17[%c0_33, %c0_34], %45 {strides = array<i32>} : memref<2x128xf32, #tpu.memory_space<vmem>>, vector<2x128xf32>,
    } else {
    }
    %c0 = arith.constant 0 : index
    %c0_1 = arith.constant 0 : index
    %3 = vector.load %arg6[%c0, %c0_1] : memref<1x128xf32, #tpu.memory_space<vmem>>, vector<1x128xf32>
    %c0_2 = arith.constant 0 : index
    %c0_3 = arith.constant 0 : index
    %4 = vector.load %arg16[%c0_2, %c0_3] : memref<2x128xf32, #tpu.memory_space<vmem>>, vector<2x128xf32>
    %c0_4 = arith.constant 0 : index
    %c0_5 = arith.constant 0 : index
    %c0_6 = arith.constant 0 : index
    %5 = vector.load %arg2[%c0_4, %c0_5, %c0_6] : memref<2x16x108xbf16, #tpu.memory_space<vmem>>, vector<2x16x108xbf16>
    %6 = vector.shape_cast %5 : vector<2x16x108xbf16> to vector<32x108xbf16>
    %c0_7 = arith.constant 0 : index
    %c0_8 = arith.constant 0 : index
    %7 = vector.load %arg4[%c0_7, %c0_8] : memref<108x128xbf16, #tpu.memory_space<vmem>>, vector<108x128xbf16>
    %cst = arith.constant dense<0.000000e+00> : vector<32x128xf32>
    %8 = tpu.matmul %6, %7, %cst {dimension_numbers = #tpu.dot_dimension_numbers<[1], [0], [0], [1], [0, 0, 1, 1], [], []>} : vector<32x108xbf16>, vector<108x128xbf16>, vector<32x128xf32> -> vector<32x128xf32>
    %9 = vector.broadcast %3 : vector<1x128xf32> to vector<32x128xf32>
    %10 = arith.addf %8, %9 : vector<32x128xf32>
    %cst_9 = arith.constant 0.000000e+00 : f32
    %11 = vector.broadcast %cst_9 : f32 to vector<32x128xf32>
    %12 = arith.subf %11, %10 : vector<32x128xf32>
    %13 = math.exp %12 : vector<32x128xf32>
    %cst_10 = arith.constant 1.000000e+00 : f32
    %14 = vector.broadcast %cst_10 : f32 to vector<32x128xf32>
    %15 = arith.addf %14, %13 : vector<32x128xf32>
    %16 = tpu.reciprocal %15 {approx = true} : vector<32x128xf32> -> vector<32x128xf32>
    %17 = arith.mulf %10, %16 : vector<32x128xf32>
    %18 = vector.shape_cast %17 : vector<32x128xf32> to vector<2x16x128xf32>
    %cst_11 = arith.constant dense<0.000000e+00> : vector<2x128xf32>
    %19 = vector.multi_reduction <add>, %18, %cst_11 [1] : vector<2x16x128xf32> to vector<2x128xf32>
    %20 = arith.addf %4, %19 : vector<2x128xf32>
    %c0_12 = arith.constant 0 : index
    %c0_13 = arith.constant 0 : index
    %21 = vector.load %arg16[%c0_12, %c0_13] : memref<2x128xf32, #tpu.memory_space<vmem>>, vector<2x128xf32>
    tpu.vector_store %arg16[%c0_12, %c0_13], %20 {strides = array<i32>} : memref<2x128xf32, #tpu.memory_space<vmem>>, vector<2x128xf32>,
    %c0_14 = arith.constant 0 : index
    %c0_15 = arith.constant 0 : index
    %22 = vector.load %arg17[%c0_14, %c0_15] : memref<2x128xf32, #tpu.memory_space<vmem>>, vector<2x128xf32>
    %c0_16 = arith.constant 0 : index
    %c0_17 = arith.constant 0 : index
    %c0_18 = arith.constant 0 : index
    %23 = vector.load %arg3[%c0_16, %c0_17, %c0_18] : memref<2x16x36xbf16, #tpu.memory_space<vmem>>, vector<2x16x36xbf16>
    %24 = vector.shape_cast %23 : vector<2x16x36xbf16> to vector<32x36xbf16>
    %c0_19 = arith.constant 0 : index
    %c0_20 = arith.constant 0 : index
    %25 = vector.load %arg5[%c0_19, %c0_20] : memref<36x128xbf16, #tpu.memory_space<vmem>>, vector<36x128xbf16>
    %cst_21 = arith.constant dense<0.000000e+00> : vector<32x128xf32>
    %26 = tpu.matmul %24, %25, %cst_21 {dimension_numbers = #tpu.dot_dimension_numbers<[1], [0], [0], [1], [0, 0, 1, 1], [], []>} : vector<32x36xbf16>, vector<36x128xbf16>, vector<32x128xf32> -> vector<32x128xf32>
    %27 = vector.broadcast %3 : vector<1x128xf32> to vector<32x128xf32>
    %28 = arith.addf %26, %27 : vector<32x128xf32>
    %cst_22 = arith.constant 0.000000e+00 : f32
    %29 = vector.broadcast %cst_22 : f32 to vector<32x128xf32>
    %30 = arith.subf %29, %28 : vector<32x128xf32>
    %31 = math.exp %30 : vector<32x128xf32>
    %cst_23 = arith.constant 1.000000e+00 : f32
    %32 = vector.broadcast %cst_23 : f32 to vector<32x128xf32>
    %33 = arith.addf %32, %31 : vector<32x128xf32>
    %34 = tpu.reciprocal %33 {approx = true} : vector<32x128xf32> -> vector<32x128xf32>
    %35 = arith.mulf %28, %34 : vector<32x128xf32>
    %36 = vector.shape_cast %35 : vector<32x128xf32> to vector<2x16x128xf32>
    %cst_24 = arith.constant dense<0.000000e+00> : vector<2x128xf32>
    %37 = vector.multi_reduction <add>, %36, %cst_24 [1] : vector<2x16x128xf32> to vector<2x128xf32>
    %38 = arith.addf %22, %37 : vector<2x128xf32>
    %c0_25 = arith.constant 0 : index
    %c0_26 = arith.constant 0 : index
    %39 = vector.load %arg17[%c0_25, %c0_26] : memref<2x128xf32, #tpu.memory_space<vmem>>, vector<2x128xf32>
    tpu.vector_store %arg17[%c0_25, %c0_26], %38 {strides = array<i32>} : memref<2x128xf32, #tpu.memory_space<vmem>>, vector<2x128xf32>,
    %c0_i32_27 = arith.constant 0 : i32
    %40 = arith.cmpi eq, %arg1, %c0_i32_27 : i32
    %41 = arith.extui %40 : i1 to i32
    %c0_i32_28 = arith.constant 0 : i32
    %42 = arith.cmpi ne, %41, %c0_i32_28 : i32
    scf.if %42 {
      %c0_29 = arith.constant 0 : index
      %c0_30 = arith.constant 0 : index
      %43 = vector.load %arg7[%c0_29, %c0_30] : memref<1x128xf32, #tpu.memory_space<vmem>>, vector<1x128xf32>
      %c0_31 = arith.constant 0 : index
      %c0_32 = arith.constant 0 : index
      %44 = vector.load %arg16[%c0_31, %c0_32] : memref<2x128xf32, #tpu.memory_space<vmem>>, vector<2x128xf32>
      %45 = vector.broadcast %43 : vector<1x128xf32> to vector<2x128xf32>
      %46 = arith.subf %44, %45 : vector<2x128xf32>
      %cst_33 = arith.constant 1.562500e-02 : f32
      %47 = vector.broadcast %cst_33 : f32 to vector<2x128xf32>
      %48 = arith.mulf %46, %47 : vector<2x128xf32>
      %49 = arith.truncf %48 : vector<2x128xf32> to vector<2x128xbf16>
      %c0_34 = arith.constant 0 : index
      %c0_35 = arith.constant 0 : index
      %50 = vector.load %arg8[%c0_34, %c0_35] : memref<128x1280xbf16, #tpu.memory_space<vmem>>, vector<128x1280xbf16>
      %cst_36 = arith.constant dense<0.000000e+00> : vector<2x1280xf32>
      %51 = tpu.matmul %49, %50, %cst_36 {dimension_numbers = #tpu.dot_dimension_numbers<[1], [0], [0], [1], [0, 0, 1, 1], [], []>} : vector<2x128xbf16>, vector<128x1280xbf16>, vector<2x1280xf32> -> vector<2x1280xf32>
      %c0_37 = arith.constant 0 : index
      %c0_38 = arith.constant 0 : index
      %52 = vector.load %arg9[%c0_37, %c0_38] : memref<1x1280xf32, #tpu.memory_space<vmem>>, vector<1x1280xf32>
      %53 = vector.broadcast %52 : vector<1x1280xf32> to vector<2x1280xf32>
      %54 = arith.addf %51, %53 : vector<2x1280xf32>
      %cst_39 = arith.constant 0.000000e+00 : f32
      %55 = vector.broadcast %cst_39 : f32 to vector<2x1280xf32>
      %56 = arith.subf %55, %54 : vector<2x1280xf32>
      %57 = math.exp %56 : vector<2x1280xf32>
      %cst_40 = arith.constant 1.000000e+00 : f32
      %58 = vector.broadcast %cst_40 : f32 to vector<2x1280xf32>
      %59 = arith.addf %58, %57 : vector<2x1280xf32>
      %60 = tpu.reciprocal %59 {approx = true} : vector<2x1280xf32> -> vector<2x1280xf32>
      %61 = arith.mulf %54, %60 : vector<2x1280xf32>
      %c0_41 = arith.constant 0 : index
      %c0_42 = arith.constant 0 : index
      %62 = vector.load %arg17[%c0_41, %c0_42] : memref<2x128xf32, #tpu.memory_space<vmem>>, vector<2x128xf32>
      %63 = vector.broadcast %43 : vector<1x128xf32> to vector<2x128xf32>
      %64 = arith.subf %62, %63 : vector<2x128xf32>
      %cst_43 = arith.constant 1.562500e-02 : f32
      %65 = vector.broadcast %cst_43 : f32 to vector<2x128xf32>
      %66 = arith.mulf %64, %65 : vector<2x128xf32>
      %67 = arith.truncf %66 : vector<2x128xf32> to vector<2x128xbf16>
      %c0_44 = arith.constant 0 : index
      %c0_45 = arith.constant 0 : index
      %68 = vector.load %arg8[%c0_44, %c0_45] : memref<128x1280xbf16, #tpu.memory_space<vmem>>, vector<128x1280xbf16>
      %cst_46 = arith.constant dense<0.000000e+00> : vector<2x1280xf32>
      %69 = tpu.matmul %67, %68, %cst_46 {dimension_numbers = #tpu.dot_dimension_numbers<[1], [0], [0], [1], [0, 0, 1, 1], [], []>} : vector<2x128xbf16>, vector<128x1280xbf16>, vector<2x1280xf32> -> vector<2x1280xf32>
      %c0_47 = arith.constant 0 : index
      %c0_48 = arith.constant 0 : index
      %70 = vector.load %arg9[%c0_47, %c0_48] : memref<1x1280xf32, #tpu.memory_space<vmem>>, vector<1x1280xf32>
      %71 = vector.broadcast %70 : vector<1x1280xf32> to vector<2x1280xf32>
      %72 = arith.addf %69, %71 : vector<2x1280xf32>
      %cst_49 = arith.constant 0.000000e+00 : f32
      %73 = vector.broadcast %cst_49 : f32 to vector<2x1280xf32>
      %74 = arith.subf %73, %72 : vector<2x1280xf32>
      %75 = math.exp %74 : vector<2x1280xf32>
      %cst_50 = arith.constant 1.000000e+00 : f32
      %76 = vector.broadcast %cst_50 : f32 to vector<2x1280xf32>
      %77 = arith.addf %76, %75 : vector<2x1280xf32>
      %78 = tpu.reciprocal %77 {approx = true} : vector<2x1280xf32> -> vector<2x1280xf32>
      %79 = arith.mulf %72, %78 : vector<2x1280xf32>
      %80 = arith.truncf %61 : vector<2x1280xf32> to vector<2x1280xbf16>
      %c0_51 = arith.constant 0 : index
      %c0_52 = arith.constant 0 : index
      %81 = vector.load %arg10[%c0_51, %c0_52] : memref<1280x512xbf16, #tpu.memory_space<vmem>>, vector<1280x512xbf16>
      %cst_53 = arith.constant dense<0.000000e+00> : vector<2x512xf32>
      %82 = tpu.matmul %80, %81, %cst_53 {dimension_numbers = #tpu.dot_dimension_numbers<[1], [0], [0], [1], [0, 0, 1, 1], [], []>} : vector<2x1280xbf16>, vector<1280x512xbf16>, vector<2x512xf32> -> vector<2x512xf32>
      %83 = arith.truncf %79 : vector<2x1280xf32> to vector<2x1280xbf16>
      %c0_54 = arith.constant 0 : index
      %c0_55 = arith.constant 0 : index
      %84 = vector.load %arg11[%c0_54, %c0_55] : memref<1280x512xbf16, #tpu.memory_space<vmem>>, vector<1280x512xbf16>
      %cst_56 = arith.constant dense<0.000000e+00> : vector<2x512xf32>
      %85 = tpu.matmul %83, %84, %cst_56 {dimension_numbers = #tpu.dot_dimension_numbers<[1], [0], [0], [1], [0, 0, 1, 1], [], []>} : vector<2x1280xbf16>, vector<1280x512xbf16>, vector<2x512xf32> -> vector<2x512xf32>
      %86 = arith.addf %82, %85 : vector<2x512xf32>
      %c0_57 = arith.constant 0 : index
      %c0_58 = arith.constant 0 : index
      %87 = vector.load %arg12[%c0_57, %c0_58] : memref<1x512xf32, #tpu.memory_space<vmem>>, vector<1x512xf32>
      %88 = vector.broadcast %87 : vector<1x512xf32> to vector<2x512xf32>
      %89 = arith.addf %86, %88 : vector<2x512xf32>
      %cst_59 = arith.constant 0.000000e+00 : f32
      %90 = vector.broadcast %cst_59 : f32 to vector<2x512xf32>
      %91 = arith.maximumf %89, %90 : vector<2x512xf32>
      %92 = arith.truncf %91 : vector<2x512xf32> to vector<2x512xbf16>
      %c0_60 = arith.constant 0 : index
      %c0_61 = arith.constant 0 : index
      %93 = vector.load %arg13[%c0_60, %c0_61] : memref<512x128xbf16, #tpu.memory_space<vmem>>, vector<512x128xbf16>
      %cst_62 = arith.constant dense<0.000000e+00> : vector<2x128xf32>
      %94 = tpu.matmul %92, %93, %cst_62 {dimension_numbers = #tpu.dot_dimension_numbers<[1], [0], [0], [1], [0, 0, 1, 1], [], []>} : vector<2x512xbf16>, vector<512x128xbf16>, vector<2x128xf32> -> vector<2x128xf32>
      %c0_63 = arith.constant 0 : index
      %c0_64 = arith.constant 0 : index
      %95 = vector.load %arg14[%c0_63, %c0_64] : memref<1x128xf32, #tpu.memory_space<vmem>>, vector<1x128xf32>
      %96 = vector.broadcast %95 : vector<1x128xf32> to vector<2x128xf32>
      %97 = arith.addf %94, %96 : vector<2x128xf32>
      %c0_65 = arith.constant 0 : index
      %c0_66 = arith.constant 0 : index
      %98 = vector.load %arg15[%c0_65, %c0_66] : memref<2x128xf32, #tpu.memory_space<vmem>>, vector<2x128xf32>
      tpu.vector_store %arg15[%c0_65, %c0_66], %97 {strides = array<i32>} : memref<2x128xf32, #tpu.memory_space<vmem>>, vector<2x128xf32>,
    } else {
    }
    return
  }
  func.func @transform_0(%arg0: i32, %arg1: i32) -> (i32, i32, i32) {
    %c0_i32 = arith.constant 0 : i32
    %c0_i32_0 = arith.constant 0 : i32
    return %arg0, %arg1, %c0_i32 : i32, i32, i32
  }
  func.func @transform_1(%arg0: i32, %arg1: i32) -> (i32, i32, i32) {
    %c0_i32 = arith.constant 0 : i32
    %c0_i32_0 = arith.constant 0 : i32
    return %arg0, %arg1, %c0_i32 : i32, i32, i32
  }
  func.func @transform_2(%arg0: i32, %arg1: i32) -> (i32, i32) {
    %c0_i32 = arith.constant 0 : i32
    %c0_i32_0 = arith.constant 0 : i32
    %c0_i32_1 = arith.constant 0 : i32
    return %c0_i32, %c0_i32_0 : i32, i32
  }
  func.func @transform_3(%arg0: i32, %arg1: i32) -> (i32, i32) {
    %c0_i32 = arith.constant 0 : i32
    %c0_i32_0 = arith.constant 0 : i32
    %c0_i32_1 = arith.constant 0 : i32
    return %c0_i32, %c0_i32_0 : i32, i32
  }
  func.func @transform_4(%arg0: i32, %arg1: i32) -> (i32, i32) {
    %c0_i32 = arith.constant 0 : i32
    %c0_i32_0 = arith.constant 0 : i32
    %c0_i32_1 = arith.constant 0 : i32
    return %c0_i32, %c0_i32_0 : i32, i32
  }
  func.func @transform_5(%arg0: i32, %arg1: i32) -> (i32, i32) {
    %c0_i32 = arith.constant 0 : i32
    %c0_i32_0 = arith.constant 0 : i32
    %c0_i32_1 = arith.constant 0 : i32
    return %c0_i32, %c0_i32_0 : i32, i32
  }
  func.func @transform_6(%arg0: i32, %arg1: i32) -> (i32, i32) {
    %c0_i32 = arith.constant 0 : i32
    %c0_i32_0 = arith.constant 0 : i32
    %c0_i32_1 = arith.constant 0 : i32
    return %c0_i32, %c0_i32_0 : i32, i32
  }
  func.func @transform_7(%arg0: i32, %arg1: i32) -> (i32, i32) {
    %c0_i32 = arith.constant 0 : i32
    %c0_i32_0 = arith.constant 0 : i32
    %c0_i32_1 = arith.constant 0 : i32
    return %c0_i32, %c0_i32_0 : i32, i32
  }
  func.func @transform_8(%arg0: i32, %arg1: i32) -> (i32, i32) {
    %c0_i32 = arith.constant 0 : i32
    %c0_i32_0 = arith.constant 0 : i32
    %c0_i32_1 = arith.constant 0 : i32
    return %c0_i32, %c0_i32_0 : i32, i32
  }
  func.func @transform_9(%arg0: i32, %arg1: i32) -> (i32, i32) {
    %c0_i32 = arith.constant 0 : i32
    %c0_i32_0 = arith.constant 0 : i32
    %c0_i32_1 = arith.constant 0 : i32
    return %c0_i32, %c0_i32_0 : i32, i32
  }
  func.func @transform_10(%arg0: i32, %arg1: i32) -> (i32, i32) {
    %c0_i32 = arith.constant 0 : i32
    %c0_i32_0 = arith.constant 0 : i32
    %c0_i32_1 = arith.constant 0 : i32
    return %c0_i32, %c0_i32_0 : i32, i32
  }
  func.func @transform_11(%arg0: i32, %arg1: i32) -> (i32, i32) {
    %c0_i32 = arith.constant 0 : i32
    %c0_i32_0 = arith.constant 0 : i32
    %c0_i32_1 = arith.constant 0 : i32
    return %c0_i32, %c0_i32_0 : i32, i32
  }
  func.func @transform_12(%arg0: i32, %arg1: i32) -> (i32, i32) {
    %c0_i32 = arith.constant 0 : i32
    %c0_i32_0 = arith.constant 0 : i32
    %c0_i32_1 = arith.constant 0 : i32
    return %c0_i32, %c0_i32_0 : i32, i32
  }
  func.func @transform_13(%arg0: i32, %arg1: i32) -> (i32, i32) {
    %c0_i32 = arith.constant 0 : i32
    %c0_i32_0 = arith.constant 0 : i32
    return %arg0, %c0_i32 : i32, i32
  }
}

</mosaic_0001>

<llo_original>
// kernel: _lambda_.1
$region0: #{_lambda_.1}
  #allocation0 [shape = 'u32[]', space=smem, size = 0x4, offset = 0x4, fixed_abs, tag = 'smem constant byte address 0x4 - core index']
  #allocation1 [shape = 'u32[144,128]{1,0:T(1,128)}', space=vmem, size = 0x12000, scoped, tag = 'internal scratch']
  #allocation2 [shape = 'f32[2,128]{1,0:T(2,128)}', space=vmem, size = 0x400, scoped, tag = 'scratch operand']
  #allocation3 [shape = 'f32[2,128]{1,0:T(2,128)}', space=vmem, size = 0x400, scoped, tag = 'scratch operand']
  %s0 = inlined_call_operand.vmem [shape: bf16[2,16,108], index: 0, kind: input, shape index: {}]
  %s1 = inlined_call_operand.vmem [shape: bf16[2,16,36], index: 1, kind: input, shape index: {}]
  %s2 = inlined_call_operand.vmem [shape: bf16[108,128], index: 2, kind: input, shape index: {}]
  %s3 = inlined_call_operand.vmem [shape: bf16[36,128], index: 3, kind: input, shape index: {}]
  %s4 = inlined_call_operand.vmem [shape: f32[1,128], index: 4, kind: input, shape index: {}]
  %s5 = inlined_call_operand.vmem [shape: f32[1,128], index: 5, kind: input, shape index: {}]
  %s6 = inlined_call_operand.vmem [shape: bf16[128,1280], index: 6, kind: input, shape index: {}]
  %s7 = inlined_call_operand.vmem [shape: f32[1,1280], index: 7, kind: input, shape index: {}]
  %s8 = inlined_call_operand.vmem [shape: bf16[1280,512], index: 8, kind: input, shape index: {}]
  %s9 = inlined_call_operand.vmem [shape: bf16[1280,512], index: 9, kind: input, shape index: {}]
  %s10 = inlined_call_operand.vmem [shape: f32[1,512], index: 10, kind: input, shape index: {}]
  %s11 = inlined_call_operand.vmem [shape: bf16[512,128], index: 11, kind: input, shape index: {}]
  %s12 = inlined_call_operand.vmem [shape: f32[1,128], index: 12, kind: input, shape index: {}]
  %s13 = inlined_call_operand.hbm [shape: f32[2,128], index: 13, kind: output, shape index: {}]
  %s14 = sld [smem:[#allocation0]]
  $region70: #{_lambda_.1} parent=0
    _
  %s16 = ssub.s32 1, %s14
  %s17 = scalar_select 0, %s16, %s14
  $region1: #{_lambda_.1} parent=0
    #allocation4 [shape = 'u8[1024]{0}', space=vmem, size = 0x400, scoped, tag = 'output window, operand 0, single buffered']
    #allocation5 [shape = 's32[1]{0}', space=sflag, size = 0x4, scoped, tag = 'scoped memory for _lambda_.1']
    %18 = vsyncpa [#allocation5], 0
    // Predicated region
    $region2: #{_lambda_.1} parent=1 // pred_check
      _
    $region3: #{_lambda_.1} parent=1 // pred_check_branch
      %20 = sbr.rel (0) target = $region5
    $region4: #{_lambda_.1} parent=1 // pred_region
      _
    $region5: #{_lambda_.1} parent=1 // pred_fallthru
      _
    // Predicated region
    $region6: #{_lambda_.1} parent=1 // pred_check
      _
    $region7: #{_lambda_.1} parent=1 // pred_check_branch
      %22 = sbr.rel (0) target = $region9
    $region8: #{_lambda_.1} parent=1 // pred_region
      _
    $region9: #{_lambda_.1} parent=1 // pred_fallthru
      _
    // Predicated region
    $region10: #{_lambda_.1} parent=1 // pred_check
      _
    $region11: #{_lambda_.1} parent=1 // pred_check_branch
      %24 = sbr.rel (0) target = $region13
    $region12: #{_lambda_.1} parent=1 // pred_region
      _
    $region13: #{_lambda_.1} parent=1 // pred_fallthru
      _
    // Predicated region
    $region14: #{_lambda_.1} parent=1 // pred_check
      _
    $region15: #{_lambda_.1} parent=1 // pred_check_branch
      %26 = sbr.rel (0) target = $region17
    $region16: #{_lambda_.1} parent=1 // pred_region
      _
    $region17: #{_lambda_.1} parent=1 // pred_fallthru
      _
    // Predicated region
    $region18: #{_lambda_.1} parent=1 // pred_check
      _
    $region19: #{_lambda_.1} parent=1 // pred_check_branch
      %28 = sbr.rel (0) target = $region21
    $region20: #{_lambda_.1} parent=1 // pred_region
      _
    $region21: #{_lambda_.1} parent=1 // pred_fallthru
      _
    // Predicated region
    $region22: #{_lambda_.1} parent=1 // pred_check
      _
    $region23: #{_lambda_.1} parent=1 // pred_check_branch
      %30 = sbr.rel (0) target = $region25
    $region24: #{_lambda_.1} parent=1 // pred_region
      _
    $region25: #{_lambda_.1} parent=1 // pred_fallthru
      _
    // Predicated region
    $region26: #{_lambda_.1} parent=1 // pred_check
      _
    $region27: #{_lambda_.1} parent=1 // pred_check_branch
      %32 = sbr.rel (0) target = $region29
    $region28: #{_lambda_.1} parent=1 // pred_region
      _
    $region29: #{_lambda_.1} parent=1 // pred_fallthru
      _
    // Predicated region
    $region30: #{_lambda_.1} parent=1 // pred_check
      _
    $region31: #{_lambda_.1} parent=1 // pred_check_branch
      %34 = sbr.rel (0) target = $region33
    $region32: #{_lambda_.1} parent=1 // pred_region
      _
    $region33: #{_lambda_.1} parent=1 // pred_fallthru
      _
    // Predicated region
    $region34: #{_lambda_.1} parent=1 // pred_check
      _
    $region35: #{_lambda_.1} parent=1 // pred_check_branch
      %36 = sbr.rel (0) target = $region37
    $region36: #{_lambda_.1} parent=1 // pred_region
      _
    $region37: #{_lambda_.1} parent=1 // pred_fallthru
      _
    // Predicated region
    $region38: #{_lambda_.1} parent=1 // pred_check
      _
    $region39: #{_lambda_.1} parent=1 // pred_check_branch
      %38 = sbr.rel (0) target = $region41
    $region40: #{_lambda_.1} parent=1 // pred_region
      _
    $region41: #{_lambda_.1} parent=1 // pred_fallthru
      _
    // Predicated region
    $region42: #{_lambda_.1} parent=1 // pred_check
      _
    $region43: #{_lambda_.1} parent=1 // pred_check_branch
      %40 = sbr.rel (0) target = $region45
    $region44: #{_lambda_.1} parent=1 // pred_region
      _
    $region45: #{_lambda_.1} parent=1 // pred_fallthru
      _
    // Predicated region
    $region46: #{_lambda_.1} parent=1 // pred_check
      _
    $region47: #{_lambda_.1} parent=1 // pred_check_branch
      %42 = sbr.rel (0) target = $region49
    $region48: #{_lambda_.1} parent=1 // pred_region
      _
    $region49: #{_lambda_.1} parent=1 // pred_fallthru
      _
    // Predicated region
    $region50: #{_lambda_.1} parent=1 // pred_check
      _
    $region51: #{_lambda_.1} parent=1 // pred_check_branch
      %44 = sbr.rel (0) target = $region53
    $region52: #{_lambda_.1} parent=1 // pred_region
      _
    $region53: #{_lambda_.1} parent=1 // pred_fallthru
      _
    %p46 = scmp.eq.s32.totalorder 0, 0
    // Predicated region
    $region54: #{_lambda_.1} parent=1 // pred_check
      %p47 = pneg %p46
    $region55: #{_lambda_.1} parent=1 // pred_check_branch
      %49 = sbr.rel (%p47) target = $region57
    $region56: #{_lambda_.1} parent=1 // pred_region
      %50 = vst [vmem:[#allocation2] sm:$0x3] 0.0
      %51 = vst [vmem:[#allocation3] sm:$0x3] 0.0
    $region57: #{_lambda_.1} parent=1 // pred_fallthru
      _
    %v52 = vld [vmem:[%s4] sm:$0x1]
    %v53 = vld [vmem:[#allocation2] sm:$0x3]
    %v54 = vld [vmem:[%s0] sm:$0xf]
    %v55 = vld [vmem:[%s0 + $0x4] sm:$0xf]
    %v56 = vld [vmem:[%s0 + $0x8] sm:$0xf]
    %v57 = vld [vmem:[%s0 + $0xc] sm:$0xf]
    %v58 = vld [vmem:[%s2] sm:$0xf]
    %v59 = vld [vmem:[%s2 + $0x4] sm:$0xf]
    %v60 = vld [vmem:[%s2 + $0x8] sm:$0xf]
    %v61 = vld [vmem:[%s2 + $0xc] sm:$0xf]
    %v62 = vld [vmem:[%s2 + $0x10] sm:$0xf]
    %v63 = vld [vmem:[%s2 + $0x14] sm:$0xf]
    %v64 = vld [vmem:[%s2 + $0x18] sm:$0xf]
    %v65 = vld [vmem:[%s2 + $0x1c] sm:$0xf]
    %v66 = vld [vmem:[%s2 + $0x20] sm:$0xf]
    %v67 = vld [vmem:[%s2 + $0x24] sm:$0xf]
    %v68 = vld [vmem:[%s2 + $0x28] sm:$0xf]
    %v69 = vld [vmem:[%s2 + $0x2c] sm:$0xf]
    %v70 = vld [vmem:[%s2 + $0x30] sm:$0xf]
    %v71 = vld [vmem:[%s2 + $0x34] sm:$0x3]
    %v73 = vlaneseq
    %v74 = vshrl.u32 %v73, 7
    %v75 = vsub.s32 0, %v74
    %v76 = vrot.slane %v52, %v75
    %v82 = vunpack.c.l.b16 %v54
    %v83 = vunpack.c.l.b16 %v55
    %v84 = vunpack.c.l.b16 %v56
    %v85 = vunpack.c.l.b16 %v57
    %v86 = vpack.c.b16 %v83, %v82
    %v87 = vpack.c.b16 %v85, %v84
    %v102 = vunpack.c.l.b16 %v58
    %v103 = vunpack.c.l.b16 %v59
    %v104 = vunpack.c.l.b16 %v60
    %v105 = vunpack.c.l.b16 %v61
    %v106 = vunpack.c.l.b16 %v62
    %v107 = vunpack.c.l.b16 %v63
    %v108 = vunpack.c.l.b16 %v64
    %v109 = vunpack.c.l.b16 %v65
    %v110 = vunpack.c.l.b16 %v66
    %v111 = vunpack.c.l.b16 %v67
    %v112 = vunpack.c.l.b16 %v68
    %v113 = vunpack.c.l.b16 %v69
    %v114 = vunpack.c.l.b16 %v70
    %v115 = vunpack.c.l.b16 %v71
    %v116 = vpack.c.b16 %v103, %v102
    %v117 = vpack.c.b16 %v105, %v104
    %v118 = vpack.c.b16 %v107, %v106
    %v119 = vpack.c.b16 %v109, %v108
    %v120 = vpack.c.b16 %v111, %v110
    %v121 = vpack.c.b16 %v113, %v112
    %v122 = vpack.c.b16 %v115, %v114
    %vm129 = vcmask 883712
    %v131 = vsel %vm129, %v86, 0
    %v134 = vsel %vm129, %v87, 0
    %vm136 = vcmask 1045504
    %v138 = vsel %vm136, %v122, 0
    %140 = vmatprep.subr.bf16.mxu0 0
    %141 = vmatpush1.bf16.msra.mxu0 %v116
    %142 = vmatprep.subr.bf16.mxu0 0
    %143 = vmatpush1.bf16.msra.mxu0 %v117
    %144 = vmatprep.subr.bf16.mxu0 0
    %145 = vmatpush1.bf16.msra.mxu0 %v118
    %146 = vmatprep.subr.bf16.mxu0 0
    %147 = vmatpush1.bf16.msra.mxu0 %v119
    %148 = vmatprep.subr.bf16.mxu0 0
    %149 = vmatpush1.bf16.msra.mxu0 %v120
    %150 = vmatprep.subr.bf16.mxu0 0
    %151 = vmatpush1.bf16.msra.mxu0 %v121
    %152 = vmatprep.subr.bf16.mxu0 0
    %153 = vmatpush1.bf16.msra.mxu0 %v138
    %154 = vmatprep.subr.bf16.mxu0 0
    %155 = vmatpush1.bf16.msra.mxu0 0
    %156 = vmatprep.subr.bf16.mxu0 0
    %157 = vmatpush1.bf16.msra.mxu0 0
    %158 = vmatprep.subr.bf16.mxu0 0
    %159 = vmatpush1.bf16.msra.mxu0 0
    %160 = vmatprep.subr.bf16.mxu0 0
    %161 = vmatpush1.bf16.msra.mxu0 0
    %162 = vmatprep.subr.bf16.mxu0 0
    %163 = vmatpush1.bf16.msra.mxu0 0
    %164 = vmatprep.subr.bf16.mxu0 0
    %165 = vmatpush1.bf16.msra.mxu0 0
    %166 = vmatprep.subr.bf16.mxu0 0
    %167 = vmatpush1.bf16.msra.mxu0 0
    %168 = vmatprep.subr.bf16.mxu0 0
    %169 = vmatpush1.bf16.msra.mxu0 0
    %170 = vmatprep.subr.bf16.mxu0 0
    %171 = vmatpush1.bf16.msra.mxu0 0
    %172 = vmatprep.mubr.bf16.mxu0 0
    %173 = vmatmul.mubr.bf16.gmra.mrb[0].mxu0 %v131
    %v174 = vpop.f32.mrb[0].mxu0
    %v175 = vadd.f32 %v76, %v174
    %v176 = vpop.f32.mrb[0].mxu0
    %v177 = vpop.f32.mrb[0].mxu0
    %v178 = vadd.f32 %v76, %v177
    %v179 = vpop.f32.mrb[0].mxu0
    %180 = vmatprep.mubr.bf16.mxu0 0
    %181 = vmatmul.mubr.bf16.gmra.mrb[0].mxu0 %v134
    %v182 = vpop.f32.mrb[0].mxu0
    %v183 = vadd.f32 %v76, %v182
    %v184 = vpop.f32.mrb[0].mxu0
    %v185 = vpop.f32.mrb[0].mxu0
    %v186 = vadd.f32 %v76, %v185
    %v187 = vpop.f32.mrb[0].mxu0
    %188 = vdwg.mxu0
    %v189 = vsub.f32 0.0, %v175
    %v190 = vsub.f32 0.0, %v178
    %v191 = vsub.f32 0.0, %v183
    %v192 = vsub.f32 0.0, %v186
    %v193 = vmul.f32 %v189, 1.442695
    %v194 = vpow.pop %v193
    %v195 = vmul.f32 %v190, 1.442695
    %v196 = vpow.pop %v195
    %v197 = vmul.f32 %v191, 1.442695
    %v198 = vpow.pop %v197
    %v199 = vmul.f32 %v192, 1.442695
    %v200 = vpow.pop %v199
    %v201 = vadd.f32 %v194, 1.0
    %v202 = vadd.f32 %v196, 1.0
    %v203 = vadd.f32 %v198, 1.0
    %v204 = vadd.f32 %v200, 1.0
    %v205 = vrcp.pop %v201
    %v206 = vrcp.pop %v202
    %v207 = vrcp.pop %v203
    %v208 = vrcp.pop %v204
    %v209 = vmul.f32 %v175, %v205
    %v210 = vmul.f32 %v178, %v206
    %v211 = vmul.f32 %v183, %v207
    %v212 = vmul.f32 %v186, %v208
    %v213 = vadd.f32 %v209, %v210
    %v214 = vrot.slane %v213, 4
    %v215 = vadd.f32 %v213, %v214
    %v216 = vrot.slane %v215, 2
    %v217 = vadd.f32 %v215, %v216
    %v218 = vrot.slane %v217, 1
    %v219 = vadd.f32 %v217, %v218
    %v220 = vadd.f32 %v211, %v212
    %v221 = vrot.slane %v220, 4
    %v222 = vadd.f32 %v220, %v221
    %v223 = vrot.slane %v222, 2
    %v224 = vadd.f32 %v222, %v223
    %v225 = vrot.slane %v224, 1
    %v226 = vadd.f32 %v224, %v225
    %vm229 = vcmask 1041409
    %v230 = vsel %vm229, %v226, %v219
    %v232 = vadd.f32 %v53, %v230
    %233 = vst [vmem:[#allocation2] sm:$0x3] %v232
    %v234 = vld [vmem:[#allocation3] sm:$0x3]
    %v235 = vld [vmem:[%s1] sm:$0xf]
    %v236 = vld [vmem:[%s1 + $0x4] sm:$0xf]
    %v237 = vld [vmem:[%s1 + $0x8] sm:$0xf]
    %v238 = vld [vmem:[%s1 + $0xc] sm:$0xf]
    %v239 = vld [vmem:[%s3] sm:$0xf]
    %v240 = vld [vmem:[%s3 + $0x4] sm:$0xf]
    %v241 = vld [vmem:[%s3 + $0x8] sm:$0xf]
    %v242 = vld [vmem:[%s3 + $0xc] sm:$0xf]
    %v243 = vld [vmem:[%s3 + $0x10] sm:$0x3]
    %v248 = vunpack.c.l.b16 %v235
    %v249 = vunpack.c.l.b16 %v236
    %v250 = vunpack.c.l.b16 %v237
    %v251 = vunpack.c.l.b16 %v238
    %v252 = vpack.c.b16 %v249, %v248
    %v253 = vpack.c.b16 %v251, %v250
    %v259 = vunpack.c.l.b16 %v239
    %v260 = vunpack.c.l.b16 %v240
    %v261 = vunpack.c.l.b16 %v241
    %v262 = vunpack.c.l.b16 %v242
    %v263 = vunpack.c.l.b16 %v243
    %v264 = vpack.c.b16 %v260, %v259
    %v265 = vpack.c.b16 %v262, %v261
    %v266 = vpack.c.b16 %v263, %v263
    %vm269 = vcmask 293888
    %v271 = vsel %vm269, %v252, 0
    %v274 = vsel %vm269, %v253, 0
    %vm276 = vcmask 1041408
    %v278 = vsel %vm276, %v266, 0
    %280 = vmatprep.subr.bf16.mxu0 0
    %281 = vmatpush1.bf16.msra.mxu0 %v264
    %282 = vmatprep.subr.bf16.mxu0 0
    %283 = vmatpush1.bf16.msra.mxu0 %v265
    %284 = vmatprep.subr.bf16.mxu0 0
    %285 = vmatpush1.bf16.msra.mxu0 %v278
    %286 = vmatprep.subr.bf16.mxu0 0
    %287 = vmatpush1.bf16.msra.mxu0 0
    %288 = vmatprep.subr.bf16.mxu0 0
    %289 = vmatpush1.bf16.msra.mxu0 0
    %290 = vmatprep.subr.bf16.mxu0 0
    %291 = vmatpush1.bf16.msra.mxu0 0
    %292 = vmatprep.subr.bf16.mxu0 0
    %293 = vmatpush1.bf16.msra.mxu0 0
    %294 = vmatprep.subr.bf16.mxu0 0
    %295 = vmatpush1.bf16.msra.mxu0 0
    %296 = vmatprep.subr.bf16.mxu0 0
    %297 = vmatpush1.bf16.msra.mxu0 0
    %298 = vmatprep.subr.bf16.mxu0 0
    %299 = vmatpush1.bf16.msra.mxu0 0
    %300 = vmatprep.subr.bf16.mxu0 0
    %301 = vmatpush1.bf16.msra.mxu0 0
    %302 = vmatprep.subr.bf16.mxu0 0
    %303 = vmatpush1.bf16.msra.mxu0 0
    %304 = vmatprep.subr.bf16.mxu0 0
    %305 = vmatpush1.bf16.msra.mxu0 0
    %306 = vmatprep.subr.bf16.mxu0 0
    %307 = vmatpush1.bf16.msra.mxu0 0
    %308 = vmatprep.subr.bf16.mxu0 0
    %309 = vmatpush1.bf16.msra.mxu0 0
    %310 = vmatprep.subr.bf16.mxu0 0
    %311 = vmatpush1.bf16.msra.mxu0 0
    %312 = vmatprep.mubr.bf16.mxu0 0
    %313 = vmatmul.mubr.bf16.gmra.mrb[0].mxu0 %v271
    %v314 = vpop.f32.mrb[0].mxu0
    %v315 = vadd.f32 %v76, %v314
    %v316 = vpop.f32.mrb[0].mxu0
    %v317 = vpop.f32.mrb[0].mxu0
    %v318 = vadd.f32 %v76, %v317
    %v319 = vpop.f32.mrb[0].mxu0
    %320 = vmatprep.mubr.bf16.mxu0 0
    %321 = vmatmul.mubr.bf16.gmra.mrb[0].mxu0 %v274
    %v322 = vpop.f32.mrb[0].mxu0
    %v323 = vadd.f32 %v76, %v322
    %v324 = vpop.f32.mrb[0].mxu0
    %v325 = vpop.f32.mrb[0].mxu0
    %v326 = vadd.f32 %v76, %v325
    %v327 = vpop.f32.mrb[0].mxu0
    %328 = vdwg.mxu0
    %v329 = vsub.f32 0.0, %v315
    %v330 = vsub.f32 0.0, %v318
    %v331 = vsub.f32 0.0, %v323
    %v332 = vsub.f32 0.0, %v326
    %v333 = vmul.f32 %v329, 1.442695
    %v334 = vpow.pop %v333
    %v335 = vmul.f32 %v330, 1.442695
    %v336 = vpow.pop %v335
    %v337 = vmul.f32 %v331, 1.442695
    %v338 = vpow.pop %v337
    %v339 = vmul.f32 %v332, 1.442695
    %v340 = vpow.pop %v339
    %v341 = vadd.f32 %v334, 1.0
    %v342 = vadd.f32 %v336, 1.0
    %v343 = vadd.f32 %v338, 1.0
    %v344 = vadd.f32 %v340, 1.0
    %v345 = vrcp.pop %v341
    %v346 = vrcp.pop %v342
    %v347 = vrcp.pop %v343
    %v348 = vrcp.pop %v344
    %v349 = vmul.f32 %v315, %v345
    %v350 = vmul.f32 %v318, %v346
    %v351 = vmul.f32 %v323, %v347
    %v352 = vmul.f32 %v326, %v348
    %v353 = vadd.f32 %v349, %v350
    %v354 = vrot.slane %v353, 4
    %v355 = vadd.f32 %v353, %v354
    %v356 = vrot.slane %v355, 2
    %v357 = vadd.f32 %v355, %v356
    %v358 = vrot.slane %v357, 1
    %v359 = vadd.f32 %v357, %v358
    %v360 = vadd.f32 %v351, %v352
    %v361 = vrot.slane %v360, 4
    %v362 = vadd.f32 %v360, %v361
    %v363 = vrot.slane %v362, 2
    %v364 = vadd.f32 %v362, %v363
    %v365 = vrot.slane %v364, 1
    %v366 = vadd.f32 %v364, %v365
    %v369 = vsel %vm229, %v366, %v359
    %v371 = vadd.f32 %v234, %v369
    %372 = vst [vmem:[#allocation3] sm:$0x3] %v371
    // Predicated region
    $region58: #{_lambda_.1} parent=1 // pred_check
      %p373 = pneg %p46
    $region59: #{_lambda_.1} parent=1 // pred_check_branch
      %375 = sbr.rel (%p373) target = $region61
    $region60: #{_lambda_.1} parent=1 // pred_region
      %v376 = vld [vmem:[%s5] sm:$0x1]
      %v377 = vld [vmem:[#allocation2] sm:$0x3]
      %v379 = vlaneseq
      %v380 = vshrl.u32 %v379, 7
      %v381 = vsub.s32 0, %v380
      %v382 = vrot.slane %v376, %v381
      %v384 = vsub.f32 %v377, %v382
      %v385 = vmul.f32 %v384, 0.015625
      %v386 = vpack.c.bf16 %v385, %v385
      %v387 = vld [vmem:[%s6] sm:$0xff]
      %v388 = vld [vmem:[%s6 + $0x8] sm:$0xff]
      %v389 = vld [vmem:[%s6 + $0x10] sm:$0xff]
      %v390 = vld [vmem:[%s6 + $0x18] sm:$0xff]
      %v391 = vld [vmem:[%s6 + $0x20] sm:$0xff]
      %v392 = vld [vmem:[%s6 + $0x28] sm:$0xff]
      %v393 = vld [vmem:[%s6 + $0x30] sm:$0xff]
      %v394 = vld [vmem:[%s6 + $0x38] sm:$0xff]
      %v395 = vld [vmem:[%s6 + $0x40] sm:$0xff]
      %v396 = vld [vmem:[%s6 + $0x48] sm:$0xff]
      %v397 = vld [vmem:[%s6 + $0x50] sm:$0xff]
      %v398 = vld [vmem:[%s6 + $0x58] sm:$0xff]
      %v399 = vld [vmem:[%s6 + $0x60] sm:$0xff]
      %v400 = vld [vmem:[%s6 + $0x68] sm:$0xff]
      %v401 = vld [vmem:[%s6 + $0x70] sm:$0xff]
      %v402 = vld [vmem:[%s6 + $0x78] sm:$0xff]
      %v403 = vld [vmem:[%s6 + $0x80] sm:$0xff]
      %v404 = vld [vmem:[%s6 + $0x88] sm:$0xff]
      %v405 = vld [vmem:[%s6 + $0x90] sm:$0xff]
      %v406 = vld [vmem:[%s6 + $0x98] sm:$0xff]
      %v407 = vld [vmem:[%s6 + $0xa0] sm:$0xff]
      %v408 = vld [vmem:[%s6 + $0xa8] sm:$0xff]
      %v409 = vld [vmem:[%s6 + $0xb0] sm:$0xff]
      %v410 = vld [vmem:[%s6 + $0xb8] sm:$0xff]
      %v411 = vld [vmem:[%s6 + $0xc0] sm:$0xff]
      %v412 = vld [vmem:[%s6 + $0xc8] sm:$0xff]
      %v413 = vld [vmem:[%s6 + $0xd0] sm:$0xff]
      %v414 = vld [vmem:[%s6 + $0xd8] sm:$0xff]
      %v415 = vld [vmem:[%s6 + $0xe0] sm:$0xff]
      %v416 = vld [vmem:[%s6 + $0xe8] sm:$0xff]
      %v417 = vld [vmem:[%s6 + $0xf0] sm:$0xff]
      %v418 = vld [vmem:[%s6 + $0xf8] sm:$0xff]
      %v419 = vld [vmem:[%s6 + $0x100] sm:$0xff]
      %v420 = vld [vmem:[%s6 + $0x108] sm:$0xff]
      %v421 = vld [vmem:[%s6 + $0x110] sm:$0xff]
      %v422 = vld [vmem:[%s6 + $0x118] sm:$0xff]
      %v423 = vld [vmem:[%s6 + $0x120] sm:$0xff]
      %v424 = vld [vmem:[%s6 + $0x128] sm:$0xff]
      %v425 = vld [vmem:[%s6 + $0x130] sm:$0xff]
      %v426 = vld [vmem:[%s6 + $0x138] sm:$0xff]
      %v427 = vld [vmem:[%s6 + $0x140] sm:$0xff]
      %v428 = vld [vmem:[%s6 + $0x148] sm:$0xff]
      %v429 = vld [vmem:[%s6 + $0x150] sm:$0xff]
      %v430 = vld [vmem:[%s6 + $0x158] sm:$0xff]
      %v431 = vld [vmem:[%s6 + $0x160] sm:$0xff]
      %v432 = vld [vmem:[%s6 + $0x168] sm:$0xff]
      %v433 = vld [vmem:[%s6 + $0x170] sm:$0xff]
      %v434 = vld [vmem:[%s6 + $0x178] sm:$0xff]
      %v435 = vld [vmem:[%s6 + $0x180] sm:$0xff]
      %v436 = vld [vmem:[%s6 + $0x188] sm:$0xff]
      %v437 = vld [vmem:[%s6 + $0x190] sm:$0xff]
      %v438 = vld [vmem:[%s6 + $0x198] sm:$0xff]
      %v439 = vld [vmem:[%s6 + $0x1a0] sm:$0xff]
      %v440 = vld [vmem:[%s6 + $0x1a8] sm:$0xff]
      %v441 = vld [vmem:[%s6 + $0x1b0] sm:$0xff]
      %v442 = vld [vmem:[%s6 + $0x1b8] sm:$0xff]
      %v443 = vld [vmem:[%s6 + $0x1c0] sm:$0xff]
      %v444 = vld [vmem:[%s6 + $0x1c8] sm:$0xff]
      %v445 = vld [vmem:[%s6 + $0x1d0] sm:$0xff]
      %v446 = vld [vmem:[%s6 + $0x1d8] sm:$0xff]
      %v447 = vld [vmem:[%s6 + $0x1e0] sm:$0xff]
      %v448 = vld [vmem:[%s6 + $0x1e8] sm:$0xff]
      %v449 = vld [vmem:[%s6 + $0x1f0] sm:$0xff]
      %v450 = vld [vmem:[%s6 + $0x1f8] sm:$0xff]
      %v451 = vld [vmem:[%s6 + $0x200] sm:$0xff]
      %v452 = vld [vmem:[%s6 + $0x208] sm:$0xff]
      %v453 = vld [vmem:[%s6 + $0x210] sm:$0xff]
      %v454 = vld [vmem:[%s6 + $0x218] sm:$0xff]
      %v455 = vld [vmem:[%s6 + $0x220] sm:$0xff]
      %v456 = vld [vmem:[%s6 + $0x228] sm:$0xff]
      %v457 = vld [vmem:[%s6 + $0x230] sm:$0xff]
      %v458 = vld [vmem:[%s6 + $0x238] sm:$0xff]
      %v459 = vld [vmem:[%s6 + $0x240] sm:$0xff]
      %v460 = vld [vmem:[%s6 + $0x248] sm:$0xff]
      %v461 = vld [vmem:[%s6 + $0x250] sm:$0xff]
      %v462 = vld [vmem:[%s6 + $0x258] sm:$0xff]
      %v463 = vld [vmem:[%s6 + $0x260] sm:$0xff]
      %v464 = vld [vmem:[%s6 + $0x268] sm:$0xff]
      %v465 = vld [vmem:[%s6 + $0x270] sm:$0xff]
      %v466 = vld [vmem:[%s6 + $0x278] sm:$0xff]
      %v467 = vld [vmem:[%s7] sm:$0xff]
      %v468 = vld [vmem:[%s7 + $0x8] sm:$0x3]
      %v471 = vlaneseq
      %v472 = vshrl.u32 %v471, 7
      %v473 = vsub.s32 0, %v472
      %v474 = vrot.slane %v467, %v473
      %v475 = vlaneseq
      %v476 = vshrl.u32 %v475, 7
      %v477 = vsub.s32 1, %v476
      %v478 = vrot.slane %v467, %v477
      %v479 = vlaneseq
      %v480 = vshrl.u32 %v479, 7
      %v481 = vsub.s32 2, %v480
      %v482 = vrot.slane %v467, %v481
      %v483 = vlaneseq
      %v484 = vshrl.u32 %v483, 7
      %v485 = vsub.s32 3, %v484
      %v486 = vrot.slane %v467, %v485
      %v487 = vlaneseq
      %v488 = vshrl.u32 %v487, 7
      %v489 = vsub.s32 4, %v488
      %v490 = vrot.slane %v467, %v489
      %v491 = vlaneseq
      %v492 = vshrl.u32 %v491, 7
      %v493 = vsub.s32 5, %v492
      %v494 = vrot.slane %v467, %v493
      %v495 = vlaneseq
      %v496 = vshrl.u32 %v495, 7
      %v497 = vsub.s32 6, %v496
      %v498 = vrot.slane %v467, %v497
      %v499 = vlaneseq
      %v500 = vshrl.u32 %v499, 7
      %v501 = vsub.s32 7, %v500
      %v502 = vrot.slane %v467, %v501
      %v503 = vlaneseq
      %v504 = vshrl.u32 %v503, 7
      %v505 = vsub.s32 0, %v504
      %v506 = vrot.slane %v468, %v505
      %v507 = vlaneseq
      %v508 = vshrl.u32 %v507, 7
      %v509 = vsub.s32 1, %v508
      %v510 = vrot.slane %v468, %v509
      %v601 = vunpack.c.l.b16 %v387
      %v602 = vunpack.c.h.b16 %v387
      %v603 = vunpack.c.l.b16 %v388
      %v604 = vunpack.c.h.b16 %v388
      %v605 = vunpack.c.l.b16 %v389
      %v606 = vunpack.c.h.b16 %v389
      %v607 = vunpack.c.l.b16 %v390
      %v608 = vunpack.c.h.b16 %v390
      %v609 = vunpack.c.l.b16 %v391
      %v610 = vunpack.c.h.b16 %v391
      %v611 = vunpack.c.l.b16 %v392
      %v612 = vunpack.c.h.b16 %v392
      %v613 = vunpack.c.l.b16 %v393
      %v614 = vunpack.c.h.b16 %v393
      %v615 = vunpack.c.l.b16 %v394
      %v616 = vunpack.c.h.b16 %v394
      %v617 = vunpack.c.l.b16 %v395
      %v618 = vunpack.c.h.b16 %v395
      %v619 = vunpack.c.l.b16 %v396
      %v620 = vunpack.c.h.b16 %v396
      %v621 = vunpack.c.l.b16 %v397
      %v622 = vunpack.c.h.b16 %v397
      %v623 = vunpack.c.l.b16 %v398
      %v624 = vunpack.c.h.b16 %v398
      %v625 = vunpack.c.l.b16 %v399
      %v626 = vunpack.c.h.b16 %v399
      %v627 = vunpack.c.l.b16 %v400
      %v628 = vunpack.c.h.b16 %v400
      %v629 = vunpack.c.l.b16 %v401
      %v630 = vunpack.c.h.b16 %v401
      %v631 = vunpack.c.l.b16 %v402
      %v632 = vunpack.c.h.b16 %v402
      %v633 = vunpack.c.l.b16 %v403
      %v634 = vunpack.c.h.b16 %v403
      %v635 = vunpack.c.l.b16 %v404
      %v636 = vunpack.c.h.b16 %v404
      %v637 = vunpack.c.l.b16 %v405
      %v638 = vunpack.c.h.b16 %v405
      %v639 = vunpack.c.l.b16 %v406
      %v640 = vunpack.c.h.b16 %v406
      %v641 = vunpack.c.l.b16 %v407
      %v642 = vunpack.c.h.b16 %v407
      %v643 = vunpack.c.l.b16 %v408
      %v644 = vunpack.c.h.b16 %v408
      %v645 = vunpack.c.l.b16 %v409
      %v646 = vunpack.c.h.b16 %v409
      %v647 = vunpack.c.l.b16 %v410
      %v648 = vunpack.c.h.b16 %v410
      %v649 = vunpack.c.l.b16 %v411
      %v650 = vunpack.c.h.b16 %v411
      %v651 = vunpack.c.l.b16 %v412
      %v652 = vunpack.c.h.b16 %v412
      %v653 = vunpack.c.l.b16 %v413
      %v654 = vunpack.c.h.b16 %v413
      %v655 = vunpack.c.l.b16 %v414
      %v656 = vunpack.c.h.b16 %v414
      %v657 = vunpack.c.l.b16 %v415
      %v658 = vunpack.c.h.b16 %v415
      %v659 = vunpack.c.l.b16 %v416
      %v660 = vunpack.c.h.b16 %v416
      %v661 = vunpack.c.l.b16 %v417
      %v662 = vunpack.c.h.b16 %v417
      %v663 = vunpack.c.l.b16 %v418
      %v664 = vunpack.c.h.b16 %v418
      %v665 = vunpack.c.l.b16 %v419
      %v666 = vunpack.c.h.b16 %v419
      %v667 = vunpack.c.l.b16 %v420
      %v668 = vunpack.c.h.b16 %v420
      %v669 = vunpack.c.l.b16 %v421
      %v670 = vunpack.c.h.b16 %v421
      %v671 = vunpack.c.l.b16 %v422
      %v672 = vunpack.c.h.b16 %v422
      %v673 = vunpack.c.l.b16 %v423
      %v674 = vunpack.c.h.b16 %v423
      %v675 = vunpack.c.l.b16 %v424
      %v676 = vunpack.c.h.b16 %v424
      %v677 = vunpack.c.l.b16 %v425
      %v678 = vunpack.c.h.b16 %v425
      %v679 = vunpack.c.l.b16 %v426
      %v680 = vunpack.c.h.b16 %v426
      %v681 = vunpack.c.l.b16 %v427
      %v682 = vunpack.c.h.b16 %v427
      %v683 = vunpack.c.l.b16 %v428
      %v684 = vunpack.c.h.b16 %v428
      %v685 = vunpack.c.l.b16 %v429
      %v686 = vunpack.c.h.b16 %v429
      %v687 = vunpack.c.l.b16 %v430
      %v688 = vunpack.c.h.b16 %v430
      %v689 = vunpack.c.l.b16 %v431
      %v690 = vunpack.c.h.b16 %v431
      %v691 = vunpack.c.l.b16 %v432
      %v692 = vunpack.c.h.b16 %v432
      %v693 = vunpack.c.l.b16 %v433
      %v694 = vunpack.c.h.b16 %v433
      %v695 = vunpack.c.l.b16 %v434
      %v696 = vunpack.c.h.b16 %v434
      %v697 = vunpack.c.l.b16 %v435
      %v698 = vunpack.c.h.b16 %v435
      %v699 = vunpack.c.l.b16 %v436
      %v700 = vunpack.c.h.b16 %v436
      %v701 = vunpack.c.l.b16 %v437
      %v702 = vunpack.c.h.b16 %v437
      %v703 = vunpack.c.l.b16 %v438
      %v704 = vunpack.c.h.b16 %v438
      %v705 = vunpack.c.l.b16 %v439
      %v706 = vunpack.c.h.b16 %v439
      %v707 = vunpack.c.l.b16 %v440
      %v708 = vunpack.c.h.b16 %v440
      %v709 = vunpack.c.l.b16 %v441
      %v710 = vunpack.c.h.b16 %v441
      %v711 = vunpack.c.l.b16 %v442
      %v712 = vunpack.c.h.b16 %v442
      %v713 = vunpack.c.l.b16 %v443
      %v714 = vunpack.c.h.b16 %v443
      %v715 = vunpack.c.l.b16 %v444
      %v716 = vunpack.c.h.b16 %v444
      %v717 = vunpack.c.l.b16 %v445
      %v718 = vunpack.c.h.b16 %v445
      %v719 = vunpack.c.l.b16 %v446
      %v720 = vunpack.c.h.b16 %v446
      %v721 = vunpack.c.l.b16 %v447
      %v722 = vunpack.c.h.b16 %v447
      %v723 = vunpack.c.l.b16 %v448
      %v724 = vunpack.c.h.b16 %v448
      %v725 = vunpack.c.l.b16 %v449
      %v726 = vunpack.c.h.b16 %v449
      %v727 = vunpack.c.l.b16 %v450
      %v728 = vunpack.c.h.b16 %v450
      %v729 = vunpack.c.l.b16 %v451
      %v730 = vunpack.c.h.b16 %v451
      %v731 = vunpack.c.l.b16 %v452
      %v732 = vunpack.c.h.b16 %v452
      %v733 = vunpack.c.l.b16 %v453
      %v734 = vunpack.c.h.b16 %v453
      %v735 = vunpack.c.l.b16 %v454
      %v736 = vunpack.c.h.b16 %v454
      %v737 = vunpack.c.l.b16 %v455
      %v738 = vunpack.c.h.b16 %v455
      %v739 = vunpack.c.l.b16 %v456
      %v740 = vunpack.c.h.b16 %v456
      %v741 = vunpack.c.l.b16 %v457
      %v742 = vunpack.c.h.b16 %v457
      %v743 = vunpack.c.l.b16 %v458
      %v744 = vunpack.c.h.b16 %v458
      %v745 = vunpack.c.l.b16 %v459
      %v746 = vunpack.c.h.b16 %v459
      %v747 = vunpack.c.l.b16 %v460
      %v748 = vunpack.c.h.b16 %v460
      %v749 = vunpack.c.l.b16 %v461
      %v750 = vunpack.c.h.b16 %v461
      %v751 = vunpack.c.l.b16 %v462
      %v752 = vunpack.c.h.b16 %v462
      %v753 = vunpack.c.l.b16 %v463
      %v754 = vunpack.c.h.b16 %v463
      %v755 = vunpack.c.l.b16 %v464
      %v756 = vunpack.c.h.b16 %v464
      %v757 = vunpack.c.l.b16 %v465
      %v758 = vunpack.c.h.b16 %v465
      %v759 = vunpack.c.l.b16 %v466
      %v760 = vunpack.c.h.b16 %v466
      %v761 = vpack.c.b16 %v611, %v601
      %v762 = vpack.c.b16 %v612, %v602
      %v763 = vpack.c.b16 %v613, %v603
      %v764 = vpack.c.b16 %v614, %v604
      %v765 = vpack.c.b16 %v615, %v605
      %v766 = vpack.c.b16 %v616, %v606
      %v767 = vpack.c.b16 %v617, %v607
      %v768 = vpack.c.b16 %v618, %v608
      %v769 = vpack.c.b16 %v619, %v609
      %v770 = vpack.c.b16 %v620, %v610
      %v771 = vpack.c.b16 %v631, %v621
      %v772 = vpack.c.b16 %v632, %v622
      %v773 = vpack.c.b16 %v633, %v623
      %v774 = vpack.c.b16 %v634, %v624
      %v775 = vpack.c.b16 %v635, %v625
      %v776 = vpack.c.b16 %v636, %v626
      %v777 = vpack.c.b16 %v637, %v627
      %v778 = vpack.c.b16 %v638, %v628
      %v779 = vpack.c.b16 %v639, %v629
      %v780 = vpack.c.b16 %v640, %v630
      %v781 = vpack.c.b16 %v651, %v641
      %v782 = vpack.c.b16 %v652, %v642
      %v783 = vpack.c.b16 %v653, %v643
      %v784 = vpack.c.b16 %v654, %v644
      %v785 = vpack.c.b16 %v655, %v645
      %v786 = vpack.c.b16 %v656, %v646
      %v787 = vpack.c.b16 %v657, %v647
      %v788 = vpack.c.b16 %v658, %v648
      %v789 = vpack.c.b16 %v659, %v649
      %v790 = vpack.c.b16 %v660, %v650
      %v791 = vpack.c.b16 %v671, %v661
      %v792 = vpack.c.b16 %v672, %v662
      %v793 = vpack.c.b16 %v673, %v663
      %v794 = vpack.c.b16 %v674, %v664
      %v795 = vpack.c.b16 %v675, %v665
      %v796 = vpack.c.b16 %v676, %v666
      %v797 = vpack.c.b16 %v677, %v667
      %v798 = vpack.c.b16 %v678, %v668
      %v799 = vpack.c.b16 %v679, %v669
      %v800 = vpack.c.b16 %v680, %v670
      %v801 = vpack.c.b16 %v691, %v681
      %v802 = vpack.c.b16 %v692, %v682
      %v803 = vpack.c.b16 %v693, %v683
      %v804 = vpack.c.b16 %v694, %v684
      %v805 = vpack.c.b16 %v695, %v685
      %v806 = vpack.c.b16 %v696, %v686
      %v807 = vpack.c.b16 %v697, %v687
      %v808 = vpack.c.b16 %v698, %v688
      %v809 = vpack.c.b16 %v699, %v689
      %v810 = vpack.c.b16 %v700, %v690
      %v811 = vpack.c.b16 %v711, %v701
      %v812 = vpack.c.b16 %v712, %v702
      %v813 = vpack.c.b16 %v713, %v703
      %v814 = vpack.c.b16 %v714, %v704
      %v815 = vpack.c.b16 %v715, %v705
      %v816 = vpack.c.b16 %v716, %v706
      %v817 = vpack.c.b16 %v717, %v707
      %v818 = vpack.c.b16 %v718, %v708
      %v819 = vpack.c.b16 %v719, %v709
      %v820 = vpack.c.b16 %v720, %v710
      %v821 = vpack.c.b16 %v731, %v721
      %v822 = vpack.c.b16 %v732, %v722
      %v823 = vpack.c.b16 %v733, %v723
      %v824 = vpack.c.b16 %v734, %v724
      %v825 = vpack.c.b16 %v735, %v725
      %v826 = vpack.c.b16 %v736, %v726
      %v827 = vpack.c.b16 %v737, %v727
      %v828 = vpack.c.b16 %v738, %v728
      %v829 = vpack.c.b16 %v739, %v729
      %v830 = vpack.c.b16 %v740, %v730
      %v831 = vpack.c.b16 %v751, %v741
      %v832 = vpack.c.b16 %v752, %v742
      %v833 = vpack.c.b16 %v753, %v743
      %v834 = vpack.c.b16 %v754, %v744
      %v835 = vpack.c.b16 %v755, %v745
      %v836 = vpack.c.b16 %v756, %v746
      %v837 = vpack.c.b16 %v757, %v747
      %v838 = vpack.c.b16 %v758, %v748
      %v839 = vpack.c.b16 %v759, %v749
      %v840 = vpack.c.b16 %v760, %v750
      %921 = vmatprep.subr.bf16.mxu0 %v762
      %922 = vmatpush1.bf16.msra.mxu0 %v761
      %923 = vmatprep.subr.bf16.mxu0 %v772
      %924 = vmatpush1.bf16.msra.mxu0 %v771
      %925 = vmatprep.subr.bf16.mxu0 %v782
      %926 = vmatpush1.bf16.msra.mxu0 %v781
      %927 = vmatprep.subr.bf16.mxu0 %v792
      %928 = vmatpush1.bf16.msra.mxu0 %v791
      %929 = vmatprep.subr.bf16.mxu0 %v802
      %930 = vmatpush1.bf16.msra.mxu0 %v801
      %931 = vmatprep.subr.bf16.mxu0 %v812
      %932 = vmatpush1.bf16.msra.mxu0 %v811
      %933 = vmatprep.subr.bf16.mxu0 %v822
      %934 = vmatpush1.bf16.msra.mxu0 %v821
      %935 = vmatprep.subr.bf16.mxu0 %v832
      %936 = vmatpush1.bf16.msra.mxu0 %v831
      %937 = vmatprep.subr.bf16.mxu0 0
      %938 = vmatpush1.bf16.msra.mxu0 0
      %939 = vmatprep.subr.bf16.mxu0 0
      %940 = vmatpush1.bf16.msra.mxu0 0
      %941 = vmatprep.subr.bf16.mxu0 0
      %942 = vmatpush1.bf16.msra.mxu0 0
      %943 = vmatprep.subr.bf16.mxu0 0
      %944 = vmatpush1.bf16.msra.mxu0 0
      %945 = vmatprep.subr.bf16.mxu0 0
      %946 = vmatpush1.bf16.msra.mxu0 0
      %947 = vmatprep.subr.bf16.mxu0 0
      %948 = vmatpush1.bf16.msra.mxu0 0
      %949 = vmatprep.subr.bf16.mxu0 0
      %950 = vmatpush1.bf16.msra.mxu0 0
      %951 = vmatprep.subr.bf16.mxu0 0
      %952 = vmatpush1.bf16.msra.mxu0 0
      %953 = vmatprep.mubr.bf16.mxu0 0
      %954 = vmatmul.mubr.bf16.gmra.mrb[0].mxu0 %v386
      %v955 = vpop.f32.mrb[0].mxu0
      %v956 = vadd.f32 %v474, %v955
      %v957 = vpop.f32.mrb[0].mxu0
      %v958 = vadd.f32 %v478, %v957
      %v959 = vpop.f32.mrb[0].mxu0
      %v960 = vpop.f32.mrb[0].mxu0
      %961 = vdwg.mxu0
      %962 = vmatprep.subr.bf16.mxu0 %v764
      %963 = vmatpush1.bf16.msra.mxu0 %v763
      %964 = vmatprep.subr.bf16.mxu0 %v774
      %965 = vmatpush1.bf16.msra.mxu0 %v773
      %966 = vmatprep.subr.bf16.mxu0 %v784
      %967 = vmatpush1.bf16.msra.mxu0 %v783
      %968 = vmatprep.subr.bf16.mxu0 %v794
      %969 = vmatpush1.bf16.msra.mxu0 %v793
      %970 = vmatprep.subr.bf16.mxu0 %v804
      %971 = vmatpush1.bf16.msra.mxu0 %v803
      %972 = vmatprep.subr.bf16.mxu0 %v814
      %973 = vmatpush1.bf16.msra.mxu0 %v813
      %974 = vmatprep.subr.bf16.mxu0 %v824
      %975 = vmatpush1.bf16.msra.mxu0 %v823
      %976 = vmatprep.subr.bf16.mxu0 %v834
      %977 = vmatpush1.bf16.msra.mxu0 %v833
      %978 = vmatprep.subr.bf16.mxu0 0
      %979 = vmatpush1.bf16.msra.mxu0 0
      %980 = vmatprep.subr.bf16.mxu0 0
      %981 = vmatpush1.bf16.msra.mxu0 0
      %982 = vmatprep.subr.bf16.mxu0 0
      %983 = vmatpush1.bf16.msra.mxu0 0
      %984 = vmatprep.subr.bf16.mxu0 0
      %985 = vmatpush1.bf16.msra.mxu0 0
      %986 = vmatprep.subr.bf16.mxu0 0
      %987 = vmatpush1.bf16.msra.mxu0 0
      %988 = vmatprep.subr.bf16.mxu0 0
      %989 = vmatpush1.bf16.msra.mxu0 0
      %990 = vmatprep.subr.bf16.mxu0 0
      %991 = vmatpush1.bf16.msra.mxu0 0
      %992 = vmatprep.subr.bf16.mxu0 0
      %993 = vmatpush1.bf16.msra.mxu0 0
      %994 = vmatprep.mubr.bf16.mxu0 0
      %995 = vmatmul.mubr.bf16.gmra.mrb[0].mxu0 %v386
      %v996 = vpop.f32.mrb[0].mxu0
      %v997 = vadd.f32 %v482, %v996
      %v998 = vpop.f32.mrb[0].mxu0
      %v999 = vadd.f32 %v486, %v998
      %v1000 = vpop.f32.mrb[0].mxu0
      %v1001 = vpop.f32.mrb[0].mxu0
      %1002 = vdwg.mxu0
      %1003 = vmatprep.subr.bf16.mxu0 %v766
      %1004 = vmatpush1.bf16.msra.mxu0 %v765
      %1005 = vmatprep.subr.bf16.mxu0 %v776
      %1006 = vmatpush1.bf16.msra.mxu0 %v775
      %1007 = vmatprep.subr.bf16.mxu0 %v786
      %1008 = vmatpush1.bf16.msra.mxu0 %v785
      %1009 = vmatprep.subr.bf16.mxu0 %v796
      %1010 = vmatpush1.bf16.msra.mxu0 %v795
      %1011 = vmatprep.subr.bf16.mxu0 %v806
      %1012 = vmatpush1.bf16.msra.mxu0 %v805
      %1013 = vmatprep.subr.bf16.mxu0 %v816
      %1014 = vmatpush1.bf16.msra.mxu0 %v815
      %1015 = vmatprep.subr.bf16.mxu0 %v826
      %1016 = vmatpush1.bf16.msra.mxu0 %v825
      %1017 = vmatprep.subr.bf16.mxu0 %v836
      %1018 = vmatpush1.bf16.msra.mxu0 %v835
      %1019 = vmatprep.subr.bf16.mxu0 0
      %1020 = vmatpush1.bf16.msra.mxu0 0
      %1021 = vmatprep.subr.bf16.mxu0 0
      %1022 = vmatpush1.bf16.msra.mxu0 0
      %1023 = vmatprep.subr.bf16.mxu0 0
      %1024 = vmatpush1.bf16.msra.mxu0 0
      %1025 = vmatprep.subr.bf16.mxu0 0
      %1026 = vmatpush1.bf16.msra.mxu0 0
      %1027 = vmatprep.subr.bf16.mxu0 0
      %1028 = vmatpush1.bf16.msra.mxu0 0
      %1029 = vmatprep.subr.bf16.mxu0 0
      %1030 = vmatpush1.bf16.msra.mxu0 0
      %1031 = vmatprep.subr.bf16.mxu0 0
      %1032 = vmatpush1.bf16.msra.mxu0 0
      %1033 = vmatprep.subr.bf16.mxu0 0
      %1034 = vmatpush1.bf16.msra.mxu0 0
      %1035 = vmatprep.mubr.bf16.mxu0 0
      %1036 = vmatmul.mubr.bf16.gmra.mrb[0].mxu0 %v386
      %v1037 = vpop.f32.mrb[0].mxu0
      %v1038 = vadd.f32 %v490, %v1037
      %v1039 = vpop.f32.mrb[0].mxu0
      %v1040 = vadd.f32 %v494, %v1039
      %v1041 = vpop.f32.mrb[0].mxu0
      %v1042 = vpop.f32.mrb[0].mxu0
      %1043 = vdwg.mxu0
      %1044 = vmatprep.subr.bf16.mxu0 %v768
      %1045 = vmatpush1.bf16.msra.mxu0 %v767
      %1046 = vmatprep.subr.bf16.mxu0 %v778
      %1047 = vmatpush1.bf16.msra.mxu0 %v777
      %1048 = vmatprep.subr.bf16.mxu0 %v788
      %1049 = vmatpush1.bf16.msra.mxu0 %v787
      %1050 = vmatprep.subr.bf16.mxu0 %v798
      %1051 = vmatpush1.bf16.msra.mxu0 %v797
      %1052 = vmatprep.subr.bf16.mxu0 %v808
      %1053 = vmatpush1.bf16.msra.mxu0 %v807
      %1054 = vmatprep.subr.bf16.mxu0 %v818
      %1055 = vmatpush1.bf16.msra.mxu0 %v817
      %1056 = vmatprep.subr.bf16.mxu0 %v828
      %1057 = vmatpush1.bf16.msra.mxu0 %v827
      %1058 = vmatprep.subr.bf16.mxu0 %v838
      %1059 = vmatpush1.bf16.msra.mxu0 %v837
      %1060 = vmatprep.subr.bf16.mxu0 0
      %1061 = vmatpush1.bf16.msra.mxu0 0
      %1062 = vmatprep.subr.bf16.mxu0 0
      %1063 = vmatpush1.bf16.msra.mxu0 0
      %1064 = vmatprep.subr.bf16.mxu0 0
      %1065 = vmatpush1.bf16.msra.mxu0 0
      %1066 = vmatprep.subr.bf16.mxu0 0
      %1067 = vmatpush1.bf16.msra.mxu0 0
      %1068 = vmatprep.subr.bf16.mxu0 0
      %1069 = vmatpush1.bf16.msra.mxu0 0
      %1070 = vmatprep.subr.bf16.mxu0 0
      %1071 = vmatpush1.bf16.msra.mxu0 0
      %1072 = vmatprep.subr.bf16.mxu0 0
      %1073 = vmatpush1.bf16.msra.mxu0 0
      %1074 = vmatprep.subr.bf16.mxu0 0
      %1075 = vmatpush1.bf16.msra.mxu0 0
      %1076 = vmatprep.mubr.bf16.mxu0 0
      %1077 = vmatmul.mubr.bf16.gmra.mrb[0].mxu0 %v386
      %v1078 = vpop.f32.mrb[0].mxu0
      %v1079 = vadd.f32 %v498, %v1078
      %v1080 = vpop.f32.mrb[0].mxu0
      %v1081 = vadd.f32 %v502, %v1080
      %v1082 = vpop.f32.mrb[0].mxu0
      %v1083 = vpop.f32.mrb[0].mxu0
      %1084 = vdwg.mxu0
      %1085 = vmatprep.subr.bf16.mxu0 %v770
      %1086 = vmatpush1.bf16.msra.mxu0 %v769
      %1087 = vmatprep.subr.bf16.mxu0 %v780
      %1088 = vmatpush1.bf16.msra.mxu0 %v779
      %1089 = vmatprep.subr.bf16.mxu0 %v790
      %1090 = vmatpush1.bf16.msra.mxu0 %v789
      %1091 = vmatprep.subr.bf16.mxu0 %v800
      %1092 = vmatpush1.bf16.msra.mxu0 %v799
      %1093 = vmatprep.subr.bf16.mxu0 %v810
      %1094 = vmatpush1.bf16.msra.mxu0 %v809
      %1095 = vmatprep.subr.bf16.mxu0 %v820
      %1096 = vmatpush1.bf16.msra.mxu0 %v819
      %1097 = vmatprep.subr.bf16.mxu0 %v830
      %1098 = vmatpush1.bf16.msra.mxu0 %v829
      %1099 = vmatprep.subr.bf16.mxu0 %v840
      %1100 = vmatpush1.bf16.msra.mxu0 %v839
      %1101 = vmatprep.subr.bf16.mxu0 0
      %1102 = vmatpush1.bf16.msra.mxu0 0
      %1103 = vmatprep.subr.bf16.mxu0 0
      %1104 = vmatpush1.bf16.msra.mxu0 0
      %1105 = vmatprep.subr.bf16.mxu0 0
      %1106 = vmatpush1.bf16.msra.mxu0 0
      %1107 = vmatprep.subr.bf16.mxu0 0
      %1108 = vmatpush1.bf16.msra.mxu0 0
      %1109 = vmatprep.subr.bf16.mxu0 0
      %1110 = vmatpush1.bf16.msra.mxu0 0
      %1111 = vmatprep.subr.bf16.mxu0 0
      %1112 = vmatpush1.bf16.msra.mxu0 0
      %1113 = vmatprep.subr.bf16.mxu0 0
      %1114 = vmatpush1.bf16.msra.mxu0 0
      %1115 = vmatprep.subr.bf16.mxu0 0
      %1116 = vmatpush1.bf16.msra.mxu0 0
      %1117 = vmatprep.mubr.bf16.mxu0 0
      %1118 = vmatmul.mubr.bf16.gmra.mrb[0].mxu0 %v386
      %v1119 = vpop.f32.mrb[0].mxu0
      %v1120 = vadd.f32 %v506, %v1119
      %v1121 = vpop.f32.mrb[0].mxu0
      %v1122 = vadd.f32 %v510, %v1121
      %v1123 = vpop.f32.mrb[0].mxu0
      %v1124 = vpop.f32.mrb[0].mxu0
      %1125 = vdwg.mxu0
      %v1126 = vsub.f32 0.0, %v956
      %v1127 = vsub.f32 0.0, %v958
      %v1128 = vsub.f32 0.0, %v997
      %v1129 = vsub.f32 0.0, %v999
      %v1130 = vsub.f32 0.0, %v1038
      %v1131 = vsub.f32 0.0, %v1040
      %v1132 = vsub.f32 0.0, %v1079
      %v1133 = vsub.f32 0.0, %v1081
      %v1134 = vsub.f32 0.0, %v1120
      %v1135 = vsub.f32 0.0, %v1122
      %v1136 = vmul.f32 %v1126, 1.442695
      %v1137 = vpow.pop %v1136
      %v1138 = vmul.f32 %v1127, 1.442695
      %v1139 = vpow.pop %v1138
      %v1140 = vmul.f32 %v1128, 1.442695
      %v1141 = vpow.pop %v1140
      %v1142 = vmul.f32 %v1129, 1.442695
      %v1143 = vpow.pop %v1142
      %v1144 = vmul.f32 %v1130, 1.442695
      %v1145 = vpow.pop %v1144
      %v1146 = vmul.f32 %v1131, 1.442695
      %v1147 = vpow.pop %v1146
      %v1148 = vmul.f32 %v1132, 1.442695
      %v1149 = vpow.pop %v1148
      %v1150 = vmul.f32 %v1133, 1.442695
      %v1151 = vpow.pop %v1150
      %v1152 = vmul.f32 %v1134, 1.442695
      %v1153 = vpow.pop %v1152
      %v1154 = vmul.f32 %v1135, 1.442695
      %v1155 = vpow.pop %v1154
      %v1156 = vadd.f32 %v1137, 1.0
      %v1157 = vadd.f32 %v1139, 1.0
      %v1158 = vadd.f32 %v1141, 1.0
      %v1159 = vadd.f32 %v1143, 1.0
      %v1160 = vadd.f32 %v1145, 1.0
      %v1161 = vadd.f32 %v1147, 1.0
      %v1162 = vadd.f32 %v1149, 1.0
      %v1163 = vadd.f32 %v1151, 1.0
      %v1164 = vadd.f32 %v1153, 1.0
      %v1165 = vadd.f32 %v1155, 1.0
      %v1166 = vrcp.pop %v1156
      %v1167 = vrcp.pop %v1157
      %v1168 = vrcp.pop %v1158
      %v1169 = vrcp.pop %v1159
      %v1170 = vrcp.pop %v1160
      %v1171 = vrcp.pop %v1161
      %v1172 = vrcp.pop %v1162
      %v1173 = vrcp.pop %v1163
      %v1174 = vrcp.pop %v1164
      %v1175 = vrcp.pop %v1165
      %v1176 = vmul.f32 %v956, %v1166
      %v1177 = vmul.f32 %v958, %v1167
      %v1178 = vmul.f32 %v997, %v1168
      %v1179 = vmul.f32 %v999, %v1169
      %v1180 = vmul.f32 %v1038, %v1170
      %v1181 = vmul.f32 %v1040, %v1171
      %v1182 = vmul.f32 %v1079, %v1172
      %v1183 = vmul.f32 %v1081, %v1173
      %v1184 = vmul.f32 %v1120, %v1174
      %v1185 = vmul.f32 %v1122, %v1175
      %v1186 = vld [vmem:[#allocation3] sm:$0x3]
      %v1187 = vsub.f32 %v1186, %v382
      %v1188 = vmul.f32 %v1187, 0.015625
      %v1189 = vpack.c.bf16 %v1188, %v1188
      %1190 = vmatprep.subr.bf16.mxu0 %v762
      %1191 = vmatpush1.bf16.msra.mxu0 %v761
      %1192 = vmatprep.subr.bf16.mxu0 %v772
      %1193 = vmatpush1.bf16.msra.mxu0 %v771
      %1194 = vmatprep.subr.bf16.mxu0 %v782
      %1195 = vmatpush1.bf16.msra.mxu0 %v781
      %1196 = vmatprep.subr.bf16.mxu0 %v792
      %1197 = vmatpush1.bf16.msra.mxu0 %v791
      %1198 = vmatprep.subr.bf16.mxu0 %v802
      %1199 = vmatpush1.bf16.msra.mxu0 %v801
      %1200 = vmatprep.subr.bf16.mxu0 %v812
      %1201 = vmatpush1.bf16.msra.mxu0 %v811
      %1202 = vmatprep.subr.bf16.mxu0 %v822
      %1203 = vmatpush1.bf16.msra.mxu0 %v821
      %1204 = vmatprep.subr.bf16.mxu0 %v832
      %1205 = vmatpush1.bf16.msra.mxu0 %v831
      %1206 = vmatprep.subr.bf16.mxu0 0
      %1207 = vmatpush1.bf16.msra.mxu0 0
      %1208 = vmatprep.subr.bf16.mxu0 0
      %1209 = vmatpush1.bf16.msra.mxu0 0
      %1210 = vmatprep.subr.bf16.mxu0 0
      %1211 = vmatpush1.bf16.msra.mxu0 0
      %1212 = vmatprep.subr.bf16.mxu0 0
      %1213 = vmatpush1.bf16.msra.mxu0 0
      %1214 = vmatprep.subr.bf16.mxu0 0
      %1215 = vmatpush1.bf16.msra.mxu0 0
      %1216 = vmatprep.subr.bf16.mxu0 0
      %1217 = vmatpush1.bf16.msra.mxu0 0
      %1218 = vmatprep.subr.bf16.mxu0 0
      %1219 = vmatpush1.bf16.msra.mxu0 0
      %1220 = vmatprep.subr.bf16.mxu0 0
      %1221 = vmatpush1.bf16.msra.mxu0 0
      %1222 = vmatprep.mubr.bf16.mxu0 0
      %1223 = vmatmul.mubr.bf16.gmra.mrb[0].mxu0 %v1189
      %v1224 = vpop.f32.mrb[0].mxu0
      %v1225 = vadd.f32 %v474, %v1224
      %v1226 = vpop.f32.mrb[0].mxu0
      %v1227 = vadd.f32 %v478, %v1226
      %v1228 = vpop.f32.mrb[0].mxu0
      %v1229 = vpop.f32.mrb[0].mxu0
      %1230 = vdwg.mxu0
      %1231 = vmatprep.subr.bf16.mxu0 %v764
      %1232 = vmatpush1.bf16.msra.mxu0 %v763
      %1233 = vmatprep.subr.bf16.mxu0 %v774
      %1234 = vmatpush1.bf16.msra.mxu0 %v773
      %1235 = vmatprep.subr.bf16.mxu0 %v784
      %1236 = vmatpush1.bf16.msra.mxu0 %v783
      %1237 = vmatprep.subr.bf16.mxu0 %v794
      %1238 = vmatpush1.bf16.msra.mxu0 %v793
      %1239 = vmatprep.subr.bf16.mxu0 %v804
      %1240 = vmatpush1.bf16.msra.mxu0 %v803
      %1241 = vmatprep.subr.bf16.mxu0 %v814
      %1242 = vmatpush1.bf16.msra.mxu0 %v813
      %1243 = vmatprep.subr.bf16.mxu0 %v824
      %1244 = vmatpush1.bf16.msra.mxu0 %v823
      %1245 = vmatprep.subr.bf16.mxu0 %v834
      %1246 = vmatpush1.bf16.msra.mxu0 %v833
      %1247 = vmatprep.subr.bf16.mxu0 0
      %1248 = vmatpush1.bf16.msra.mxu0 0
      %1249 = vmatprep.subr.bf16.mxu0 0
      %1250 = vmatpush1.bf16.msra.mxu0 0
      %1251 = vmatprep.subr.bf16.mxu0 0
      %1252 = vmatpush1.bf16.msra.mxu0 0
      %1253 = vmatprep.subr.bf16.mxu0 0
      %1254 = vmatpush1.bf16.msra.mxu0 0
      %1255 = vmatprep.subr.bf16.mxu0 0
      %1256 = vmatpush1.bf16.msra.mxu0 0
      %1257 = vmatprep.subr.bf16.mxu0 0
      %1258 = vmatpush1.bf16.msra.mxu0 0
      %1259 = vmatprep.subr.bf16.mxu0 0
      %1260 = vmatpush1.bf16.msra.mxu0 0
      %1261 = vmatprep.subr.bf16.mxu0 0
      %1262 = vmatpush1.bf16.msra.mxu0 0
      %1263 = vmatprep.mubr.bf16.mxu0 0
      %1264 = vmatmul.mubr.bf16.gmra.mrb[0].mxu0 %v1189
      %v1265 = vpop.f32.mrb[0].mxu0
      %v1266 = vadd.f32 %v482, %v1265
      %v1267 = vpop.f32.mrb[0].mxu0
      %v1268 = vadd.f32 %v486, %v1267
      %v1269 = vpop.f32.mrb[0].mxu0
      %v1270 = vpop.f32.mrb[0].mxu0
      %1271 = vdwg.mxu0
      %1272 = vmatprep.subr.bf16.mxu0 %v766
      %1273 = vmatpush1.bf16.msra.mxu0 %v765
      %1274 = vmatprep.subr.bf16.mxu0 %v776
      %1275 = vmatpush1.bf16.msra.mxu0 %v775
      %1276 = vmatprep.subr.bf16.mxu0 %v786
      %1277 = vmatpush1.bf16.msra.mxu0 %v785
      %1278 = vmatprep.subr.bf16.mxu0 %v796
      %1279 = vmatpush1.bf16.msra.mxu0 %v795
      %1280 = vmatprep.subr.bf16.mxu0 %v806
      %1281 = vmatpush1.bf16.msra.mxu0 %v805
      %1282 = vmatprep.subr.bf16.mxu0 %v816
      %1283 = vmatpush1.bf16.msra.mxu0 %v815
      %1284 = vmatprep.subr.bf16.mxu0 %v826
      %1285 = vmatpush1.bf16.msra.mxu0 %v825
      %1286 = vmatprep.subr.bf16.mxu0 %v836
      %1287 = vmatpush1.bf16.msra.mxu0 %v835
      %1288 = vmatprep.subr.bf16.mxu0 0
      %1289 = vmatpush1.bf16.msra.mxu0 0
      %1290 = vmatprep.subr.bf16.mxu0 0
      %1291 = vmatpush1.bf16.msra.mxu0 0
      %1292 = vmatprep.subr.bf16.mxu0 0
      %1293 = vmatpush1.bf16.msra.mxu0 0
      %1294 = vmatprep.subr.bf16.mxu0 0
      %1295 = vmatpush1.bf16.msra.mxu0 0
      %1296 = vmatprep.subr.bf16.mxu0 0
      %1297 = vmatpush1.bf16.msra.mxu0 0
      %1298 = vmatprep.subr.bf16.mxu0 0
      %1299 = vmatpush1.bf16.msra.mxu0 0
      %1300 = vmatprep.subr.bf16.mxu0 0
      %1301 = vmatpush1.bf16.msra.mxu0 0
      %1302 = vmatprep.subr.bf16.mxu0 0
      %1303 = vmatpush1.bf16.msra.mxu0 0
      %1304 = vmatprep.mubr.bf16.mxu0 0
      %1305 = vmatmul.mubr.bf16.gmra.mrb[0].mxu0 %v1189
      %v1306 = vpop.f32.mrb[0].mxu0
      %v1307 = vadd.f32 %v490, %v1306
      %v1308 = vpop.f32.mrb[0].mxu0
      %v1309 = vadd.f32 %v494, %v1308
      %v1310 = vpop.f32.mrb[0].mxu0
      %v1311 = vpop.f32.mrb[0].mxu0
      %1312 = vdwg.mxu0
      %1313 = vmatprep.subr.bf16.mxu0 %v768
      %1314 = vmatpush1.bf16.msra.mxu0 %v767
      %1315 = vmatprep.subr.bf16.mxu0 %v778
      %1316 = vmatpush1.bf16.msra.mxu0 %v777
      %1317 = vmatprep.subr.bf16.mxu0 %v788
      %1318 = vmatpush1.bf16.msra.mxu0 %v787
      %1319 = vmatprep.subr.bf16.mxu0 %v798
      %1320 = vmatpush1.bf16.msra.mxu0 %v797
      %1321 = vmatprep.subr.bf16.mxu0 %v808
      %1322 = vmatpush1.bf16.msra.mxu0 %v807
      %1323 = vmatprep.subr.bf16.mxu0 %v818
      %1324 = vmatpush1.bf16.msra.mxu0 %v817
      %1325 = vmatprep.subr.bf16.mxu0 %v828
      %1326 = vmatpush1.bf16.msra.mxu0 %v827
      %1327 = vmatprep.subr.bf16.mxu0 %v838
      %1328 = vmatpush1.bf16.msra.mxu0 %v837
      %1329 = vmatprep.subr.bf16.mxu0 0
      %1330 = vmatpush1.bf16.msra.mxu0 0
      %1331 = vmatprep.subr.bf16.mxu0 0
      %1332 = vmatpush1.bf16.msra.mxu0 0
      %1333 = vmatprep.subr.bf16.mxu0 0
      %1334 = vmatpush1.bf16.msra.mxu0 0
      %1335 = vmatprep.subr.bf16.mxu0 0
      %1336 = vmatpush1.bf16.msra.mxu0 0
      %1337 = vmatprep.subr.bf16.mxu0 0
      %1338 = vmatpush1.bf16.msra.mxu0 0
      %1339 = vmatprep.subr.bf16.mxu0 0
      %1340 = vmatpush1.bf16.msra.mxu0 0
      %1341 = vmatprep.subr.bf16.mxu0 0
      %1342 = vmatpush1.bf16.msra.mxu0 0
      %1343 = vmatprep.subr.bf16.mxu0 0
      %1344 = vmatpush1.bf16.msra.mxu0 0
      %1345 = vmatprep.mubr.bf16.mxu0 0
      %1346 = vmatmul.mubr.bf16.gmra.mrb[0].mxu0 %v1189
      %v1347 = vpop.f32.mrb[0].mxu0
      %v1348 = vadd.f32 %v498, %v1347
      %v1349 = vpop.f32.mrb[0].mxu0
      %v1350 = vadd.f32 %v502, %v1349
      %v1351 = vpop.f32.mrb[0].mxu0
      %v1352 = vpop.f32.mrb[0].mxu0
      %1353 = vdwg.mxu0
      %1354 = vmatprep.subr.bf16.mxu0 %v770
      %1355 = vmatpush1.bf16.msra.mxu0 %v769
      %1356 = vmatprep.subr.bf16.mxu0 %v780
      %1357 = vmatpush1.bf16.msra.mxu0 %v779
      %1358 = vmatprep.subr.bf16.mxu0 %v790
      %1359 = vmatpush1.bf16.msra.mxu0 %v789
      %1360 = vmatprep.subr.bf16.mxu0 %v800
      %1361 = vmatpush1.bf16.msra.mxu0 %v799
      %1362 = vmatprep.subr.bf16.mxu0 %v810
      %1363 = vmatpush1.bf16.msra.mxu0 %v809
      %1364 = vmatprep.subr.bf16.mxu0 %v820
      %1365 = vmatpush1.bf16.msra.mxu0 %v819
      %1366 = vmatprep.subr.bf16.mxu0 %v830
      %1367 = vmatpush1.bf16.msra.mxu0 %v829
      %1368 = vmatprep.subr.bf16.mxu0 %v840
      %1369 = vmatpush1.bf16.msra.mxu0 %v839
      %1370 = vmatprep.subr.bf16.mxu0 0
      %1371 = vmatpush1.bf16.msra.mxu0 0
      %1372 = vmatprep.subr.bf16.mxu0 0
      %1373 = vmatpush1.bf16.msra.mxu0 0
      %1374 = vmatprep.subr.bf16.mxu0 0
      %1375 = vmatpush1.bf16.msra.mxu0 0
      %1376 = vmatprep.subr.bf16.mxu0 0
      %1377 = vmatpush1.bf16.msra.mxu0 0
      %1378 = vmatprep.subr.bf16.mxu0 0
      %1379 = vmatpush1.bf16.msra.mxu0 0
      %1380 = vmatprep.subr.bf16.mxu0 0
      %1381 = vmatpush1.bf16.msra.mxu0 0
      %1382 = vmatprep.subr.bf16.mxu0 0
      %1383 = vmatpush1.bf16.msra.mxu0 0
      %1384 = vmatprep.subr.bf16.mxu0 0
      %1385 = vmatpush1.bf16.msra.mxu0 0
      %1386 = vmatprep.mubr.bf16.mxu0 0
      %1387 = vmatmul.mubr.bf16.gmra.mrb[0].mxu0 %v1189
      %v1388 = vpop.f32.mrb[0].mxu0
      %v1389 = vadd.f32 %v506, %v1388
      %v1390 = vpop.f32.mrb[0].mxu0
      %v1391 = vadd.f32 %v510, %v1390
      %v1392 = vpop.f32.mrb[0].mxu0
      %v1393 = vpop.f32.mrb[0].mxu0
      %1394 = vdwg.mxu0
      %v1395 = vsub.f32 0.0, %v1225
      %v1396 = vsub.f32 0.0, %v1227
      %v1397 = vsub.f32 0.0, %v1266
      %v1398 = vsub.f32 0.0, %v1268
      %v1399 = vsub.f32 0.0, %v1307
      %v1400 = vsub.f32 0.0, %v1309
      %v1401 = vsub.f32 0.0, %v1348
      %v1402 = vsub.f32 0.0, %v1350
      %v1403 = vsub.f32 0.0, %v1389
      %v1404 = vsub.f32 0.0, %v1391
      %v1405 = vmul.f32 %v1395, 1.442695
      %v1406 = vpow.pop %v1405
      %v1407 = vmul.f32 %v1396, 1.442695
      %v1408 = vpow.pop %v1407
      %v1409 = vmul.f32 %v1397, 1.442695
      %v1410 = vpow.pop %v1409
      %v1411 = vmul.f32 %v1398, 1.442695
      %v1412 = vpow.pop %v1411
      %v1413 = vmul.f32 %v1399, 1.442695
      %v1414 = vpow.pop %v1413
      %v1415 = vmul.f32 %v1400, 1.442695
      %v1416 = vpow.pop %v1415
      %v1417 = vmul.f32 %v1401, 1.442695
      %v1418 = vpow.pop %v1417
      %v1419 = vmul.f32 %v1402, 1.442695
      %v1420 = vpow.pop %v1419
      %v1421 = vmul.f32 %v1403, 1.442695
      %v1422 = vpow.pop %v1421
      %v1423 = vmul.f32 %v1404, 1.442695
      %v1424 = vpow.pop %v1423
      %v1425 = vadd.f32 %v1406, 1.0
      %v1426 = vadd.f32 %v1408, 1.0
      %v1427 = vadd.f32 %v1410, 1.0
      %v1428 = vadd.f32 %v1412, 1.0
      %v1429 = vadd.f32 %v1414, 1.0
      %v1430 = vadd.f32 %v1416, 1.0
      %v1431 = vadd.f32 %v1418, 1.0
      %v1432 = vadd.f32 %v1420, 1.0
      %v1433 = vadd.f32 %v1422, 1.0
      %v1434 = vadd.f32 %v1424, 1.0
      %v1435 = vrcp.pop %v1425
      %v1436 = vrcp.pop %v1426
      %v1437 = vrcp.pop %v1427
      %v1438 = vrcp.pop %v1428
      %v1439 = vrcp.pop %v1429
      %v1440 = vrcp.pop %v1430
      %v1441 = vrcp.pop %v1431
      %v1442 = vrcp.pop %v1432
      %v1443 = vrcp.pop %v1433
      %v1444 = vrcp.pop %v1434
      %v1445 = vmul.f32 %v1225, %v1435
      %v1446 = vmul.f32 %v1227, %v1436
      %v1447 = vmul.f32 %v1266, %v1437
      %v1448 = vmul.f32 %v1268, %v1438
      %v1449 = vmul.f32 %v1307, %v1439
      %v1450 = vmul.f32 %v1309, %v1440
      %v1451 = vmul.f32 %v1348, %v1441
      %v1452 = vmul.f32 %v1350, %v1442
      %v1453 = vmul.f32 %v1389, %v1443
      %v1454 = vmul.f32 %v1391, %v1444
      %v1455 = vpack.c.bf16 %v1176, %v1176
      %v1456 = vpack.c.bf16 %v1177, %v1177
      %v1457 = vpack.c.bf16 %v1178, %v1178
      %v1458 = vpack.c.bf16 %v1179, %v1179
      %v1459 = vpack.c.bf16 %v1180, %v1180
      %v1460 = vpack.c.bf16 %v1181, %v1181
      %v1461 = vpack.c.bf16 %v1182, %v1182
      %v1462 = vpack.c.bf16 %v1183, %v1183
      %v1463 = vpack.c.bf16 %v1184, %v1184
      %v1464 = vpack.c.bf16 %v1185, %v1185
      %v1465 = vld [vmem:[%s8] sm:$0xff]
      %v1466 = vld [vmem:[%s8 + $0x8] sm:$0xff]
      %v1467 = vld [vmem:[%s8 + $0x10] sm:$0xff]
      %v1468 = vld [vmem:[%s8 + $0x18] sm:$0xff]
      %v1469 = vld [vmem:[%s8 + $0x20] sm:$0xff]
      %v1470 = vld [vmem:[%s8 + $0x28] sm:$0xff]
      %v1471 = vld [vmem:[%s8 + $0x30] sm:$0xff]
      %v1472 = vld [vmem:[%s8 + $0x38] sm:$0xff]
      %v1473 = vld [vmem:[%s8 + $0x40] sm:$0xff]
      %v1474 = vld [vmem:[%s8 + $0x48] sm:$0xff]
      %v1475 = vld [vmem:[%s8 + $0x50] sm:$0xff]
      %v1476 = vld [vmem:[%s8 + $0x58] sm:$0xff]
      %v1477 = vld [vmem:[%s8 + $0x60] sm:$0xff]
      %v1478 = vld [vmem:[%s8 + $0x68] sm:$0xff]
      %v1479 = vld [vmem:[%s8 + $0x70] sm:$0xff]
      %v1480 = vld [vmem:[%s8 + $0x78] sm:$0xff]
      %v1481 = vld [vmem:[%s8 + $0x80] sm:$0xff]
      %v1482 = vld [vmem:[%s8 + $0x88] sm:$0xff]
      %v1483 = vld [vmem:[%s8 + $0x90] sm:$0xff]
      %v1484 = vld [vmem:[%s8 + $0x98] sm:$0xff]
      %v1485 = vld [vmem:[%s8 + $0xa0] sm:$0xff]
      %v1486 = vld [vmem:[%s8 + $0xa8] sm:$0xff]
      %v1487 = vld [vmem:[%s8 + $0xb0] sm:$0xff]
      %v1488 = vld [vmem:[%s8 + $0xb8] sm:$0xff]
      %v1489 = vld [vmem:[%s8 + $0xc0] sm:$0xff]
      %v1490 = vld [vmem:[%s8 + $0xc8] sm:$0xff]
      %v1491 = vld [vmem:[%s8 + $0xd0] sm:$0xff]
      %v1492 = vld [vmem:[%s8 + $0xd8] sm:$0xff]
      %v1493 = vld [vmem:[%s8 + $0xe0] sm:$0xff]
      %v1494 = vld [vmem:[%s8 + $0xe8] sm:$0xff]
      %v1495 = vld [vmem:[%s8 + $0xf0] sm:$0xff]
      %v1496 = vld [vmem:[%s8 + $0xf8] sm:$0xff]
      %v1497 = vld [vmem:[%s8 + $0x100] sm:$0xff]
      %v1498 = vld [vmem:[%s8 + $0x108] sm:$0xff]
      %v1499 = vld [vmem:[%s8 + $0x110] sm:$0xff]
      %v1500 = vld [vmem:[%s8 + $0x118] sm:$0xff]
      %v1501 = vld [vmem:[%s8 + $0x120] sm:$0xff]
      %v1502 = vld [vmem:[%s8 + $0x128] sm:$0xff]
      %v1503 = vld [vmem:[%s8 + $0x130] sm:$0xff]
      %v1504 = vld [vmem:[%s8 + $0x138] sm:$0xff]
      %v1505 = vld [vmem:[%s8 + $0x140] sm:$0xff]
      %v1506 = vld [vmem:[%s8 + $0x148] sm:$0xff]
      %v1507 = vld [vmem:[%s8 + $0x150] sm:$0xff]
      %v1508 = vld [vmem:[%s8 + $0x158] sm:$0xff]
      %v1509 = vld [vmem:[%s8 + $0x160] sm:$0xff]
      %v1510 = vld [vmem:[%s8 + $0x168] sm:$0xff]
      %v1511 = vld [vmem:[%s8 + $0x170] sm:$0xff]
      %v1512 = vld [vmem:[%s8 + $0x178] sm:$0xff]
      %v1513 = vld [vmem:[%s8 + $0x180] sm:$0xff]
      %v1514 = vld [vmem:[%s8 + $0x188] sm:$0xff]
      %v1515 = vld [vmem:[%s8 + $0x190] sm:$0xff]
      %v1516 = vld [vmem:[%s8 + $0x198] sm:$0xff]
      %v1517 = vld [vmem:[%s8 + $0x1a0] sm:$0xff]
      %v1518 = vld [vmem:[%s8 + $0x1a8] sm:$0xff]
      %v1519 = vld [vmem:[%s8 + $0x1b0] sm:$0xff]
      %v1520 = vld [vmem:[%s8 + $0x1b8] sm:$0xff]
      %v1521 = vld [vmem:[%s8 + $0x1c0] sm:$0xff]
      %v1522 = vld [vmem:[%s8 + $0x1c8] sm:$0xff]
      %v1523 = vld [vmem:[%s8 + $0x1d0] sm:$0xff]
      %v1524 = vld [vmem:[%s8 + $0x1d8] sm:$0xff]
      %v1525 = vld [vmem:[%s8 + $0x1e0] sm:$0xff]
      %v1526 = vld [vmem:[%s8 + $0x1e8] sm:$0xff]
      %v1527 = vld [vmem:[%s8 + $0x1f0] sm:$0xff]
      %v1528 = vld [vmem:[%s8 + $0x1f8] sm:$0xff]
      %v1529 = vld [vmem:[%s8 + $0x200] sm:$0xff]
      %v1530 = vld [vmem:[%s8 + $0x208] sm:$0xff]
      %v1531 = vld [vmem:[%s8 + $0x210] sm:$0xff]
      %v1532 = vld [vmem:[%s8 + $0x218] sm:$0xff]
      %v1533 = vld [vmem:[%s8 + $0x220] sm:$0xff]
      %v1534 = vld [vmem:[%s8 + $0x228] sm:$0xff]
      %v1535 = vld [vmem:[%s8 + $0x230] sm:$0xff]
      %v1536 = vld [vmem:[%s8 + $0x238] sm:$0xff]
      %v1537 = vld [vmem:[%s8 + $0x240] sm:$0xff]
      %v1538 = vld [vmem:[%s8 + $0x248] sm:$0xff]
      %v1539 = vld [vmem:[%s8 + $0x250] sm:$0xff]
      %v1540 = vld [vmem:[%s8 + $0x258] sm:$0xff]
      %v1541 = vld [vmem:[%s8 + $0x260] sm:$0xff]
      %v1542 = vld [vmem:[%s8 + $0x268] sm:$0xff]
      %v1543 = vld [vmem:[%s8 + $0x270] sm:$0xff]
      %v1544 = vld [vmem:[%s8 + $0x278] sm:$0xff]
      %v1545 = vld [vmem:[%s8 + $0x280] sm:$0xff]
      %v1546 = vld [vmem:[%s8 + $0x288] sm:$0xff]
      %v1547 = vld [vmem:[%s8 + $0x290] sm:$0xff]
      %v1548 = vld [vmem:[%s8 + $0x298] sm:$0xff]
      %v1549 = vld [vmem:[%s8 + $0x2a0] sm:$0xff]
      %v1550 = vld [vmem:[%s8 + $0x2a8] sm:$0xff]
      %v1551 = vld [vmem:[%s8 + $0x2b0] sm:$0xff]
      %v1552 = vld [vmem:[%s8 + $0x2b8] sm:$0xff]
      %v1553 = vld [vmem:[%s8 + $0x2c0] sm:$0xff]
      %v1554 = vld [vmem:[%s8 + $0x2c8] sm:$0xff]
      %v1555 = vld [vmem:[%s8 + $0x2d0] sm:$0xff]
      %v1556 = vld [vmem:[%s8 + $0x2d8] sm:$0xff]
      %v1557 = vld [vmem:[%s8 + $0x2e0] sm:$0xff]
      %v1558 = vld [vmem:[%s8 + $0x2e8] sm:$0xff]
      %v1559 = vld [vmem:[%s8 + $0x2f0] sm:$0xff]
      %v1560 = vld [vmem:[%s8 + $0x2f8] sm:$0xff]
      %v1561 = vld [vmem:[%s8 + $0x300] sm:$0xff]
      %v1562 = vld [vmem:[%s8 + $0x308] sm:$0xff]
      %v1563 = vld [vmem:[%s8 + $0x310] sm:$0xff]
      %v1564 = vld [vmem:[%s8 + $0x318] sm:$0xff]
      %v1565 = vld [vmem:[%s8 + $0x320] sm:$0xff]
      %v1566 = vld [vmem:[%s8 + $0x328] sm:$0xff]
      %v1567 = vld [vmem:[%s8 + $0x330] sm:$0xff]
      %v1568 = vld [vmem:[%s8 + $0x338] sm:$0xff]
      %v1569 = vld [vmem:[%s8 + $0x340] sm:$0xff]
      %v1570 = vld [vmem:[%s8 + $0x348] sm:$0xff]
      %v1571 = vld [vmem:[%s8 + $0x350] sm:$0xff]
      %v1572 = vld [vmem:[%s8 + $0x358] sm:$0xff]
      %v1573 = vld [vmem:[%s8 + $0x360] sm:$0xff]
      %v1574 = vld [vmem:[%s8 + $0x368] sm:$0xff]
      %v1575 = vld [vmem:[%s8 + $0x370] sm:$0xff]
      %v1576 = vld [vmem:[%s8 + $0x378] sm:$0xff]
      %v1577 = vld [vmem:[%s8 + $0x380] sm:$0xff]
      %v1578 = vld [vmem:[%s8 + $0x388] sm:$0xff]
      %v1579 = vld [vmem:[%s8 + $0x390] sm:$0xff]
      %v1580 = vld [vmem:[%s8 + $0x398] sm:$0xff]
      %v1581 = vld [vmem:[%s8 + $0x3a0] sm:$0xff]
      %v1582 = vld [vmem:[%s8 + $0x3a8] sm:$0xff]
      %v1583 = vld [vmem:[%s8 + $0x3b0] sm:$0xff]
      %v1584 = vld [vmem:[%s8 + $0x3b8] sm:$0xff]
      %v1585 = vld [vmem:[%s8 + $0x3c0] sm:$0xff]
      %v1586 = vld [vmem:[%s8 + $0x3c8] sm:$0xff]
      %v1587 = vld [vmem:[%s8 + $0x3d0] sm:$0xff]
      %v1588 = vld [vmem:[%s8 + $0x3d8] sm:$0xff]
      %v1589 = vld [vmem:[%s8 + $0x3e0] sm:$0xff]
      %v1590 = vld [vmem:[%s8 + $0x3e8] sm:$0xff]
      %v1591 = vld [vmem:[%s8 + $0x3f0] sm:$0xff]
      %v1592 = vld [vmem:[%s8 + $0x3f8] sm:$0xff]
      %v1593 = vld [vmem:[%s8 + $0x400] sm:$0xff]
      %v1594 = vld [vmem:[%s8 + $0x408] sm:$0xff]
      %v1595 = vld [vmem:[%s8 + $0x410] sm:$0xff]
      %v1596 = vld [vmem:[%s8 + $0x418] sm:$0xff]
      %v1597 = vld [vmem:[%s8 + $0x420] sm:$0xff]
      %v1598 = vld [vmem:[%s8 + $0x428] sm:$0xff]
      %v1599 = vld [vmem:[%s8 + $0x430] sm:$0xff]
      %v1600 = vld [vmem:[%s8 + $0x438] sm:$0xff]
      %v1601 = vld [vmem:[%s8 + $0x440] sm:$0xff]
      %v1602 = vld [vmem:[%s8 + $0x448] sm:$0xff]
      %v1603 = vld [vmem:[%s8 + $0x450] sm:$0xff]
      %v1604 = vld [vmem:[%s8 + $0x458] sm:$0xff]
      %v1605 = vld [vmem:[%s8 + $0x460] sm:$0xff]
      %v1606 = vld [vmem:[%s8 + $0x468] sm:$0xff]
      %v1607 = vld [vmem:[%s8 + $0x470] sm:$0xff]
      %v1608 = vld [vmem:[%s8 + $0x478] sm:$0xff]
      %v1609 = vld [vmem:[%s8 + $0x480] sm:$0xff]
      %v1610 = vld [vmem:[%s8 + $0x488] sm:$0xff]
      %v1611 = vld [vmem:[%s8 + $0x490] sm:$0xff]
      %v1612 = vld [vmem:[%s8 + $0x498] sm:$0xff]
      %v1613 = vld [vmem:[%s8 + $0x4a0] sm:$0xff]
      %v1614 = vld [vmem:[%s8 + $0x4a8] sm:$0xff]
      %v1615 = vld [vmem:[%s8 + $0x4b0] sm:$0xff]
      %v1616 = vld [vmem:[%s8 + $0x4b8] sm:$0xff]
      %v1617 = vld [vmem:[%s8 + $0x4c0] sm:$0xff]
      %v1618 = vld [vmem:[%s8 + $0x4c8] sm:$0xff]
      %v1619 = vld [vmem:[%s8 + $0x4d0] sm:$0xff]
      %v1620 = vld [vmem:[%s8 + $0x4d8] sm:$0xff]
      %v1621 = vld [vmem:[%s8 + $0x4e0] sm:$0xff]
      %v1622 = vld [vmem:[%s8 + $0x4e8] sm:$0xff]
      %v1623 = vld [vmem:[%s8 + $0x4f0] sm:$0xff]
      %v1624 = vld [vmem:[%s8 + $0x4f8] sm:$0xff]
      %v1625 = vld [vmem:[%s8 + $0x500] sm:$0xff]
      %v1626 = vld [vmem:[%s8 + $0x508] sm:$0xff]
      %v1627 = vld [vmem:[%s8 + $0x510] sm:$0xff]
      %v1628 = vld [vmem:[%s8 + $0x518] sm:$0xff]
      %v1629 = vld [vmem:[%s8 + $0x520] sm:$0xff]
      %v1630 = vld [vmem:[%s8 + $0x528] sm:$0xff]
      %v1631 = vld [vmem:[%s8 + $0x530] sm:$0xff]
      %v1632 = vld [vmem:[%s8 + $0x538] sm:$0xff]
      %v1633 = vld [vmem:[%s8 + $0x540] sm:$0xff]
      %v1634 = vld [vmem:[%s8 + $0x548] sm:$0xff]
      %v1635 = vld [vmem:[%s8 + $0x550] sm:$0xff]
      %v1636 = vld [vmem:[%s8 + $0x558] sm:$0xff]
      %v1637 = vld [vmem:[%s8 + $0x560] sm:$0xff]
      %v1638 = vld [vmem:[%s8 + $0x568] sm:$0xff]
      %v1639 = vld [vmem:[%s8 + $0x570] sm:$0xff]
      %v1640 = vld [vmem:[%s8 + $0x578] sm:$0xff]
      %v1641 = vld [vmem:[%s8 + $0x580] sm:$0xff]
      %v1642 = vld [vmem:[%s8 + $0x588] sm:$0xff]
      %v1643 = vld [vmem:[%s8 + $0x590] sm:$0xff]
      %v1644 = vld [vmem:[%s8 + $0x598] sm:$0xff]
      %v1645 = vld [vmem:[%s8 + $0x5a0] sm:$0xff]
      %v1646 = vld [vmem:[%s8 + $0x5a8] sm:$0xff]
      %v1647 = vld [vmem:[%s8 + $0x5b0] sm:$0xff]
      %v1648 = vld [vmem:[%s8 + $0x5b8] sm:$0xff]
      %v1649 = vld [vmem:[%s8 + $0x5c0] sm:$0xff]
      %v1650 = vld [vmem:[%s8 + $0x5c8] sm:$0xff]
      %v1651 = vld [vmem:[%s8 + $0x5d0] sm:$0xff]
      %v1652 = vld [vmem:[%s8 + $0x5d8] sm:$0xff]
      %v1653 = vld [vmem:[%s8 + $0x5e0] sm:$0xff]
      %v1654 = vld [vmem:[%s8 + $0x5e8] sm:$0xff]
      %v1655 = vld [vmem:[%s8 + $0x5f0] sm:$0xff]
      %v1656 = vld [vmem:[%s8 + $0x5f8] sm:$0xff]
      %v1657 = vld [vmem:[%s8 + $0x600] sm:$0xff]
      %v1658 = vld [vmem:[%s8 + $0x608] sm:$0xff]
      %v1659 = vld [vmem:[%s8 + $0x610] sm:$0xff]
      %v1660 = vld [vmem:[%s8 + $0x618] sm:$0xff]
      %v1661 = vld [vmem:[%s8 + $0x620] sm:$0xff]
      %v1662 = vld [vmem:[%s8 + $0x628] sm:$0xff]
      %v1663 = vld [vmem:[%s8 + $0x630] sm:$0xff]
      %v1664 = vld [vmem:[%s8 + $0x638] sm:$0xff]
      %v1665 = vld [vmem:[%s8 + $0x640] sm:$0xff]
      %v1666 = vld [vmem:[%s8 + $0x648] sm:$0xff]
      %v1667 = vld [vmem:[%s8 + $0x650] sm:$0xff]
      %v1668 = vld [vmem:[%s8 + $0x658] sm:$0xff]
      %v1669 = vld [vmem:[%s8 + $0x660] sm:$0xff]
      %v1670 = vld [vmem:[%s8 + $0x668] sm:$0xff]
      %v1671 = vld [vmem:[%s8 + $0x670] sm:$0xff]
      %v1672 = vld [vmem:[%s8 + $0x678] sm:$0xff]
      %v1673 = vld [vmem:[%s8 + $0x680] sm:$0xff]
      %v1674 = vld [vmem:[%s8 + $0x688] sm:$0xff]
      %v1675 = vld [vmem:[%s8 + $0x690] sm:$0xff]
      %v1676 = vld [vmem:[%s8 + $0x698] sm:$0xff]
      %v1677 = vld [vmem:[%s8 + $0x6a0] sm:$0xff]
      %v1678 = vld [vmem:[%s8 + $0x6a8] sm:$0xff]
      %v1679 = vld [vmem:[%s8 + $0x6b0] sm:$0xff]
      %v1680 = vld [vmem:[%s8 + $0x6b8] sm:$0xff]
      %v1681 = vld [vmem:[%s8 + $0x6c0] sm:$0xff]
      %v1682 = vld [vmem:[%s8 + $0x6c8] sm:$0xff]
      %v1683 = vld [vmem:[%s8 + $0x6d0] sm:$0xff]
      %v1684 = vld [vmem:[%s8 + $0x6d8] sm:$0xff]
      %v1685 = vld [vmem:[%s8 + $0x6e0] sm:$0xff]
      %v1686 = vld [vmem:[%s8 + $0x6e8] sm:$0xff]
      %v1687 = vld [vmem:[%s8 + $0x6f0] sm:$0xff]
      %v1688 = vld [vmem:[%s8 + $0x6f8] sm:$0xff]
      %v1689 = vld [vmem:[%s8 + $0x700] sm:$0xff]
      %v1690 = vld [vmem:[%s8 + $0x708] sm:$0xff]
      %v1691 = vld [vmem:[%s8 + $0x710] sm:$0xff]
      %v1692 = vld [vmem:[%s8 + $0x718] sm:$0xff]
      %v1693 = vld [vmem:[%s8 + $0x720] sm:$0xff]
      %v1694 = vld [vmem:[%s8 + $0x728] sm:$0xff]
      %v1695 = vld [vmem:[%s8 + $0x730] sm:$0xff]
      %v1696 = vld [vmem:[%s8 + $0x738] sm:$0xff]
      %v1697 = vld [vmem:[%s8 + $0x740] sm:$0xff]
      %v1698 = vld [vmem:[%s8 + $0x748] sm:$0xff]
      %v1699 = vld [vmem:[%s8 + $0x750] sm:$0xff]
      %v1700 = vld [vmem:[%s8 + $0x758] sm:$0xff]
      %v1701 = vld [vmem:[%s8 + $0x760] sm:$0xff]
      %v1702 = vld [vmem:[%s8 + $0x768] sm:$0xff]
      %v1703 = vld [vmem:[%s8 + $0x770] sm:$0xff]
      %v1704 = vld [vmem:[%s8 + $0x778] sm:$0xff]
      %v1705 = vld [vmem:[%s8 + $0x780] sm:$0xff]
      %v1706 = vld [vmem:[%s8 + $0x788] sm:$0xff]
      %v1707 = vld [vmem:[%s8 + $0x790] sm:$0xff]
      %v1708 = vld [vmem:[%s8 + $0x798] sm:$0xff]
      %v1709 = vld [vmem:[%s8 + $0x7a0] sm:$0xff]
      %v1710 = vld [vmem:[%s8 + $0x7a8] sm:$0xff]
      %v1711 = vld [vmem:[%s8 + $0x7b0] sm:$0xff]
      %v1712 = vld [vmem:[%s8 + $0x7b8] sm:$0xff]
      %v1713 = vld [vmem:[%s8 + $0x7c0] sm:$0xff]
      %v1714 = vld [vmem:[%s8 + $0x7c8] sm:$0xff]
      %v1715 = vld [vmem:[%s8 + $0x7d0] sm:$0xff]
      %v1716 = vld [vmem:[%s8 + $0x7d8] sm:$0xff]
      %v1717 = vld [vmem:[%s8 + $0x7e0] sm:$0xff]
      %v1718 = vld [vmem:[%s8 + $0x7e8] sm:$0xff]
      %v1719 = vld [vmem:[%s8 + $0x7f0] sm:$0xff]
      %v1720 = vld [vmem:[%s8 + $0x7f8] sm:$0xff]
      %v1721 = vld [vmem:[%s8 + $0x800] sm:$0xff]
      %v1722 = vld [vmem:[%s8 + $0x808] sm:$0xff]
      %v1723 = vld [vmem:[%s8 + $0x810] sm:$0xff]
      %v1724 = vld [vmem:[%s8 + $0x818] sm:$0xff]
      %v1725 = vld [vmem:[%s8 + $0x820] sm:$0xff]
      %v1726 = vld [vmem:[%s8 + $0x828] sm:$0xff]
      %v1727 = vld [vmem:[%s8 + $0x830] sm:$0xff]
      %v1728 = vld [vmem:[%s8 + $0x838] sm:$0xff]
      %v1729 = vld [vmem:[%s8 + $0x840] sm:$0xff]
      %v1730 = vld [vmem:[%s8 + $0x848] sm:$0xff]
      %v1731 = vld [vmem:[%s8 + $0x850] sm:$0xff]
      %v1732 = vld [vmem:[%s8 + $0x858] sm:$0xff]
      %v1733 = vld [vmem:[%s8 + $0x860] sm:$0xff]
      %v1734 = vld [vmem:[%s8 + $0x868] sm:$0xff]
      %v1735 = vld [vmem:[%s8 + $0x870] sm:$0xff]
      %v1736 = vld [vmem:[%s8 + $0x878] sm:$0xff]
      %v1737 = vld [vmem:[%s8 + $0x880] sm:$0xff]
      %v1738 = vld [vmem:[%s8 + $0x888] sm:$0xff]
      %v1739 = vld [vmem:[%s8 + $0x890] sm:$0xff]
      %v1740 = vld [vmem:[%s8 + $0x898] sm:$0xff]
      %v1741 = vld [vmem:[%s8 + $0x8a0] sm:$0xff]
      %v1742 = vld [vmem:[%s8 + $0x8a8] sm:$0xff]
      %v1743 = vld [vmem:[%s8 + $0x8b0] sm:$0xff]
      %v1744 = vld [vmem:[%s8 + $0x8b8] sm:$0xff]
      %v1745 = vld [vmem:[%s8 + $0x8c0] sm:$0xff]
      %v1746 = vld [vmem:[%s8 + $0x8c8] sm:$0xff]
      %v1747 = vld [vmem:[%s8 + $0x8d0] sm:$0xff]
      %v1748 = vld [vmem:[%s8 + $0x8d8] sm:$0xff]
      %v1749 = vld [vmem:[%s8 + $0x8e0] sm:$0xff]
      %v1750 = vld [vmem:[%s8 + $0x8e8] sm:$0xff]
      %v1751 = vld [vmem:[%s8 + $0x8f0] sm:$0xff]
      %v1752 = vld [vmem:[%s8 + $0x8f8] sm:$0xff]
      %v1753 = vld [vmem:[%s8 + $0x900] sm:$0xff]
      %v1754 = vld [vmem:[%s8 + $0x908] sm:$0xff]
      %v1755 = vld [vmem:[%s8 + $0x910] sm:$0xff]
      %v1756 = vld [vmem:[%s8 + $0x918] sm:$0xff]
      %v1757 = vld [vmem:[%s8 + $0x920] sm:$0xff]
      %v1758 = vld [vmem:[%s8 + $0x928] sm:$0xff]
      %v1759 = vld [vmem:[%s8 + $0x930] sm:$0xff]
      %v1760 = vld [vmem:[%s8 + $0x938] sm:$0xff]
      %v1761 = vld [vmem:[%s8 + $0x940] sm:$0xff]
      %v1762 = vld [vmem:[%s8 + $0x948] sm:$0xff]
      %v1763 = vld [vmem:[%s8 + $0x950] sm:$0xff]
      %v1764 = vld [vmem:[%s8 + $0x958] sm:$0xff]
      %v1765 = vld [vmem:[%s8 + $0x960] sm:$0xff]
      %v1766 = vld [vmem:[%s8 + $0x968] sm:$0xff]
      %v1767 = vld [vmem:[%s8 + $0x970] sm:$0xff]
      %v1768 = vld [vmem:[%s8 + $0x978] sm:$0xff]
      %v1769 = vld [vmem:[%s8 + $0x980] sm:$0xff]
      %v1770 = vld [vmem:[%s8 + $0x988] sm:$0xff]
      %v1771 = vld [vmem:[%s8 + $0x990] sm:$0xff]
      %v1772 = vld [vmem:[%s8 + $0x998] sm:$0xff]
      %v1773 = vld [vmem:[%s8 + $0x9a0] sm:$0xff]
      %v1774 = vld [vmem:[%s8 + $0x9a8] sm:$0xff]
      %v1775 = vld [vmem:[%s8 + $0x9b0] sm:$0xff]
      %v1776 = vld [vmem:[%s8 + $0x9b8] sm:$0xff]
      %v1777 = vld [vmem:[%s8 + $0x9c0] sm:$0xff]
      %v1778 = vld [vmem:[%s8 + $0x9c8] sm:$0xff]
      %v1779 = vld [vmem:[%s8 + $0x9d0] sm:$0xff]
      %v1780 = vld [vmem:[%s8 + $0x9d8] sm:$0xff]
      %v1781 = vld [vmem:[%s8 + $0x9e0] sm:$0xff]
      %v1782 = vld [vmem:[%s8 + $0x9e8] sm:$0xff]
      %v1783 = vld [vmem:[%s8 + $0x9f0] sm:$0xff]
      %v1784 = vld [vmem:[%s8 + $0x9f8] sm:$0xff]
      %v1785 = vpack.c.bf16 %v1445, %v1445
      %v1786 = vpack.c.bf16 %v1446, %v1446
      %v1787 = vpack.c.bf16 %v1447, %v1447
      %v1788 = vpack.c.bf16 %v1448, %v1448
      %v1789 = vpack.c.bf16 %v1449, %v1449
      %v1790 = vpack.c.bf16 %v1450, %v1450
      %v1791 = vpack.c.bf16 %v1451, %v1451
      %v1792 = vpack.c.bf16 %v1452, %v1452
      %v1793 = vpack.c.bf16 %v1453, %v1453
      %v1794 = vpack.c.bf16 %v1454, %v1454
      %v1795 = vld [vmem:[%s9] sm:$0xff]
      %v1796 = vld [vmem:[%s9 + $0x8] sm:$0xff]
      %v1797 = vld [vmem:[%s9 + $0x10] sm:$0xff]
      %v1798 = vld [vmem:[%s9 + $0x18] sm:$0xff]
      %v1799 = vld [vmem:[%s9 + $0x20] sm:$0xff]
      %v1800 = vld [vmem:[%s9 + $0x28] sm:$0xff]
      %v1801 = vld [vmem:[%s9 + $0x30] sm:$0xff]
      %v1802 = vld [vmem:[%s9 + $0x38] sm:$0xff]
      %v1803 = vld [vmem:[%s9 + $0x40] sm:$0xff]
      %v1804 = vld [vmem:[%s9 + $0x48] sm:$0xff]
      %v1805 = vld [vmem:[%s9 + $0x50] sm:$0xff]
      %v1806 = vld [vmem:[%s9 + $0x58] sm:$0xff]
      %v1807 = vld [vmem:[%s9 + $0x60] sm:$0xff]
      %v1808 = vld [vmem:[%s9 + $0x68] sm:$0xff]
      %v1809 = vld [vmem:[%s9 + $0x70] sm:$0xff]
      %v1810 = vld [vmem:[%s9 + $0x78] sm:$0xff]
      %v1811 = vld [vmem:[%s9 + $0x80] sm:$0xff]
      %v1812 = vld [vmem:[%s9 + $0x88] sm:$0xff]
      %v1813 = vld [vmem:[%s9 + $0x90] sm:$0xff]
      %v1814 = vld [vmem:[%s9 + $0x98] sm:$0xff]
      %v1815 = vld [vmem:[%s9 + $0xa0] sm:$0xff]
      %v1816 = vld [vmem:[%s9 + $0xa8] sm:$0xff]
      %v1817 = vld [vmem:[%s9 + $0xb0] sm:$0xff]
      %v1818 = vld [vmem:[%s9 + $0xb8] sm:$0xff]
      %v1819 = vld [vmem:[%s9 + $0xc0] sm:$0xff]
      %v1820 = vld [vmem:[%s9 + $0xc8] sm:$0xff]
      %v1821 = vld [vmem:[%s9 + $0xd0] sm:$0xff]
      %v1822 = vld [vmem:[%s9 + $0xd8] sm:$0xff]
      %v1823 = vld [vmem:[%s9 + $0xe0] sm:$0xff]
      %v1824 = vld [vmem:[%s9 + $0xe8] sm:$0xff]
      %v1825 = vld [vmem:[%s9 + $0xf0] sm:$0xff]
      %v1826 = vld [vmem:[%s9 + $0xf8] sm:$0xff]
      %v1827 = vld [vmem:[%s9 + $0x100] sm:$0xff]
      %v1828 = vld [vmem:[%s9 + $0x108] sm:$0xff]
      %v1829 = vld [vmem:[%s9 + $0x110] sm:$0xff]
      %v1830 = vld [vmem:[%s9 + $0x118] sm:$0xff]
      %v1831 = vld [vmem:[%s9 + $0x120] sm:$0xff]
      %v1832 = vld [vmem:[%s9 + $0x128] sm:$0xff]
      %v1833 = vld [vmem:[%s9 + $0x130] sm:$0xff]
      %v1834 = vld [vmem:[%s9 + $0x138] sm:$0xff]
      %v1835 = vld [vmem:[%s9 + $0x140] sm:$0xff]
      %v1836 = vld [vmem:[%s9 + $0x148] sm:$0xff]
      %v1837 = vld [vmem:[%s9 + $0x150] sm:$0xff]
      %v1838 = vld [vmem:[%s9 + $0x158] sm:$0xff]
      %v1839 = vld [vmem:[%s9 + $0x160] sm:$0xff]
      %v1840 = vld [vmem:[%s9 + $0x168] sm:$0xff]
      %v1841 = vld [vmem:[%s9 + $0x170] sm:$0xff]
      %v1842 = vld [vmem:[%s9 + $0x178] sm:$0xff]
      %v1843 = vld [vmem:[%s9 + $0x180] sm:$0xff]
      %v1844 = vld [vmem:[%s9 + $0x188] sm:$0xff]
      %v1845 = vld [vmem:[%s9 + $0x190] sm:$0xff]
      %v1846 = vld [vmem:[%s9 + $0x198] sm:$0xff]
      %v1847 = vld [vmem:[%s9 + $0x1a0] sm:$0xff]
      %v1848 = vld [vmem:[%s9 + $0x1a8] sm:$0xff]
      %v1849 = vld [vmem:[%s9 + $0x1b0] sm:$0xff]
      %v1850 = vld [vmem:[%s9 + $0x1b8] sm:$0xff]
      %v1851 = vld [vmem:[%s9 + $0x1c0] sm:$0xff]
      %v1852 = vld [vmem:[%s9 + $0x1c8] sm:$0xff]
      %v1853 = vld [vmem:[%s9 + $0x1d0] sm:$0xff]
      %v1854 = vld [vmem:[%s9 + $0x1d8] sm:$0xff]
      %v1855 = vld [vmem:[%s9 + $0x1e0] sm:$0xff]
      %v1856 = vld [vmem:[%s9 + $0x1e8] sm:$0xff]
      %v1857 = vld [vmem:[%s9 + $0x1f0] sm:$0xff]
      %v1858 = vld [vmem:[%s9 + $0x1f8] sm:$0xff]
      %v1859 = vld [vmem:[%s9 + $0x200] sm:$0xff]
      %v1860 = vld [vmem:[%s9 + $0x208] sm:$0xff]
      %v1861 = vld [vmem:[%s9 + $0x210] sm:$0xff]
      %v1862 = vld [vmem:[%s9 + $0x218] sm:$0xff]
      %v1863 = vld [vmem:[%s9 + $0x220] sm:$0xff]
      %v1864 = vld [vmem:[%s9 + $0x228] sm:$0xff]
      %v1865 = vld [vmem:[%s9 + $0x230] sm:$0xff]
      %v1866 = vld [vmem:[%s9 + $0x238] sm:$0xff]
      %v1867 = vld [vmem:[%s9 + $0x240] sm:$0xff]
      %v1868 = vld [vmem:[%s9 + $0x248] sm:$0xff]
      %v1869 = vld [vmem:[%s9 + $0x250] sm:$0xff]
      %v1870 = vld [vmem:[%s9 + $0x258] sm:$0xff]
      %v1871 = vld [vmem:[%s9 + $0x260] sm:$0xff]
      %v1872 = vld [vmem:[%s9 + $0x268] sm:$0xff]
      %v1873 = vld [vmem:[%s9 + $0x270] sm:$0xff]
      %v1874 = vld [vmem:[%s9 + $0x278] sm:$0xff]
      %v1875 = vld [vmem:[%s9 + $0x280] sm:$0xff]
      %v1876 = vld [vmem:[%s9 + $0x288] sm:$0xff]
      %v1877 = vld [vmem:[%s9 + $0x290] sm:$0xff]
      %v1878 = vld [vmem:[%s9 + $0x298] sm:$0xff]
      %v1879 = vld [vmem:[%s9 + $0x2a0] sm:$0xff]
      %v1880 = vld [vmem:[%s9 + $0x2a8] sm:$0xff]
      %v1881 = vld [vmem:[%s9 + $0x2b0] sm:$0xff]
      %v1882 = vld [vmem:[%s9 + $0x2b8] sm:$0xff]
      %v1883 = vld [vmem:[%s9 + $0x2c0] sm:$0xff]
      %v1884 = vld [vmem:[%s9 + $0x2c8] sm:$0xff]
      %v1885 = vld [vmem:[%s9 + $0x2d0] sm:$0xff]
      %v1886 = vld [vmem:[%s9 + $0x2d8] sm:$0xff]
      %v1887 = vld [vmem:[%s9 + $0x2e0] sm:$0xff]
      %v1888 = vld [vmem:[%s9 + $0x2e8] sm:$0xff]
      %v1889 = vld [vmem:[%s9 + $0x2f0] sm:$0xff]
      %v1890 = vld [vmem:[%s9 + $0x2f8] sm:$0xff]
      %v1891 = vld [vmem:[%s9 + $0x300] sm:$0xff]
      %v1892 = vld [vmem:[%s9 + $0x308] sm:$0xff]
      %v1893 = vld [vmem:[%s9 + $0x310] sm:$0xff]
      %v1894 = vld [vmem:[%s9 + $0x318] sm:$0xff]
      %v1895 = vld [vmem:[%s9 + $0x320] sm:$0xff]
      %v1896 = vld [vmem:[%s9 + $0x328] sm:$0xff]
      %v1897 = vld [vmem:[%s9 + $0x330] sm:$0xff]
      %v1898 = vld [vmem:[%s9 + $0x338] sm:$0xff]
      %v1899 = vld [vmem:[%s9 + $0x340] sm:$0xff]
      %v1900 = vld [vmem:[%s9 + $0x348] sm:$0xff]
      %v1901 = vld [vmem:[%s9 + $0x350] sm:$0xff]
      %v1902 = vld [vmem:[%s9 + $0x358] sm:$0xff]
      %v1903 = vld [vmem:[%s9 + $0x360] sm:$0xff]
      %v1904 = vld [vmem:[%s9 + $0x368] sm:$0xff]
      %v1905 = vld [vmem:[%s9 + $0x370] sm:$0xff]
      %v1906 = vld [vmem:[%s9 + $0x378] sm:$0xff]
      %v1907 = vld [vmem:[%s9 + $0x380] sm:$0xff]
      %v1908 = vld [vmem:[%s9 + $0x388] sm:$0xff]
      %v1909 = vld [vmem:[%s9 + $0x390] sm:$0xff]
      %v1910 = vld [vmem:[%s9 + $0x398] sm:$0xff]
      %v1911 = vld [vmem:[%s9 + $0x3a0] sm:$0xff]
      %v1912 = vld [vmem:[%s9 + $0x3a8] sm:$0xff]
      %v1913 = vld [vmem:[%s9 + $0x3b0] sm:$0xff]
      %v1914 = vld [vmem:[%s9 + $0x3b8] sm:$0xff]
      %v1915 = vld [vmem:[%s9 + $0x3c0] sm:$0xff]
      %v1916 = vld [vmem:[%s9 + $0x3c8] sm:$0xff]
      %v1917 = vld [vmem:[%s9 + $0x3d0] sm:$0xff]
      %v1918 = vld [vmem:[%s9 + $0x3d8] sm:$0xff]
      %v1919 = vld [vmem:[%s9 + $0x3e0] sm:$0xff]
      %v1920 = vld [vmem:[%s9 + $0x3e8] sm:$0xff]
      %v1921 = vld [vmem:[%s9 + $0x3f0] sm:$0xff]
      %v1922 = vld [vmem:[%s9 + $0x3f8] sm:$0xff]
      %v1923 = vld [vmem:[%s9 + $0x400] sm:$0xff]
      %v1924 = vld [vmem:[%s9 + $0x408] sm:$0xff]
      %v1925 = vld [vmem:[%s9 + $0x410] sm:$0xff]
      %v1926 = vld [vmem:[%s9 + $0x418] sm:$0xff]
      %v1927 = vld [vmem:[%s9 + $0x420] sm:$0xff]
      %v1928 = vld [vmem:[%s9 + $0x428] sm:$0xff]
      %v1929 = vld [vmem:[%s9 + $0x430] sm:$0xff]
      %v1930 = vld [vmem:[%s9 + $0x438] sm:$0xff]
      %v1931 = vld [vmem:[%s9 + $0x440] sm:$0xff]
      %v1932 = vld [vmem:[%s9 + $0x448] sm:$0xff]
      %v1933 = vld [vmem:[%s9 + $0x450] sm:$0xff]
      %v1934 = vld [vmem:[%s9 + $0x458] sm:$0xff]
      %v1935 = vld [vmem:[%s9 + $0x460] sm:$0xff]
      %v1936 = vld [vmem:[%s9 + $0x468] sm:$0xff]
      %v1937 = vld [vmem:[%s9 + $0x470] sm:$0xff]
      %v1938 = vld [vmem:[%s9 + $0x478] sm:$0xff]
      %v1939 = vld [vmem:[%s9 + $0x480] sm:$0xff]
      %v1940 = vld [vmem:[%s9 + $0x488] sm:$0xff]
      %v1941 = vld [vmem:[%s9 + $0x490] sm:$0xff]
      %v1942 = vld [vmem:[%s9 + $0x498] sm:$0xff]
      %v1943 = vld [vmem:[%s9 + $0x4a0] sm:$0xff]
      %v1944 = vld [vmem:[%s9 + $0x4a8] sm:$0xff]
      %v1945 = vld [vmem:[%s9 + $0x4b0] sm:$0xff]
      %v1946 = vld [vmem:[%s9 + $0x4b8] sm:$0xff]
      %v1947 = vld [vmem:[%s9 + $0x4c0] sm:$0xff]
      %v1948 = vld [vmem:[%s9 + $0x4c8] sm:$0xff]
      %v1949 = vld [vmem:[%s9 + $0x4d0] sm:$0xff]
      %v1950 = vld [vmem:[%s9 + $0x4d8] sm:$0xff]
      %v1951 = vld [vmem:[%s9 + $0x4e0] sm:$0xff]
      %v1952 = vld [vmem:[%s9 + $0x4e8] sm:$0xff]
      %v1953 = vld [vmem:[%s9 + $0x4f0] sm:$0xff]
      %v1954 = vld [vmem:[%s9 + $0x4f8] sm:$0xff]
      %v1955 = vld [vmem:[%s9 + $0x500] sm:$0xff]
      %v1956 = vld [vmem:[%s9 + $0x508] sm:$0xff]
      %v1957 = vld [vmem:[%s9 + $0x510] sm:$0xff]
      %v1958 = vld [vmem:[%s9 + $0x518] sm:$0xff]
      %v1959 = vld [vmem:[%s9 + $0x520] sm:$0xff]
      %v1960 = vld [vmem:[%s9 + $0x528] sm:$0xff]
      %v1961 = vld [vmem:[%s9 + $0x530] sm:$0xff]
      %v1962 = vld [vmem:[%s9 + $0x538] sm:$0xff]
      %v1963 = vld [vmem:[%s9 + $0x540] sm:$0xff]
      %v1964 = vld [vmem:[%s9 + $0x548] sm:$0xff]
      %v1965 = vld [vmem:[%s9 + $0x550] sm:$0xff]
      %v1966 = vld [vmem:[%s9 + $0x558] sm:$0xff]
      %v1967 = vld [vmem:[%s9 + $0x560] sm:$0xff]
      %v1968 = vld [vmem:[%s9 + $0x568] sm:$0xff]
      %v1969 = vld [vmem:[%s9 + $0x570] sm:$0xff]
      %v1970 = vld [vmem:[%s9 + $0x578] sm:$0xff]
      %v1971 = vld [vmem:[%s9 + $0x580] sm:$0xff]
      %v1972 = vld [vmem:[%s9 + $0x588] sm:$0xff]
      %v1973 = vld [vmem:[%s9 + $0x590] sm:$0xff]
      %v1974 = vld [vmem:[%s9 + $0x598] sm:$0xff]
      %v1975 = vld [vmem:[%s9 + $0x5a0] sm:$0xff]
      %v1976 = vld [vmem:[%s9 + $0x5a8] sm:$0xff]
      %v1977 = vld [vmem:[%s9 + $0x5b0] sm:$0xff]
      %v1978 = vld [vmem:[%s9 + $0x5b8] sm:$0xff]
      %v1979 = vld [vmem:[%s9 + $0x5c0] sm:$0xff]
      %v1980 = vld [vmem:[%s9 + $0x5c8] sm:$0xff]
      %v1981 = vld [vmem:[%s9 + $0x5d0] sm:$0xff]
      %v1982 = vld [vmem:[%s9 + $0x5d8] sm:$0xff]
      %v1983 = vld [vmem:[%s9 + $0x5e0] sm:$0xff]
      %v1984 = vld [vmem:[%s9 + $0x5e8] sm:$0xff]
      %v1985 = vld [vmem:[%s9 + $0x5f0] sm:$0xff]
      %v1986 = vld [vmem:[%s9 + $0x5f8] sm:$0xff]
      %v1987 = vld [vmem:[%s9 + $0x600] sm:$0xff]
      %v1988 = vld [vmem:[%s9 + $0x608] sm:$0xff]
      %v1989 = vld [vmem:[%s9 + $0x610] sm:$0xff]
      %v1990 = vld [vmem:[%s9 + $0x618] sm:$0xff]
      %v1991 = vld [vmem:[%s9 + $0x620] sm:$0xff]
      %v1992 = vld [vmem:[%s9 + $0x628] sm:$0xff]
      %v1993 = vld [vmem:[%s9 + $0x630] sm:$0xff]
      %v1994 = vld [vmem:[%s9 + $0x638] sm:$0xff]
      %v1995 = vld [vmem:[%s9 + $0x640] sm:$0xff]
      %v1996 = vld [vmem:[%s9 + $0x648] sm:$0xff]
      %v1997 = vld [vmem:[%s9 + $0x650] sm:$0xff]
      %v1998 = vld [vmem:[%s9 + $0x658] sm:$0xff]
      %v1999 = vld [vmem:[%s9 + $0x660] sm:$0xff]
      %v2000 = vld [vmem:[%s9 + $0x668] sm:$0xff]
      %v2001 = vld [vmem:[%s9 + $0x670] sm:$0xff]
      %v2002 = vld [vmem:[%s9 + $0x678] sm:$0xff]
      %v2003 = vld [vmem:[%s9 + $0x680] sm:$0xff]
      %v2004 = vld [vmem:[%s9 + $0x688] sm:$0xff]
      %v2005 = vld [vmem:[%s9 + $0x690] sm:$0xff]
      %v2006 = vld [vmem:[%s9 + $0x698] sm:$0xff]
      %v2007 = vld [vmem:[%s9 + $0x6a0] sm:$0xff]
      %v2008 = vld [vmem:[%s9 + $0x6a8] sm:$0xff]
      %v2009 = vld [vmem:[%s9 + $0x6b0] sm:$0xff]
      %v2010 = vld [vmem:[%s9 + $0x6b8] sm:$0xff]
      %v2011 = vld [vmem:[%s9 + $0x6c0] sm:$0xff]
      %v2012 = vld [vmem:[%s9 + $0x6c8] sm:$0xff]
      %v2013 = vld [vmem:[%s9 + $0x6d0] sm:$0xff]
      %v2014 = vld [vmem:[%s9 + $0x6d8] sm:$0xff]
      %v2015 = vld [vmem:[%s9 + $0x6e0] sm:$0xff]
      %v2016 = vld [vmem:[%s9 + $0x6e8] sm:$0xff]
      %v2017 = vld [vmem:[%s9 + $0x6f0] sm:$0xff]
      %v2018 = vld [vmem:[%s9 + $0x6f8] sm:$0xff]
      %v2019 = vld [vmem:[%s9 + $0x700] sm:$0xff]
      %v2020 = vld [vmem:[%s9 + $0x708] sm:$0xff]
      %v2021 = vld [vmem:[%s9 + $0x710] sm:$0xff]
      %v2022 = vld [vmem:[%s9 + $0x718] sm:$0xff]
      %v2023 = vld [vmem:[%s9 + $0x720] sm:$0xff]
      %v2024 = vld [vmem:[%s9 + $0x728] sm:$0xff]
      %v2025 = vld [vmem:[%s9 + $0x730] sm:$0xff]
      %v2026 = vld [vmem:[%s9 + $0x738] sm:$0xff]
      %v2027 = vld [vmem:[%s9 + $0x740] sm:$0xff]
      %v2028 = vld [vmem:[%s9 + $0x748] sm:$0xff]
      %v2029 = vld [vmem:[%s9 + $0x750] sm:$0xff]
      %v2030 = vld [vmem:[%s9 + $0x758] sm:$0xff]
      %v2031 = vld [vmem:[%s9 + $0x760] sm:$0xff]
      %v2032 = vld [vmem:[%s9 + $0x768] sm:$0xff]
      %v2033 = vld [vmem:[%s9 + $0x770] sm:$0xff]
      %v2034 = vld [vmem:[%s9 + $0x778] sm:$0xff]
      %v2035 = vld [vmem:[%s9 + $0x780] sm:$0xff]
      %v2036 = vld [vmem:[%s9 + $0x788] sm:$0xff]
      %v2037 = vld [vmem:[%s9 + $0x790] sm:$0xff]
      %v2038 = vld [vmem:[%s9 + $0x798] sm:$0xff]
      %v2039 = vld [vmem:[%s9 + $0x7a0] sm:$0xff]
      %v2040 = vld [vmem:[%s9 + $0x7a8] sm:$0xff]
      %v2041 = vld [vmem:[%s9 + $0x7b0] sm:$0xff]
      %v2042 = vld [vmem:[%s9 + $0x7b8] sm:$0xff]
      %v2043 = vld [vmem:[%s9 + $0x7c0] sm:$0xff]
      %v2044 = vld [vmem:[%s9 + $0x7c8] sm:$0xff]
      %v2045 = vld [vmem:[%s9 + $0x7d0] sm:$0xff]
      %v2046 = vld [vmem:[%s9 + $0x7d8] sm:$0xff]
      %v2047 = vld [vmem:[%s9 + $0x7e0] sm:$0xff]
      %v2048 = vld [vmem:[%s9 + $0x7e8] sm:$0xff]
      %v2049 = vld [vmem:[%s9 + $0x7f0] sm:$0xff]
      %v2050 = vld [vmem:[%s9 + $0x7f8] sm:$0xff]
      %v2051 = vld [vmem:[%s9 + $0x800] sm:$0xff]
      %v2052 = vld [vmem:[%s9 + $0x808] sm:$0xff]
      %v2053 = vld [vmem:[%s9 + $0x810] sm:$0xff]
      %v2054 = vld [vmem:[%s9 + $0x818] sm:$0xff]
      %v2055 = vld [vmem:[%s9 + $0x820] sm:$0xff]
      %v2056 = vld [vmem:[%s9 + $0x828] sm:$0xff]
      %v2057 = vld [vmem:[%s9 + $0x830] sm:$0xff]
      %v2058 = vld [vmem:[%s9 + $0x838] sm:$0xff]
      %v2059 = vld [vmem:[%s9 + $0x840] sm:$0xff]
      %v2060 = vld [vmem:[%s9 + $0x848] sm:$0xff]
      %v2061 = vld [vmem:[%s9 + $0x850] sm:$0xff]
      %v2062 = vld [vmem:[%s9 + $0x858] sm:$0xff]
      %v2063 = vld [vmem:[%s9 + $0x860] sm:$0xff]
      %v2064 = vld [vmem:[%s9 + $0x868] sm:$0xff]
      %v2065 = vld [vmem:[%s9 + $0x870] sm:$0xff]
      %v2066 = vld [vmem:[%s9 + $0x878] sm:$0xff]
      %v2067 = vld [vmem:[%s9 + $0x880] sm:$0xff]
      %v2068 = vld [vmem:[%s9 + $0x888] sm:$0xff]
      %v2069 = vld [vmem:[%s9 + $0x890] sm:$0xff]
      %v2070 = vld [vmem:[%s9 + $0x898] sm:$0xff]
      %v2071 = vld [vmem:[%s9 + $0x8a0] sm:$0xff]
      %v2072 = vld [vmem:[%s9 + $0x8a8] sm:$0xff]
      %v2073 = vld [vmem:[%s9 + $0x8b0] sm:$0xff]
      %v2074 = vld [vmem:[%s9 + $0x8b8] sm:$0xff]
      %v2075 = vld [vmem:[%s9 + $0x8c0] sm:$0xff]
      %v2076 = vld [vmem:[%s9 + $0x8c8] sm:$0xff]
      %v2077 = vld [vmem:[%s9 + $0x8d0] sm:$0xff]
      %v2078 = vld [vmem:[%s9 + $0x8d8] sm:$0xff]
      %v2079 = vld [vmem:[%s9 + $0x8e0] sm:$0xff]
      %v2080 = vld [vmem:[%s9 + $0x8e8] sm:$0xff]
      %v2081 = vld [vmem:[%s9 + $0x8f0] sm:$0xff]
      %v2082 = vld [vmem:[%s9 + $0x8f8] sm:$0xff]
      %v2083 = vld [vmem:[%s9 + $0x900] sm:$0xff]
      %v2084 = vld [vmem:[%s9 + $0x908] sm:$0xff]
      %v2085 = vld [vmem:[%s9 + $0x910] sm:$0xff]
      %v2086 = vld [vmem:[%s9 + $0x918] sm:$0xff]
      %v2087 = vld [vmem:[%s9 + $0x920] sm:$0xff]
      %v2088 = vld [vmem:[%s9 + $0x928] sm:$0xff]
      %v2089 = vld [vmem:[%s9 + $0x930] sm:$0xff]
      %v2090 = vld [vmem:[%s9 + $0x938] sm:$0xff]
      %v2091 = vld [vmem:[%s9 + $0x940] sm:$0xff]
      %v2092 = vld [vmem:[%s9 + $0x948] sm:$0xff]
      %v2093 = vld [vmem:[%s9 + $0x950] sm:$0xff]
      %v2094 = vld [vmem:[%s9 + $0x958] sm:$0xff]
      %v2095 = vld [vmem:[%s9 + $0x960] sm:$0xff]
      %v2096 = vld [vmem:[%s9 + $0x968] sm:$0xff]
      %v2097 = vld [vmem:[%s9 + $0x970] sm:$0xff]
      %v2098 = vld [vmem:[%s9 + $0x978] sm:$0xff]
      %v2099 = vld [vmem:[%s9 + $0x980] sm:$0xff]
      %v2100 = vld [vmem:[%s9 + $0x988] sm:$0xff]
      %v2101 = vld [vmem:[%s9 + $0x990] sm:$0xff]
      %v2102 = vld [vmem:[%s9 + $0x998] sm:$0xff]
      %v2103 = vld [vmem:[%s9 + $0x9a0] sm:$0xff]
      %v2104 = vld [vmem:[%s9 + $0x9a8] sm:$0xff]
      %v2105 = vld [vmem:[%s9 + $0x9b0] sm:$0xff]
      %v2106 = vld [vmem:[%s9 + $0x9b8] sm:$0xff]
      %v2107 = vld [vmem:[%s9 + $0x9c0] sm:$0xff]
      %v2108 = vld [vmem:[%s9 + $0x9c8] sm:$0xff]
      %v2109 = vld [vmem:[%s9 + $0x9d0] sm:$0xff]
      %v2110 = vld [vmem:[%s9 + $0x9d8] sm:$0xff]
      %v2111 = vld [vmem:[%s9 + $0x9e0] sm:$0xff]
      %v2112 = vld [vmem:[%s9 + $0x9e8] sm:$0xff]
      %v2113 = vld [vmem:[%s9 + $0x9f0] sm:$0xff]
      %v2114 = vld [vmem:[%s9 + $0x9f8] sm:$0xff]
      %v2435 = vunpack.c.l.b16 %v1795
      %v2436 = vunpack.c.h.b16 %v1795
      %v2437 = vunpack.c.l.b16 %v1796
      %v2438 = vunpack.c.h.b16 %v1796
      %v2439 = vunpack.c.l.b16 %v1797
      %v2440 = vunpack.c.h.b16 %v1797
      %v2441 = vunpack.c.l.b16 %v1798
      %v2442 = vunpack.c.h.b16 %v1798
      %v2443 = vunpack.c.l.b16 %v1799
      %v2444 = vunpack.c.h.b16 %v1799
      %v2445 = vunpack.c.l.b16 %v1800
      %v2446 = vunpack.c.h.b16 %v1800
      %v2447 = vunpack.c.l.b16 %v1801
      %v2448 = vunpack.c.h.b16 %v1801
      %v2449 = vunpack.c.l.b16 %v1802
      %v2450 = vunpack.c.h.b16 %v1802
      %v2451 = vunpack.c.l.b16 %v1803
      %v2452 = vunpack.c.h.b16 %v1803
      %v2453 = vunpack.c.l.b16 %v1804
      %v2454 = vunpack.c.h.b16 %v1804
      %v2455 = vunpack.c.l.b16 %v1805
      %v2456 = vunpack.c.h.b16 %v1805
      %v2457 = vunpack.c.l.b16 %v1806
      %v2458 = vunpack.c.h.b16 %v1806
      %v2459 = vunpack.c.l.b16 %v1807
      %v2460 = vunpack.c.h.b16 %v1807
      %v2461 = vunpack.c.l.b16 %v1808
      %v2462 = vunpack.c.h.b16 %v1808
      %v2463 = vunpack.c.l.b16 %v1809
      %v2464 = vunpack.c.h.b16 %v1809
      %v2465 = vunpack.c.l.b16 %v1810
      %v2466 = vunpack.c.h.b16 %v1810
      %v2467 = vunpack.c.l.b16 %v1811
      %v2468 = vunpack.c.h.b16 %v1811
      %v2469 = vunpack.c.l.b16 %v1812
      %v2470 = vunpack.c.h.b16 %v1812
      %v2471 = vunpack.c.l.b16 %v1813
      %v2472 = vunpack.c.h.b16 %v1813
      %v2473 = vunpack.c.l.b16 %v1814
      %v2474 = vunpack.c.h.b16 %v1814
      %v2475 = vunpack.c.l.b16 %v1815
      %v2476 = vunpack.c.h.b16 %v1815
      %v2477 = vunpack.c.l.b16 %v1816
      %v2478 = vunpack.c.h.b16 %v1816
      %v2479 = vunpack.c.l.b16 %v1817
      %v2480 = vunpack.c.h.b16 %v1817
      %v2481 = vunpack.c.l.b16 %v1818
      %v2482 = vunpack.c.h.b16 %v1818
      %v2483 = vunpack.c.l.b16 %v1819
      %v2484 = vunpack.c.h.b16 %v1819
      %v2485 = vunpack.c.l.b16 %v1820
      %v2486 = vunpack.c.h.b16 %v1820
      %v2487 = vunpack.c.l.b16 %v1821
      %v2488 = vunpack.c.h.b16 %v1821
      %v2489 = vunpack.c.l.b16 %v1822
      %v2490 = vunpack.c.h.b16 %v1822
      %v2491 = vunpack.c.l.b16 %v1823
      %v2492 = vunpack.c.h.b16 %v1823
      %v2493 = vunpack.c.l.b16 %v1824
      %v2494 = vunpack.c.h.b16 %v1824
      %v2495 = vunpack.c.l.b16 %v1825
      %v2496 = vunpack.c.h.b16 %v1825
      %v2497 = vunpack.c.l.b16 %v1826
      %v2498 = vunpack.c.h.b16 %v1826
      %v2499 = vunpack.c.l.b16 %v1827
      %v2500 = vunpack.c.h.b16 %v1827
      %v2501 = vunpack.c.l.b16 %v1828
      %v2502 = vunpack.c.h.b16 %v1828
      %v2503 = vunpack.c.l.b16 %v1829
      %v2504 = vunpack.c.h.b16 %v1829
      %v2505 = vunpack.c.l.b16 %v1830
      %v2506 = vunpack.c.h.b16 %v1830
      %v2507 = vunpack.c.l.b16 %v1831
      %v2508 = vunpack.c.h.b16 %v1831
      %v2509 = vunpack.c.l.b16 %v1832
      %v2510 = vunpack.c.h.b16 %v1832
      %v2511 = vunpack.c.l.b16 %v1833
      %v2512 = vunpack.c.h.b16 %v1833
      %v2513 = vunpack.c.l.b16 %v1834
      %v2514 = vunpack.c.h.b16 %v1834
      %v2515 = vunpack.c.l.b16 %v1835
      %v2516 = vunpack.c.h.b16 %v1835
      %v2517 = vunpack.c.l.b16 %v1836
      %v2518 = vunpack.c.h.b16 %v1836
      %v2519 = vunpack.c.l.b16 %v1837
      %v2520 = vunpack.c.h.b16 %v1837
      %v2521 = vunpack.c.l.b16 %v1838
      %v2522 = vunpack.c.h.b16 %v1838
      %v2523 = vunpack.c.l.b16 %v1839
      %v2524 = vunpack.c.h.b16 %v1839
      %v2525 = vunpack.c.l.b16 %v1840
      %v2526 = vunpack.c.h.b16 %v1840
      %v2527 = vunpack.c.l.b16 %v1841
      %v2528 = vunpack.c.h.b16 %v1841
      %v2529 = vunpack.c.l.b16 %v1842
      %v2530 = vunpack.c.h.b16 %v1842
      %v2531 = vunpack.c.l.b16 %v1843
      %v2532 = vunpack.c.h.b16 %v1843
      %v2533 = vunpack.c.l.b16 %v1844
      %v2534 = vunpack.c.h.b16 %v1844
      %v2535 = vunpack.c.l.b16 %v1845
      %v2536 = vunpack.c.h.b16 %v1845
      %v2537 = vunpack.c.l.b16 %v1846
      %v2538 = vunpack.c.h.b16 %v1846
      %v2539 = vunpack.c.l.b16 %v1847
      %v2540 = vunpack.c.h.b16 %v1847
      %v2541 = vunpack.c.l.b16 %v1848
      %v2542 = vunpack.c.h.b16 %v1848
      %v2543 = vunpack.c.l.b16 %v1849
      %v2544 = vunpack.c.h.b16 %v1849
      %v2545 = vunpack.c.l.b16 %v1850
      %v2546 = vunpack.c.h.b16 %v1850
      %v2547 = vunpack.c.l.b16 %v1851
      %v2548 = vunpack.c.h.b16 %v1851
      %v2549 = vunpack.c.l.b16 %v1852
      %v2550 = vunpack.c.h.b16 %v1852
      %v2551 = vunpack.c.l.b16 %v1853
      %v2552 = vunpack.c.h.b16 %v1853
      %v2553 = vunpack.c.l.b16 %v1854
      %v2554 = vunpack.c.h.b16 %v1854
      %v2555 = vunpack.c.l.b16 %v1855
      %v2556 = vunpack.c.h.b16 %v1855
      %v2557 = vunpack.c.l.b16 %v1856
      %v2558 = vunpack.c.h.b16 %v1856
      %v2559 = vunpack.c.l.b16 %v1857
      %v2560 = vunpack.c.h.b16 %v1857
      %v2561 = vunpack.c.l.b16 %v1858
      %v2562 = vunpack.c.h.b16 %v1858
      %v2563 = vunpack.c.l.b16 %v1859
      %v2564 = vunpack.c.h.b16 %v1859
      %v2565 = vunpack.c.l.b16 %v1860
      %v2566 = vunpack.c.h.b16 %v1860
      %v2567 = vunpack.c.l.b16 %v1861
      %v2568 = vunpack.c.h.b16 %v1861
      %v2569 = vunpack.c.l.b16 %v1862
      %v2570 = vunpack.c.h.b16 %v1862
      %v2571 = vunpack.c.l.b16 %v1863
      %v2572 = vunpack.c.h.b16 %v1863
      %v2573 = vunpack.c.l.b16 %v1864
      %v2574 = vunpack.c.h.b16 %v1864
      %v2575 = vunpack.c.l.b16 %v1865
      %v2576 = vunpack.c.h.b16 %v1865
      %v2577 = vunpack.c.l.b16 %v1866
      %v2578 = vunpack.c.h.b16 %v1866
      %v2579 = vunpack.c.l.b16 %v1867
      %v2580 = vunpack.c.h.b16 %v1867
      %v2581 = vunpack.c.l.b16 %v1868
      %v2582 = vunpack.c.h.b16 %v1868
      %v2583 = vunpack.c.l.b16 %v1869
      %v2584 = vunpack.c.h.b16 %v1869
      %v2585 = vunpack.c.l.b16 %v1870
      %v2586 = vunpack.c.h.b16 %v1870
      %v2587 = vunpack.c.l.b16 %v1871
      %v2588 = vunpack.c.h.b16 %v1871
      %v2589 = vunpack.c.l.b16 %v1872
      %v2590 = vunpack.c.h.b16 %v1872
      %v2591 = vunpack.c.l.b16 %v1873
      %v2592 = vunpack.c.h.b16 %v1873
      %v2593 = vunpack.c.l.b16 %v1874
      %v2594 = vunpack.c.h.b16 %v1874
      %v2595 = vunpack.c.l.b16 %v1875
      %v2596 = vunpack.c.h.b16 %v1875
      %v2597 = vunpack.c.l.b16 %v1876
      %v2598 = vunpack.c.h.b16 %v1876
      %v2599 = vunpack.c.l.b16 %v1877
      %v2600 = vunpack.c.h.b16 %v1877
      %v2601 = vunpack.c.l.b16 %v1878
      %v2602 = vunpack.c.h.b16 %v1878
      %v2603 = vunpack.c.l.b16 %v1879
      %v2604 = vunpack.c.h.b16 %v1879
      %v2605 = vunpack.c.l.b16 %v1880
      %v2606 = vunpack.c.h.b16 %v1880
      %v2607 = vunpack.c.l.b16 %v1881
      %v2608 = vunpack.c.h.b16 %v1881
      %v2609 = vunpack.c.l.b16 %v1882
      %v2610 = vunpack.c.h.b16 %v1882
      %v2611 = vunpack.c.l.b16 %v1883
      %v2612 = vunpack.c.h.b16 %v1883
      %v2613 = vunpack.c.l.b16 %v1884
      %v2614 = vunpack.c.h.b16 %v1884
      %v2615 = vunpack.c.l.b16 %v1885
      %v2616 = vunpack.c.h.b16 %v1885
      %v2617 = vunpack.c.l.b16 %v1886
      %v2618 = vunpack.c.h.b16 %v1886
      %v2619 = vunpack.c.l.b16 %v1887
      %v2620 = vunpack.c.h.b16 %v1887
      %v2621 = vunpack.c.l.b16 %v1888
      %v2622 = vunpack.c.h.b16 %v1888
      %v2623 = vunpack.c.l.b16 %v1889
      %v2624 = vunpack.c.h.b16 %v1889
      %v2625 = vunpack.c.l.b16 %v1890
      %v2626 = vunpack.c.h.b16 %v1890
      %v2627 = vunpack.c.l.b16 %v1891
      %v2628 = vunpack.c.h.b16 %v1891
      %v2629 = vunpack.c.l.b16 %v1892
      %v2630 = vunpack.c.h.b16 %v1892
      %v2631 = vunpack.c.l.b16 %v1893
      %v2632 = vunpack.c.h.b16 %v1893
      %v2633 = vunpack.c.l.b16 %v1894
      %v2634 = vunpack.c.h.b16 %v1894
      %v2635 = vunpack.c.l.b16 %v1895
      %v2636 = vunpack.c.h.b16 %v1895
      %v2637 = vunpack.c.l.b16 %v1896
      %v2638 = vunpack.c.h.b16 %v1896
      %v2639 = vunpack.c.l.b16 %v1897
      %v2640 = vunpack.c.h.b16 %v1897
      %v2641 = vunpack.c.l.b16 %v1898
      %v2642 = vunpack.c.h.b16 %v1898
      %v2643 = vunpack.c.l.b16 %v1899
      %v2644 = vunpack.c.h.b16 %v1899
      %v2645 = vunpack.c.l.b16 %v1900
      %v2646 = vunpack.c.h.b16 %v1900
      %v2647 = vunpack.c.l.b16 %v1901
      %v2648 = vunpack.c.h.b16 %v1901
      %v2649 = vunpack.c.l.b16 %v1902
      %v2650 = vunpack.c.h.b16 %v1902
      %v2651 = vunpack.c.l.b16 %v1903
      %v2652 = vunpack.c.h.b16 %v1903
      %v2653 = vunpack.c.l.b16 %v1904
      %v2654 = vunpack.c.h.b16 %v1904
      %v2655 = vunpack.c.l.b16 %v1905
      %v2656 = vunpack.c.h.b16 %v1905
      %v2657 = vunpack.c.l.b16 %v1906
      %v2658 = vunpack.c.h.b16 %v1906
      %v2659 = vunpack.c.l.b16 %v1907
      %v2660 = vunpack.c.h.b16 %v1907
      %v2661 = vunpack.c.l.b16 %v1908
      %v2662 = vunpack.c.h.b16 %v1908
      %v2663 = vunpack.c.l.b16 %v1909
      %v2664 = vunpack.c.h.b16 %v1909
      %v2665 = vunpack.c.l.b16 %v1910
      %v2666 = vunpack.c.h.b16 %v1910
      %v2667 = vunpack.c.l.b16 %v1911
      %v2668 = vunpack.c.h.b16 %v1911
      %v2669 = vunpack.c.l.b16 %v1912
      %v2670 = vunpack.c.h.b16 %v1912
      %v2671 = vunpack.c.l.b16 %v1913
      %v2672 = vunpack.c.h.b16 %v1913
      %v2673 = vunpack.c.l.b16 %v1914
      %v2674 = vunpack.c.h.b16 %v1914
      %v2675 = vunpack.c.l.b16 %v1915
      %v2676 = vunpack.c.h.b16 %v1915
      %v2677 = vunpack.c.l.b16 %v1916
      %v2678 = vunpack.c.h.b16 %v1916
      %v2679 = vunpack.c.l.b16 %v1917
      %v2680 = vunpack.c.h.b16 %v1917
      %v2681 = vunpack.c.l.b16 %v1918
      %v2682 = vunpack.c.h.b16 %v1918
      %v2683 = vunpack.c.l.b16 %v1919
      %v2684 = vunpack.c.h.b16 %v1919
      %v2685 = vunpack.c.l.b16 %v1920
      %v2686 = vunpack.c.h.b16 %v1920
      %v2687 = vunpack.c.l.b16 %v1921
      %v2688 = vunpack.c.h.b16 %v1921
      %v2689 = vunpack.c.l.b16 %v1922
      %v2690 = vunpack.c.h.b16 %v1922
      %v2691 = vunpack.c.l.b16 %v1923
      %v2692 = vunpack.c.h.b16 %v1923
      %v2693 = vunpack.c.l.b16 %v1924
      %v2694 = vunpack.c.h.b16 %v1924
      %v2695 = vunpack.c.l.b16 %v1925
      %v2696 = vunpack.c.h.b16 %v1925
      %v2697 = vunpack.c.l.b16 %v1926
      %v2698 = vunpack.c.h.b16 %v1926
      %v2699 = vunpack.c.l.b16 %v1927
      %v2700 = vunpack.c.h.b16 %v1927
      %v2701 = vunpack.c.l.b16 %v1928
      %v2702 = vunpack.c.h.b16 %v1928
      %v2703 = vunpack.c.l.b16 %v1929
      %v2704 = vunpack.c.h.b16 %v1929
      %v2705 = vunpack.c.l.b16 %v1930
      %v2706 = vunpack.c.h.b16 %v1930
      %v2707 = vunpack.c.l.b16 %v1931
      %v2708 = vunpack.c.h.b16 %v1931
      %v2709 = vunpack.c.l.b16 %v1932
      %v2710 = vunpack.c.h.b16 %v1932
      %v2711 = vunpack.c.l.b16 %v1933
      %v2712 = vunpack.c.h.b16 %v1933
      %v2713 = vunpack.c.l.b16 %v1934
      %v2714 = vunpack.c.h.b16 %v1934
      %v2715 = vunpack.c.l.b16 %v1935
      %v2716 = vunpack.c.h.b16 %v1935
      %v2717 = vunpack.c.l.b16 %v1936
      %v2718 = vunpack.c.h.b16 %v1936
      %v2719 = vunpack.c.l.b16 %v1937
      %v2720 = vunpack.c.h.b16 %v1937
      %v2721 = vunpack.c.l.b16 %v1938
      %v2722 = vunpack.c.h.b16 %v1938
      %v2723 = vunpack.c.l.b16 %v1939
      %v2724 = vunpack.c.h.b16 %v1939
      %v2725 = vunpack.c.l.b16 %v1940
      %v2726 = vunpack.c.h.b16 %v1940
      %v2727 = vunpack.c.l.b16 %v1941
      %v2728 = vunpack.c.h.b16 %v1941
      %v2729 = vunpack.c.l.b16 %v1942
      %v2730 = vunpack.c.h.b16 %v1942
      %v2731 = vunpack.c.l.b16 %v1943
      %v2732 = vunpack.c.h.b16 %v1943
      %v2733 = vunpack.c.l.b16 %v1944
      %v2734 = vunpack.c.h.b16 %v1944
      %v2735 = vunpack.c.l.b16 %v1945
      %v2736 = vunpack.c.h.b16 %v1945
      %v2737 = vunpack.c.l.b16 %v1946
      %v2738 = vunpack.c.h.b16 %v1946
      %v2739 = vunpack.c.l.b16 %v1947
      %v2740 = vunpack.c.h.b16 %v1947
      %v2741 = vunpack.c.l.b16 %v1948
      %v2742 = vunpack.c.h.b16 %v1948
      %v2743 = vunpack.c.l.b16 %v1949
      %v2744 = vunpack.c.h.b16 %v1949
      %v2745 = vunpack.c.l.b16 %v1950
      %v2746 = vunpack.c.h.b16 %v1950
      %v2747 = vunpack.c.l.b16 %v1951
      %v2748 = vunpack.c.h.b16 %v1951
      %v2749 = vunpack.c.l.b16 %v1952
      %v2750 = vunpack.c.h.b16 %v1952
      %v2751 = vunpack.c.l.b16 %v1953
      %v2752 = vunpack.c.h.b16 %v1953
      %v2753 = vunpack.c.l.b16 %v1954
      %v2754 = vunpack.c.h.b16 %v1954
      %v2755 = vunpack.c.l.b16 %v1955
      %v2756 = vunpack.c.h.b16 %v1955
      %v2757 = vunpack.c.l.b16 %v1956
      %v2758 = vunpack.c.h.b16 %v1956
      %v2759 = vunpack.c.l.b16 %v1957
      %v2760 = vunpack.c.h.b16 %v1957
      %v2761 = vunpack.c.l.b16 %v1958
      %v2762 = vunpack.c.h.b16 %v1958
      %v2763 = vunpack.c.l.b16 %v1959
      %v2764 = vunpack.c.h.b16 %v1959
      %v2765 = vunpack.c.l.b16 %v1960
      %v2766 = vunpack.c.h.b16 %v1960
      %v2767 = vunpack.c.l.b16 %v1961
      %v2768 = vunpack.c.h.b16 %v1961
      %v2769 = vunpack.c.l.b16 %v1962
      %v2770 = vunpack.c.h.b16 %v1962
      %v2771 = vunpack.c.l.b16 %v1963
      %v2772 = vunpack.c.h.b16 %v1963
      %v2773 = vunpack.c.l.b16 %v1964
      %v2774 = vunpack.c.h.b16 %v1964
      %v2775 = vunpack.c.l.b16 %v1965
      %v2776 = vunpack.c.h.b16 %v1965
      %v2777 = vunpack.c.l.b16 %v1966
      %v2778 = vunpack.c.h.b16 %v1966
      %v2779 = vunpack.c.l.b16 %v1967
      %v2780 = vunpack.c.h.b16 %v1967
      %v2781 = vunpack.c.l.b16 %v1968
      %v2782 = vunpack.c.h.b16 %v1968
      %v2783 = vunpack.c.l.b16 %v1969
      %v2784 = vunpack.c.h.b16 %v1969
      %v2785 = vunpack.c.l.b16 %v1970
      %v2786 = vunpack.c.h.b16 %v1970
      %v2787 = vunpack.c.l.b16 %v1971
      %v2788 = vunpack.c.h.b16 %v1971
      %v2789 = vunpack.c.l.b16 %v1972
      %v2790 = vunpack.c.h.b16 %v1972
      %v2791 = vunpack.c.l.b16 %v1973
      %v2792 = vunpack.c.h.b16 %v1973
      %v2793 = vunpack.c.l.b16 %v1974
      %v2794 = vunpack.c.h.b16 %v1974
      %v2795 = vunpack.c.l.b16 %v1975
      %v2796 = vunpack.c.h.b16 %v1975
      %v2797 = vunpack.c.l.b16 %v1976
      %v2798 = vunpack.c.h.b16 %v1976
      %v2799 = vunpack.c.l.b16 %v1977
      %v2800 = vunpack.c.h.b16 %v1977
      %v2801 = vunpack.c.l.b16 %v1978
      %v2802 = vunpack.c.h.b16 %v1978
      %v2803 = vunpack.c.l.b16 %v1979
      %v2804 = vunpack.c.h.b16 %v1979
      %v2805 = vunpack.c.l.b16 %v1980
      %v2806 = vunpack.c.h.b16 %v1980
      %v2807 = vunpack.c.l.b16 %v1981
      %v2808 = vunpack.c.h.b16 %v1981
      %v2809 = vunpack.c.l.b16 %v1982
      %v2810 = vunpack.c.h.b16 %v1982
      %v2811 = vunpack.c.l.b16 %v1983
      %v2812 = vunpack.c.h.b16 %v1983
      %v2813 = vunpack.c.l.b16 %v1984
      %v2814 = vunpack.c.h.b16 %v1984
      %v2815 = vunpack.c.l.b16 %v1985
      %v2816 = vunpack.c.h.b16 %v1985
      %v2817 = vunpack.c.l.b16 %v1986
      %v2818 = vunpack.c.h.b16 %v1986
      %v2819 = vunpack.c.l.b16 %v1987
      %v2820 = vunpack.c.h.b16 %v1987
      %v2821 = vunpack.c.l.b16 %v1988
      %v2822 = vunpack.c.h.b16 %v1988
      %v2823 = vunpack.c.l.b16 %v1989
      %v2824 = vunpack.c.h.b16 %v1989
      %v2825 = vunpack.c.l.b16 %v1990
      %v2826 = vunpack.c.h.b16 %v1990
      %v2827 = vunpack.c.l.b16 %v1991
      %v2828 = vunpack.c.h.b16 %v1991
      %v2829 = vunpack.c.l.b16 %v1992
      %v2830 = vunpack.c.h.b16 %v1992
      %v2831 = vunpack.c.l.b16 %v1993
      %v2832 = vunpack.c.h.b16 %v1993
      %v2833 = vunpack.c.l.b16 %v1994
      %v2834 = vunpack.c.h.b16 %v1994
      %v2835 = vunpack.c.l.b16 %v1995
      %v2836 = vunpack.c.h.b16 %v1995
      %v2837 = vunpack.c.l.b16 %v1996
      %v2838 = vunpack.c.h.b16 %v1996
      %v2839 = vunpack.c.l.b16 %v1997
      %v2840 = vunpack.c.h.b16 %v1997
      %v2841 = vunpack.c.l.b16 %v1998
      %v2842 = vunpack.c.h.b16 %v1998
      %v2843 = vunpack.c.l.b16 %v1999
      %v2844 = vunpack.c.h.b16 %v1999
      %v2845 = vunpack.c.l.b16 %v2000
      %v2846 = vunpack.c.h.b16 %v2000
      %v2847 = vunpack.c.l.b16 %v2001
      %v2848 = vunpack.c.h.b16 %v2001
      %v2849 = vunpack.c.l.b16 %v2002
      %v2850 = vunpack.c.h.b16 %v2002
      %v2851 = vunpack.c.l.b16 %v2003
      %v2852 = vunpack.c.h.b16 %v2003
      %v2853 = vunpack.c.l.b16 %v2004
      %v2854 = vunpack.c.h.b16 %v2004
      %v2855 = vunpack.c.l.b16 %v2005
      %v2856 = vunpack.c.h.b16 %v2005
      %v2857 = vunpack.c.l.b16 %v2006
      %v2858 = vunpack.c.h.b16 %v2006
      %v2859 = vunpack.c.l.b16 %v2007
      %v2860 = vunpack.c.h.b16 %v2007
      %v2861 = vunpack.c.l.b16 %v2008
      %v2862 = vunpack.c.h.b16 %v2008
      %v2863 = vunpack.c.l.b16 %v2009
      %v2864 = vunpack.c.h.b16 %v2009
      %v2865 = vunpack.c.l.b16 %v2010
      %v2866 = vunpack.c.h.b16 %v2010
      %v2867 = vunpack.c.l.b16 %v2011
      %v2868 = vunpack.c.h.b16 %v2011
      %v2869 = vunpack.c.l.b16 %v2012
      %v2870 = vunpack.c.h.b16 %v2012
      %v2871 = vunpack.c.l.b16 %v2013
      %v2872 = vunpack.c.h.b16 %v2013
      %v2873 = vunpack.c.l.b16 %v2014
      %v2874 = vunpack.c.h.b16 %v2014
      %v2875 = vunpack.c.l.b16 %v2015
      %v2876 = vunpack.c.h.b16 %v2015
      %v2877 = vunpack.c.l.b16 %v2016
      %v2878 = vunpack.c.h.b16 %v2016
      %v2879 = vunpack.c.l.b16 %v2017
      %v2880 = vunpack.c.h.b16 %v2017
      %v2881 = vunpack.c.l.b16 %v2018
      %v2882 = vunpack.c.h.b16 %v2018
      %v2883 = vunpack.c.l.b16 %v2019
      %v2884 = vunpack.c.h.b16 %v2019
      %v2885 = vunpack.c.l.b16 %v2020
      %v2886 = vunpack.c.h.b16 %v2020
      %v2887 = vunpack.c.l.b16 %v2021
      %v2888 = vunpack.c.h.b16 %v2021
      %v2889 = vunpack.c.l.b16 %v2022
      %v2890 = vunpack.c.h.b16 %v2022
      %v2891 = vunpack.c.l.b16 %v2023
      %v2892 = vunpack.c.h.b16 %v2023
      %v2893 = vunpack.c.l.b16 %v2024
      %v2894 = vunpack.c.h.b16 %v2024
      %v2895 = vunpack.c.l.b16 %v2025
      %v2896 = vunpack.c.h.b16 %v2025
      %v2897 = vunpack.c.l.b16 %v2026
      %v2898 = vunpack.c.h.b16 %v2026
      %v2899 = vunpack.c.l.b16 %v2027
      %v2900 = vunpack.c.h.b16 %v2027
      %v2901 = vunpack.c.l.b16 %v2028
      %v2902 = vunpack.c.h.b16 %v2028
      %v2903 = vunpack.c.l.b16 %v2029
      %v2904 = vunpack.c.h.b16 %v2029
      %v2905 = vunpack.c.l.b16 %v2030
      %v2906 = vunpack.c.h.b16 %v2030
      %v2907 = vunpack.c.l.b16 %v2031
      %v2908 = vunpack.c.h.b16 %v2031
      %v2909 = vunpack.c.l.b16 %v2032
      %v2910 = vunpack.c.h.b16 %v2032
      %v2911 = vunpack.c.l.b16 %v2033
      %v2912 = vunpack.c.h.b16 %v2033
      %v2913 = vunpack.c.l.b16 %v2034
      %v2914 = vunpack.c.h.b16 %v2034
      %v2915 = vunpack.c.l.b16 %v2035
      %v2916 = vunpack.c.h.b16 %v2035
      %v2917 = vunpack.c.l.b16 %v2036
      %v2918 = vunpack.c.h.b16 %v2036
      %v2919 = vunpack.c.l.b16 %v2037
      %v2920 = vunpack.c.h.b16 %v2037
      %v2921 = vunpack.c.l.b16 %v2038
      %v2922 = vunpack.c.h.b16 %v2038
      %v2923 = vunpack.c.l.b16 %v2039
      %v2924 = vunpack.c.h.b16 %v2039
      %v2925 = vunpack.c.l.b16 %v2040
      %v2926 = vunpack.c.h.b16 %v2040
      %v2927 = vunpack.c.l.b16 %v2041
      %v2928 = vunpack.c.h.b16 %v2041
      %v2929 = vunpack.c.l.b16 %v2042
      %v2930 = vunpack.c.h.b16 %v2042
      %v2931 = vunpack.c.l.b16 %v2043
      %v2932 = vunpack.c.h.b16 %v2043
      %v2933 = vunpack.c.l.b16 %v2044
      %v2934 = vunpack.c.h.b16 %v2044
      %v2935 = vunpack.c.l.b16 %v2045
      %v2936 = vunpack.c.h.b16 %v2045
      %v2937 = vunpack.c.l.b16 %v2046
      %v2938 = vunpack.c.h.b16 %v2046
      %v2939 = vunpack.c.l.b16 %v2047
      %v2940 = vunpack.c.h.b16 %v2047
      %v2941 = vunpack.c.l.b16 %v2048
      %v2942 = vunpack.c.h.b16 %v2048
      %v2943 = vunpack.c.l.b16 %v2049
      %v2944 = vunpack.c.h.b16 %v2049
      %v2945 = vunpack.c.l.b16 %v2050
      %v2946 = vunpack.c.h.b16 %v2050
      %v2947 = vunpack.c.l.b16 %v2051
      %v2948 = vunpack.c.h.b16 %v2051
      %v2949 = vunpack.c.l.b16 %v2052
      %v2950 = vunpack.c.h.b16 %v2052
      %v2951 = vunpack.c.l.b16 %v2053
      %v2952 = vunpack.c.h.b16 %v2053
      %v2953 = vunpack.c.l.b16 %v2054
      %v2954 = vunpack.c.h.b16 %v2054
      %v2955 = vunpack.c.l.b16 %v2055
      %v2956 = vunpack.c.h.b16 %v2055
      %v2957 = vunpack.c.l.b16 %v2056
      %v2958 = vunpack.c.h.b16 %v2056
      %v2959 = vunpack.c.l.b16 %v2057
      %v2960 = vunpack.c.h.b16 %v2057
      %v2961 = vunpack.c.l.b16 %v2058
      %v2962 = vunpack.c.h.b16 %v2058
      %v2963 = vunpack.c.l.b16 %v2059
      %v2964 = vunpack.c.h.b16 %v2059
      %v2965 = vunpack.c.l.b16 %v2060
      %v2966 = vunpack.c.h.b16 %v2060
      %v2967 = vunpack.c.l.b16 %v2061
      %v2968 = vunpack.c.h.b16 %v2061
      %v2969 = vunpack.c.l.b16 %v2062
      %v2970 = vunpack.c.h.b16 %v2062
      %v2971 = vunpack.c.l.b16 %v2063
      %v2972 = vunpack.c.h.b16 %v2063
      %v2973 = vunpack.c.l.b16 %v2064
      %v2974 = vunpack.c.h.b16 %v2064
      %v2975 = vunpack.c.l.b16 %v2065
      %v2976 = vunpack.c.h.b16 %v2065
      %v2977 = vunpack.c.l.b16 %v2066
      %v2978 = vunpack.c.h.b16 %v2066
      %v2979 = vunpack.c.l.b16 %v2067
      %v2980 = vunpack.c.h.b16 %v2067
      %v2981 = vunpack.c.l.b16 %v2068
      %v2982 = vunpack.c.h.b16 %v2068
      %v2983 = vunpack.c.l.b16 %v2069
      %v2984 = vunpack.c.h.b16 %v2069
      %v2985 = vunpack.c.l.b16 %v2070
      %v2986 = vunpack.c.h.b16 %v2070
      %v2987 = vunpack.c.l.b16 %v2071
      %v2988 = vunpack.c.h.b16 %v2071
      %v2989 = vunpack.c.l.b16 %v2072
      %v2990 = vunpack.c.h.b16 %v2072
      %v2991 = vunpack.c.l.b16 %v2073
      %v2992 = vunpack.c.h.b16 %v2073
      %v2993 = vunpack.c.l.b16 %v2074
      %v2994 = vunpack.c.h.b16 %v2074
      %v2995 = vunpack.c.l.b16 %v2075
      %v2996 = vunpack.c.h.b16 %v2075
      %v2997 = vunpack.c.l.b16 %v2076
      %v2998 = vunpack.c.h.b16 %v2076
      %v2999 = vunpack.c.l.b16 %v2077
      %v3000 = vunpack.c.h.b16 %v2077
      %v3001 = vunpack.c.l.b16 %v2078
      %v3002 = vunpack.c.h.b16 %v2078
      %v3003 = vunpack.c.l.b16 %v2079
      %v3004 = vunpack.c.h.b16 %v2079
      %v3005 = vunpack.c.l.b16 %v2080
      %v3006 = vunpack.c.h.b16 %v2080
      %v3007 = vunpack.c.l.b16 %v2081
      %v3008 = vunpack.c.h.b16 %v2081
      %v3009 = vunpack.c.l.b16 %v2082
      %v3010 = vunpack.c.h.b16 %v2082
      %v3011 = vunpack.c.l.b16 %v2083
      %v3012 = vunpack.c.h.b16 %v2083
      %v3013 = vunpack.c.l.b16 %v2084
      %v3014 = vunpack.c.h.b16 %v2084
      %v3015 = vunpack.c.l.b16 %v2085
      %v3016 = vunpack.c.h.b16 %v2085
      %v3017 = vunpack.c.l.b16 %v2086
      %v3018 = vunpack.c.h.b16 %v2086
      %v3019 = vunpack.c.l.b16 %v2087
      %v3020 = vunpack.c.h.b16 %v2087
      %v3021 = vunpack.c.l.b16 %v2088
      %v3022 = vunpack.c.h.b16 %v2088
      %v3023 = vunpack.c.l.b16 %v2089
      %v3024 = vunpack.c.h.b16 %v2089
      %v3025 = vunpack.c.l.b16 %v2090
      %v3026 = vunpack.c.h.b16 %v2090
      %v3027 = vunpack.c.l.b16 %v2091
      %v3028 = vunpack.c.h.b16 %v2091
      %v3029 = vunpack.c.l.b16 %v2092
      %v3030 = vunpack.c.h.b16 %v2092
      %v3031 = vunpack.c.l.b16 %v2093
      %v3032 = vunpack.c.h.b16 %v2093
      %v3033 = vunpack.c.l.b16 %v2094
      %v3034 = vunpack.c.h.b16 %v2094
      %v3035 = vunpack.c.l.b16 %v2095
      %v3036 = vunpack.c.h.b16 %v2095
      %v3037 = vunpack.c.l.b16 %v2096
      %v3038 = vunpack.c.h.b16 %v2096
      %v3039 = vunpack.c.l.b16 %v2097
      %v3040 = vunpack.c.h.b16 %v2097
      %v3041 = vunpack.c.l.b16 %v2098
      %v3042 = vunpack.c.h.b16 %v2098
      %v3043 = vunpack.c.l.b16 %v2099
      %v3044 = vunpack.c.h.b16 %v2099
      %v3045 = vunpack.c.l.b16 %v2100
      %v3046 = vunpack.c.h.b16 %v2100
      %v3047 = vunpack.c.l.b16 %v2101
      %v3048 = vunpack.c.h.b16 %v2101
      %v3049 = vunpack.c.l.b16 %v2102
      %v3050 = vunpack.c.h.b16 %v2102
      %v3051 = vunpack.c.l.b16 %v2103
      %v3052 = vunpack.c.h.b16 %v2103
      %v3053 = vunpack.c.l.b16 %v2104
      %v3054 = vunpack.c.h.b16 %v2104
      %v3055 = vunpack.c.l.b16 %v2105
      %v3056 = vunpack.c.h.b16 %v2105
      %v3057 = vunpack.c.l.b16 %v2106
      %v3058 = vunpack.c.h.b16 %v2106
      %v3059 = vunpack.c.l.b16 %v2107
      %v3060 = vunpack.c.h.b16 %v2107
      %v3061 = vunpack.c.l.b16 %v2108
      %v3062 = vunpack.c.h.b16 %v2108
      %v3063 = vunpack.c.l.b16 %v2109
      %v3064 = vunpack.c.h.b16 %v2109
      %v3065 = vunpack.c.l.b16 %v2110
      %v3066 = vunpack.c.h.b16 %v2110
      %v3067 = vunpack.c.l.b16 %v2111
      %v3068 = vunpack.c.h.b16 %v2111
      %v3069 = vunpack.c.l.b16 %v2112
      %v3070 = vunpack.c.h.b16 %v2112
      %v3071 = vunpack.c.l.b16 %v2113
      %v3072 = vunpack.c.h.b16 %v2113
      %v3073 = vunpack.c.l.b16 %v2114
      %v3074 = vunpack.c.h.b16 %v2114
      %v3075 = vpack.c.b16 %v2439, %v2435
      %v3076 = vpack.c.b16 %v2440, %v2436
      %v3077 = vpack.c.b16 %v2441, %v2437
      %v3078 = vpack.c.b16 %v2442, %v2438
      %v3079 = vpack.c.b16 %v2447, %v2443
      %v3080 = vpack.c.b16 %v2448, %v2444
      %v3081 = vpack.c.b16 %v2449, %v2445
      %v3082 = vpack.c.b16 %v2450, %v2446
      %v3083 = vpack.c.b16 %v2455, %v2451
      %v3084 = vpack.c.b16 %v2456, %v2452
      %v3085 = vpack.c.b16 %v2457, %v2453
      %v3086 = vpack.c.b16 %v2458, %v2454
      %v3087 = vpack.c.b16 %v2463, %v2459
      %v3088 = vpack.c.b16 %v2464, %v2460
      %v3089 = vpack.c.b16 %v2465, %v2461
      %v3090 = vpack.c.b16 %v2466, %v2462
      %v3091 = vpack.c.b16 %v2471, %v2467
      %v3092 = vpack.c.b16 %v2472, %v2468
      %v3093 = vpack.c.b16 %v2473, %v2469
      %v3094 = vpack.c.b16 %v2474, %v2470
      %v3095 = vpack.c.b16 %v2479, %v2475
      %v3096 = vpack.c.b16 %v2480, %v2476
      %v3097 = vpack.c.b16 %v2481, %v2477
      %v3098 = vpack.c.b16 %v2482, %v2478
      %v3099 = vpack.c.b16 %v2487, %v2483
      %v3100 = vpack.c.b16 %v2488, %v2484
      %v3101 = vpack.c.b16 %v2489, %v2485
      %v3102 = vpack.c.b16 %v2490, %v2486
      %v3103 = vpack.c.b16 %v2495, %v2491
      %v3104 = vpack.c.b16 %v2496, %v2492
      %v3105 = vpack.c.b16 %v2497, %v2493
      %v3106 = vpack.c.b16 %v2498, %v2494
      %v3107 = vpack.c.b16 %v2503, %v2499
      %v3108 = vpack.c.b16 %v2504, %v2500
      %v3109 = vpack.c.b16 %v2505, %v2501
      %v3110 = vpack.c.b16 %v2506, %v2502
      %v3111 = vpack.c.b16 %v2511, %v2507
      %v3112 = vpack.c.b16 %v2512, %v2508
      %v3113 = vpack.c.b16 %v2513, %v2509
      %v3114 = vpack.c.b16 %v2514, %v2510
      %v3115 = vpack.c.b16 %v2519, %v2515
      %v3116 = vpack.c.b16 %v2520, %v2516
      %v3117 = vpack.c.b16 %v2521, %v2517
      %v3118 = vpack.c.b16 %v2522, %v2518
      %v3119 = vpack.c.b16 %v2527, %v2523
      %v3120 = vpack.c.b16 %v2528, %v2524
      %v3121 = vpack.c.b16 %v2529, %v2525
      %v3122 = vpack.c.b16 %v2530, %v2526
      %v3123 = vpack.c.b16 %v2535, %v2531
      %v3124 = vpack.c.b16 %v2536, %v2532
      %v3125 = vpack.c.b16 %v2537, %v2533
      %v3126 = vpack.c.b16 %v2538, %v2534
      %v3127 = vpack.c.b16 %v2543, %v2539
      %v3128 = vpack.c.b16 %v2544, %v2540
      %v3129 = vpack.c.b16 %v2545, %v2541
      %v3130 = vpack.c.b16 %v2546, %v2542
      %v3131 = vpack.c.b16 %v2551, %v2547
      %v3132 = vpack.c.b16 %v2552, %v2548
      %v3133 = vpack.c.b16 %v2553, %v2549
      %v3134 = vpack.c.b16 %v2554, %v2550
      %v3135 = vpack.c.b16 %v2559, %v2555
      %v3136 = vpack.c.b16 %v2560, %v2556
      %v3137 = vpack.c.b16 %v2561, %v2557
      %v3138 = vpack.c.b16 %v2562, %v2558
      %v3139 = vpack.c.b16 %v2567, %v2563
      %v3140 = vpack.c.b16 %v2568, %v2564
      %v3141 = vpack.c.b16 %v2569, %v2565
      %v3142 = vpack.c.b16 %v2570, %v2566
      %v3143 = vpack.c.b16 %v2575, %v2571
      %v3144 = vpack.c.b16 %v2576, %v2572
      %v3145 = vpack.c.b16 %v2577, %v2573
      %v3146 = vpack.c.b16 %v2578, %v2574
      %v3147 = vpack.c.b16 %v2583, %v2579
      %v3148 = vpack.c.b16 %v2584, %v2580
      %v3149 = vpack.c.b16 %v2585, %v2581
      %v3150 = vpack.c.b16 %v2586, %v2582
      %v3151 = vpack.c.b16 %v2591, %v2587
      %v3152 = vpack.c.b16 %v2592, %v2588
      %v3153 = vpack.c.b16 %v2593, %v2589
      %v3154 = vpack.c.b16 %v2594, %v2590
      %v3155 = vpack.c.b16 %v2599, %v2595
      %v3156 = vpack.c.b16 %v2600, %v2596
      %v3157 = vpack.c.b16 %v2601, %v2597
      %v3158 = vpack.c.b16 %v2602, %v2598
      %v3159 = vpack.c.b16 %v2607, %v2603
      %v3160 = vpack.c.b16 %v2608, %v2604
      %v3161 = vpack.c.b16 %v2609, %v2605
      %v3162 = vpack.c.b16 %v2610, %v2606
      %v3163 = vpack.c.b16 %v2615, %v2611
      %v3164 = vpack.c.b16 %v2616, %v2612
      %v3165 = vpack.c.b16 %v2617, %v2613
      %v3166 = vpack.c.b16 %v2618, %v2614
      %v3167 = vpack.c.b16 %v2623, %v2619
      %v3168 = vpack.c.b16 %v2624, %v2620
      %v3169 = vpack.c.b16 %v2625, %v2621
      %v3170 = vpack.c.b16 %v2626, %v2622
      %v3171 = vpack.c.b16 %v2631, %v2627
      %v3172 = vpack.c.b16 %v2632, %v2628
      %v3173 = vpack.c.b16 %v2633, %v2629
      %v3174 = vpack.c.b16 %v2634, %v2630
      %v3175 = vpack.c.b16 %v2639, %v2635
      %v3176 = vpack.c.b16 %v2640, %v2636
      %v3177 = vpack.c.b16 %v2641, %v2637
      %v3178 = vpack.c.b16 %v2642, %v2638
      %v3179 = vpack.c.b16 %v2647, %v2643
      %v3180 = vpack.c.b16 %v2648, %v2644
      %v3181 = vpack.c.b16 %v2649, %v2645
      %v3182 = vpack.c.b16 %v2650, %v2646
      %v3183 = vpack.c.b16 %v2655, %v2651
      %v3184 = vpack.c.b16 %v2656, %v2652
      %v3185 = vpack.c.b16 %v2657, %v2653
      %v3186 = vpack.c.b16 %v2658, %v2654
      %v3187 = vpack.c.b16 %v2663, %v2659
      %v3188 = vpack.c.b16 %v2664, %v2660
      %v3189 = vpack.c.b16 %v2665, %v2661
      %v3190 = vpack.c.b16 %v2666, %v2662
      %v3191 = vpack.c.b16 %v2671, %v2667
      %v3192 = vpack.c.b16 %v2672, %v2668
      %v3193 = vpack.c.b16 %v2673, %v2669
      %v3194 = vpack.c.b16 %v2674, %v2670
      %v3195 = vpack.c.b16 %v2679, %v2675
      %v3196 = vpack.c.b16 %v2680, %v2676
      %v3197 = vpack.c.b16 %v2681, %v2677
      %v3198 = vpack.c.b16 %v2682, %v2678
      %v3199 = vpack.c.b16 %v2687, %v2683
      %v3200 = vpack.c.b16 %v2688, %v2684
      %v3201 = vpack.c.b16 %v2689, %v2685
      %v3202 = vpack.c.b16 %v2690, %v2686
      %v3203 = vpack.c.b16 %v2695, %v2691
      %v3204 = vpack.c.b16 %v2696, %v2692
      %v3205 = vpack.c.b16 %v2697, %v2693
      %v3206 = vpack.c.b16 %v2698, %v2694
      %v3207 = vpack.c.b16 %v2703, %v2699
      %v3208 = vpack.c.b16 %v2704, %v2700
      %v3209 = vpack.c.b16 %v2705, %v2701
      %v3210 = vpack.c.b16 %v2706, %v2702
      %v3211 = vpack.c.b16 %v2711, %v2707
      %v3212 = vpack.c.b16 %v2712, %v2708
      %v3213 = vpack.c.b16 %v2713, %v2709
      %v3214 = vpack.c.b16 %v2714, %v2710
      %v3215 = vpack.c.b16 %v2719, %v2715
      %v3216 = vpack.c.b16 %v2720, %v2716
      %v3217 = vpack.c.b16 %v2721, %v2717
      %v3218 = vpack.c.b16 %v2722, %v2718
      %v3219 = vpack.c.b16 %v2727, %v2723
      %v3220 = vpack.c.b16 %v2728, %v2724
      %v3221 = vpack.c.b16 %v2729, %v2725
      %v3222 = vpack.c.b16 %v2730, %v2726
      %v3223 = vpack.c.b16 %v2735, %v2731
      %v3224 = vpack.c.b16 %v2736, %v2732
      %v3225 = vpack.c.b16 %v2737, %v2733
      %v3226 = vpack.c.b16 %v2738, %v2734
      %v3227 = vpack.c.b16 %v2743, %v2739
      %v3228 = vpack.c.b16 %v2744, %v2740
      %v3229 = vpack.c.b16 %v2745, %v2741
      %v3230 = vpack.c.b16 %v2746, %v2742
      %v3231 = vpack.c.b16 %v2751, %v2747
      %v3232 = vpack.c.b16 %v2752, %v2748
      %v3233 = vpack.c.b16 %v2753, %v2749
      %v3234 = vpack.c.b16 %v2754, %v2750
      %v3235 = vpack.c.b16 %v2759, %v2755
      %v3236 = vpack.c.b16 %v2760, %v2756
      %v3237 = vpack.c.b16 %v2761, %v2757
      %v3238 = vpack.c.b16 %v2762, %v2758
      %v3239 = vpack.c.b16 %v2767, %v2763
      %v3240 = vpack.c.b16 %v2768, %v2764
      %v3241 = vpack.c.b16 %v2769, %v2765
      %v3242 = vpack.c.b16 %v2770, %v2766
      %v3243 = vpack.c.b16 %v2775, %v2771
      %v3244 = vpack.c.b16 %v2776, %v2772
      %v3245 = vpack.c.b16 %v2777, %v2773
      %v3246 = vpack.c.b16 %v2778, %v2774
      %v3247 = vpack.c.b16 %v2783, %v2779
      %v3248 = vpack.c.b16 %v2784, %v2780
      %v3249 = vpack.c.b16 %v2785, %v2781
      %v3250 = vpack.c.b16 %v2786, %v2782
      %v3251 = vpack.c.b16 %v2791, %v2787
      %v3252 = vpack.c.b16 %v2792, %v2788
      %v3253 = vpack.c.b16 %v2793, %v2789
      %v3254 = vpack.c.b16 %v2794, %v2790
      %v3255 = vpack.c.b16 %v2799, %v2795
      %v3256 = vpack.c.b16 %v2800, %v2796
      %v3257 = vpack.c.b16 %v2801, %v2797
      %v3258 = vpack.c.b16 %v2802, %v2798
      %v3259 = vpack.c.b16 %v2807, %v2803
      %v3260 = vpack.c.b16 %v2808, %v2804
      %v3261 = vpack.c.b16 %v2809, %v2805
      %v3262 = vpack.c.b16 %v2810, %v2806
      %v3263 = vpack.c.b16 %v2815, %v2811
      %v3264 = vpack.c.b16 %v2816, %v2812
      %v3265 = vpack.c.b16 %v2817, %v2813
      %v3266 = vpack.c.b16 %v2818, %v2814
      %v3267 = vpack.c.b16 %v2823, %v2819
      %v3268 = vpack.c.b16 %v2824, %v2820
      %v3269 = vpack.c.b16 %v2825, %v2821
      %v3270 = vpack.c.b16 %v2826, %v2822
      %v3271 = vpack.c.b16 %v2831, %v2827
      %v3272 = vpack.c.b16 %v2832, %v2828
      %v3273 = vpack.c.b16 %v2833, %v2829
      %v3274 = vpack.c.b16 %v2834, %v2830
      %v3275 = vpack.c.b16 %v2839, %v2835
      %v3276 = vpack.c.b16 %v2840, %v2836
      %v3277 = vpack.c.b16 %v2841, %v2837
      %v3278 = vpack.c.b16 %v2842, %v2838
      %v3279 = vpack.c.b16 %v2847, %v2843
      %v3280 = vpack.c.b16 %v2848, %v2844
      %v3281 = vpack.c.b16 %v2849, %v2845
      %v3282 = vpack.c.b16 %v2850, %v2846
      %v3283 = vpack.c.b16 %v2855, %v2851
      %v3284 = vpack.c.b16 %v2856, %v2852
      %v3285 = vpack.c.b16 %v2857, %v2853
      %v3286 = vpack.c.b16 %v2858, %v2854
      %v3287 = vpack.c.b16 %v2863, %v2859
      %v3288 = vpack.c.b16 %v2864, %v2860
      %v3289 = vpack.c.b16 %v2865, %v2861
      %v3290 = vpack.c.b16 %v2866, %v2862
      %v3291 = vpack.c.b16 %v2871, %v2867
      %v3292 = vpack.c.b16 %v2872, %v2868
      %v3293 = vpack.c.b16 %v2873, %v2869
      %v3294 = vpack.c.b16 %v2874, %v2870
      %v3295 = vpack.c.b16 %v2879, %v2875
      %v3296 = vpack.c.b16 %v2880, %v2876
      %v3297 = vpack.c.b16 %v2881, %v2877
      %v3298 = vpack.c.b16 %v2882, %v2878
      %v3299 = vpack.c.b16 %v2887, %v2883
      %v3300 = vpack.c.b16 %v2888, %v2884
      %v3301 = vpack.c.b16 %v2889, %v2885
      %v3302 = vpack.c.b16 %v2890, %v2886
      %v3303 = vpack.c.b16 %v2895, %v2891
      %v3304 = vpack.c.b16 %v2896, %v2892
      %v3305 = vpack.c.b16 %v2897, %v2893
      %v3306 = vpack.c.b16 %v2898, %v2894
      %v3307 = vpack.c.b16 %v2903, %v2899
      %v3308 = vpack.c.b16 %v2904, %v2900
      %v3309 = vpack.c.b16 %v2905, %v2901
      %v3310 = vpack.c.b16 %v2906, %v2902
      %v3311 = vpack.c.b16 %v2911, %v2907
      %v3312 = vpack.c.b16 %v2912, %v2908
      %v3313 = vpack.c.b16 %v2913, %v2909
      %v3314 = vpack.c.b16 %v2914, %v2910
      %v3315 = vpack.c.b16 %v2919, %v2915
      %v3316 = vpack.c.b16 %v2920, %v2916
      %v3317 = vpack.c.b16 %v2921, %v2917
      %v3318 = vpack.c.b16 %v2922, %v2918
      %v3319 = vpack.c.b16 %v2927, %v2923
      %v3320 = vpack.c.b16 %v2928, %v2924
      %v3321 = vpack.c.b16 %v2929, %v2925
      %v3322 = vpack.c.b16 %v2930, %v2926
      %v3323 = vpack.c.b16 %v2935, %v2931
      %v3324 = vpack.c.b16 %v2936, %v2932
      %v3325 = vpack.c.b16 %v2937, %v2933
      %v3326 = vpack.c.b16 %v2938, %v2934
      %v3327 = vpack.c.b16 %v2943, %v2939
      %v3328 = vpack.c.b16 %v2944, %v2940
      %v3329 = vpack.c.b16 %v2945, %v2941
      %v3330 = vpack.c.b16 %v2946, %v2942
      %v3331 = vpack.c.b16 %v2951, %v2947
      %v3332 = vpack.c.b16 %v2952, %v2948
      %v3333 = vpack.c.b16 %v2953, %v2949
      %v3334 = vpack.c.b16 %v2954, %v2950
      %v3335 = vpack.c.b16 %v2959, %v2955
      %v3336 = vpack.c.b16 %v2960, %v2956
      %v3337 = vpack.c.b16 %v2961, %v2957
      %v3338 = vpack.c.b16 %v2962, %v2958
      %v3339 = vpack.c.b16 %v2967, %v2963
      %v3340 = vpack.c.b16 %v2968, %v2964
      %v3341 = vpack.c.b16 %v2969, %v2965
      %v3342 = vpack.c.b16 %v2970, %v2966
      %v3343 = vpack.c.b16 %v2975, %v2971
      %v3344 = vpack.c.b16 %v2976, %v2972
      %v3345 = vpack.c.b16 %v2977, %v2973
      %v3346 = vpack.c.b16 %v2978, %v2974
      %v3347 = vpack.c.b16 %v2983, %v2979
      %v3348 = vpack.c.b16 %v2984, %v2980
      %v3349 = vpack.c.b16 %v2985, %v2981
      %v3350 = vpack.c.b16 %v2986, %v2982
      %v3351 = vpack.c.b16 %v2991, %v2987
      %v3352 = vpack.c.b16 %v2992, %v2988
      %v3353 = vpack.c.b16 %v2993, %v2989
      %v3354 = vpack.c.b16 %v2994, %v2990
      %v3355 = vpack.c.b16 %v2999, %v2995
      %v3356 = vpack.c.b16 %v3000, %v2996
      %v3357 = vpack.c.b16 %v3001, %v2997
      %v3358 = vpack.c.b16 %v3002, %v2998
      %v3359 = vpack.c.b16 %v3007, %v3003
      %v3360 = vpack.c.b16 %v3008, %v3004
      %v3361 = vpack.c.b16 %v3009, %v3005
      %v3362 = vpack.c.b16 %v3010, %v3006
      %v3363 = vpack.c.b16 %v3015, %v3011
      %v3364 = vpack.c.b16 %v3016, %v3012
      %v3365 = vpack.c.b16 %v3017, %v3013
      %v3366 = vpack.c.b16 %v3018, %v3014
      %v3367 = vpack.c.b16 %v3023, %v3019
      %v3368 = vpack.c.b16 %v3024, %v3020
      %v3369 = vpack.c.b16 %v3025, %v3021
      %v3370 = vpack.c.b16 %v3026, %v3022
      %v3371 = vpack.c.b16 %v3031, %v3027
      %v3372 = vpack.c.b16 %v3032, %v3028
      %v3373 = vpack.c.b16 %v3033, %v3029
      %v3374 = vpack.c.b16 %v3034, %v3030
      %v3375 = vpack.c.b16 %v3039, %v3035
      %v3376 = vpack.c.b16 %v3040, %v3036
      %v3377 = vpack.c.b16 %v3041, %v3037
      %v3378 = vpack.c.b16 %v3042, %v3038
      %v3379 = vpack.c.b16 %v3047, %v3043
      %v3380 = vpack.c.b16 %v3048, %v3044
      %v3381 = vpack.c.b16 %v3049, %v3045
      %v3382 = vpack.c.b16 %v3050, %v3046
      %v3383 = vpack.c.b16 %v3055, %v3051
      %v3384 = vpack.c.b16 %v3056, %v3052
      %v3385 = vpack.c.b16 %v3057, %v3053
      %v3386 = vpack.c.b16 %v3058, %v3054
      %v3387 = vpack.c.b16 %v3063, %v3059
      %v3388 = vpack.c.b16 %v3064, %v3060
      %v3389 = vpack.c.b16 %v3065, %v3061
      %v3390 = vpack.c.b16 %v3066, %v3062
      %v3391 = vpack.c.b16 %v3071, %v3067
      %v3392 = vpack.c.b16 %v3072, %v3068
      %v3393 = vpack.c.b16 %v3073, %v3069
      %v3394 = vpack.c.b16 %v3074, %v3070
      %3715 = vmatprep.subr.bf16.mxu0 %v3076
      %3716 = vmatpush1.bf16.msra.mxu0 %v3075
      %3717 = vmatprep.subr.bf16.mxu0 %v3080
      %3718 = vmatpush1.bf16.msra.mxu0 %v3079
      %3719 = vmatprep.subr.bf16.mxu0 %v3084
      %3720 = vmatpush1.bf16.msra.mxu0 %v3083
      %3721 = vmatprep.subr.bf16.mxu0 %v3088
      %3722 = vmatpush1.bf16.msra.mxu0 %v3087
      %3723 = vmatprep.subr.bf16.mxu0 %v3092
      %3724 = vmatpush1.bf16.msra.mxu0 %v3091
      %3725 = vmatprep.subr.bf16.mxu0 %v3096
      %3726 = vmatpush1.bf16.msra.mxu0 %v3095
      %3727 = vmatprep.subr.bf16.mxu0 %v3100
      %3728 = vmatpush1.bf16.msra.mxu0 %v3099
      %3729 = vmatprep.subr.bf16.mxu0 %v3104
      %3730 = vmatpush1.bf16.msra.mxu0 %v3103
      %3731 = vmatprep.subr.bf16.mxu0 %v3108
      %3732 = vmatpush1.bf16.msra.mxu0 %v3107
      %3733 = vmatprep.subr.bf16.mxu0 %v3112
      %3734 = vmatpush1.bf16.msra.mxu0 %v3111
      %3735 = vmatprep.subr.bf16.mxu0 %v3116
      %3736 = vmatpush1.bf16.msra.mxu0 %v3115
      %3737 = vmatprep.subr.bf16.mxu0 %v3120
      %3738 = vmatpush1.bf16.msra.mxu0 %v3119
      %3739 = vmatprep.subr.bf16.mxu0 %v3124
      %3740 = vmatpush1.bf16.msra.mxu0 %v3123
      %3741 = vmatprep.subr.bf16.mxu0 %v3128
      %3742 = vmatpush1.bf16.msra.mxu0 %v3127
      %3743 = vmatprep.subr.bf16.mxu0 %v3132
      %3744 = vmatpush1.bf16.msra.mxu0 %v3131
      %3745 = vmatprep.subr.bf16.mxu0 %v3136
      %3746 = vmatpush1.bf16.msra.mxu0 %v3135
      %3747 = vmatprep.mubr.bf16.mxu0 %v1786
      %3748 = vmatmul.mubr.bf16.gmra.mrb[0].mxu0 %v1785
      %v3749 = vpop.f32.mrb[0].mxu0
      %v3750 = vadd.f32 0.0, %v3749
      %v3751 = vpop.f32.mrb[0].mxu0
      %v3752 = vadd.f32 0.0, %v3751
      %v3753 = vpop.f32.mrb[0].mxu0
      %v3754 = vpop.f32.mrb[0].mxu0
      %3755 = vdwg.mxu0
      %3756 = vmatprep.subr.bf16.mxu0 %v3140
      %3757 = vmatpush1.bf16.msra.mxu0 %v3139
      %3758 = vmatprep.subr.bf16.mxu0 %v3144
      %3759 = vmatpush1.bf16.msra.mxu0 %v3143
      %3760 = vmatprep.subr.bf16.mxu0 %v3148
      %3761 = vmatpush1.bf16.msra.mxu0 %v3147
      %3762 = vmatprep.subr.bf16.mxu0 %v3152
      %3763 = vmatpush1.bf16.msra.mxu0 %v3151
      %3764 = vmatprep.subr.bf16.mxu0 %v3156
      %3765 = vmatpush1.bf16.msra.mxu0 %v3155
      %3766 = vmatprep.subr.bf16.mxu0 %v3160
      %3767 = vmatpush1.bf16.msra.mxu0 %v3159
      %3768 = vmatprep.subr.bf16.mxu0 %v3164
      %3769 = vmatpush1.bf16.msra.mxu0 %v3163
      %3770 = vmatprep.subr.bf16.mxu0 %v3168
      %3771 = vmatpush1.bf16.msra.mxu0 %v3167
      %3772 = vmatprep.subr.bf16.mxu0 %v3172
      %3773 = vmatpush1.bf16.msra.mxu0 %v3171
      %3774 = vmatprep.subr.bf16.mxu0 %v3176
      %3775 = vmatpush1.bf16.msra.mxu0 %v3175
      %3776 = vmatprep.subr.bf16.mxu0 %v3180
      %3777 = vmatpush1.bf16.msra.mxu0 %v3179
      %3778 = vmatprep.subr.bf16.mxu0 %v3184
      %3779 = vmatpush1.bf16.msra.mxu0 %v3183
      %3780 = vmatprep.subr.bf16.mxu0 %v3188
      %3781 = vmatpush1.bf16.msra.mxu0 %v3187
      %3782 = vmatprep.subr.bf16.mxu0 %v3192
      %3783 = vmatpush1.bf16.msra.mxu0 %v3191
      %3784 = vmatprep.subr.bf16.mxu0 %v3196
      %3785 = vmatpush1.bf16.msra.mxu0 %v3195
      %3786 = vmatprep.subr.bf16.mxu0 %v3200
      %3787 = vmatpush1.bf16.msra.mxu0 %v3199
      %3788 = vmatprep.mubr.bf16.mxu0 %v1788
      %3789 = vmatmul.mubr.bf16.gmra.mrb[0].mxu0 %v1787
      %v3790 = vpop.f32.mrb[0].mxu0
      %v3791 = vadd.f32 %v3750, %v3790
      %v3792 = vpop.f32.mrb[0].mxu0
      %v3793 = vadd.f32 %v3752, %v3792
      %v3794 = vpop.f32.mrb[0].mxu0
      %v3795 = vpop.f32.mrb[0].mxu0
      %3796 = vdwg.mxu0
      %3797 = vmatprep.subr.bf16.mxu0 %v3204
      %3798 = vmatpush1.bf16.msra.mxu0 %v3203
      %3799 = vmatprep.subr.bf16.mxu0 %v3208
      %3800 = vmatpush1.bf16.msra.mxu0 %v3207
      %3801 = vmatprep.subr.bf16.mxu0 %v3212
      %3802 = vmatpush1.bf16.msra.mxu0 %v3211
      %3803 = vmatprep.subr.bf16.mxu0 %v3216
      %3804 = vmatpush1.bf16.msra.mxu0 %v3215
      %3805 = vmatprep.subr.bf16.mxu0 %v3220
      %3806 = vmatpush1.bf16.msra.mxu0 %v3219
      %3807 = vmatprep.subr.bf16.mxu0 %v3224
      %3808 = vmatpush1.bf16.msra.mxu0 %v3223
      %3809 = vmatprep.subr.bf16.mxu0 %v3228
      %3810 = vmatpush1.bf16.msra.mxu0 %v3227
      %3811 = vmatprep.subr.bf16.mxu0 %v3232
      %3812 = vmatpush1.bf16.msra.mxu0 %v3231
      %3813 = vmatprep.subr.bf16.mxu0 %v3236
      %3814 = vmatpush1.bf16.msra.mxu0 %v3235
      %3815 = vmatprep.subr.bf16.mxu0 %v3240
      %3816 = vmatpush1.bf16.msra.mxu0 %v3239
      %3817 = vmatprep.subr.bf16.mxu0 %v3244
      %3818 = vmatpush1.bf16.msra.mxu0 %v3243
      %3819 = vmatprep.subr.bf16.mxu0 %v3248
      %3820 = vmatpush1.bf16.msra.mxu0 %v3247
      %3821 = vmatprep.subr.bf16.mxu0 %v3252
      %3822 = vmatpush1.bf16.msra.mxu0 %v3251
      %3823 = vmatprep.subr.bf16.mxu0 %v3256
      %3824 = vmatpush1.bf16.msra.mxu0 %v3255
      %3825 = vmatprep.subr.bf16.mxu0 %v3260
      %3826 = vmatpush1.bf16.msra.mxu0 %v3259
      %3827 = vmatprep.subr.bf16.mxu0 %v3264
      %3828 = vmatpush1.bf16.msra.mxu0 %v3263
      %3829 = vmatprep.mubr.bf16.mxu0 %v1790
      %3830 = vmatmul.mubr.bf16.gmra.mrb[0].mxu0 %v1789
      %v3831 = vpop.f32.mrb[0].mxu0
      %v3832 = vadd.f32 %v3791, %v3831
      %v3833 = vpop.f32.mrb[0].mxu0
      %v3834 = vadd.f32 %v3793, %v3833
      %v3835 = vpop.f32.mrb[0].mxu0
      %v3836 = vpop.f32.mrb[0].mxu0
      %3837 = vdwg.mxu0
      %3838 = vmatprep.subr.bf16.mxu0 %v3268
      %3839 = vmatpush1.bf16.msra.mxu0 %v3267
      %3840 = vmatprep.subr.bf16.mxu0 %v3272
      %3841 = vmatpush1.bf16.msra.mxu0 %v3271
      %3842 = vmatprep.subr.bf16.mxu0 %v3276
      %3843 = vmatpush1.bf16.msra.mxu0 %v3275
      %3844 = vmatprep.subr.bf16.mxu0 %v3280
      %3845 = vmatpush1.bf16.msra.mxu0 %v3279
      %3846 = vmatprep.subr.bf16.mxu0 %v3284
      %3847 = vmatpush1.bf16.msra.mxu0 %v3283
      %3848 = vmatprep.subr.bf16.mxu0 %v3288
      %3849 = vmatpush1.bf16.msra.mxu0 %v3287
      %3850 = vmatprep.subr.bf16.mxu0 %v3292
      %3851 = vmatpush1.bf16.msra.mxu0 %v3291
      %3852 = vmatprep.subr.bf16.mxu0 %v3296
      %3853 = vmatpush1.bf16.msra.mxu0 %v3295
      %3854 = vmatprep.subr.bf16.mxu0 %v3300
      %3855 = vmatpush1.bf16.msra.mxu0 %v3299
      %3856 = vmatprep.subr.bf16.mxu0 %v3304
      %3857 = vmatpush1.bf16.msra.mxu0 %v3303
      %3858 = vmatprep.subr.bf16.mxu0 %v3308
      %3859 = vmatpush1.bf16.msra.mxu0 %v3307
      %3860 = vmatprep.subr.bf16.mxu0 %v3312
      %3861 = vmatpush1.bf16.msra.mxu0 %v3311
      %3862 = vmatprep.subr.bf16.mxu0 %v3316
      %3863 = vmatpush1.bf16.msra.mxu0 %v3315
      %3864 = vmatprep.subr.bf16.mxu0 %v3320
      %3865 = vmatpush1.bf16.msra.mxu0 %v3319
      %3866 = vmatprep.subr.bf16.mxu0 %v3324
      %3867 = vmatpush1.bf16.msra.mxu0 %v3323
      %3868 = vmatprep.subr.bf16.mxu0 %v3328
      %3869 = vmatpush1.bf16.msra.mxu0 %v3327
      %3870 = vmatprep.mubr.bf16.mxu0 %v1792
      %3871 = vmatmul.mubr.bf16.gmra.mrb[0].mxu0 %v1791
      %v3872 = vpop.f32.mrb[0].mxu0
      %v3873 = vadd.f32 %v3832, %v3872
      %v3874 = vpop.f32.mrb[0].mxu0
      %v3875 = vadd.f32 %v3834, %v3874
      %v3876 = vpop.f32.mrb[0].mxu0
      %v3877 = vpop.f32.mrb[0].mxu0
      %3878 = vdwg.mxu0
      %3879 = vmatprep.subr.bf16.mxu0 %v3332
      %3880 = vmatpush1.bf16.msra.mxu0 %v3331
      %3881 = vmatprep.subr.bf16.mxu0 %v3336
      %3882 = vmatpush1.bf16.msra.mxu0 %v3335
      %3883 = vmatprep.subr.bf16.mxu0 %v3340
      %3884 = vmatpush1.bf16.msra.mxu0 %v3339
      %3885 = vmatprep.subr.bf16.mxu0 %v3344
      %3886 = vmatpush1.bf16.msra.mxu0 %v3343
      %3887 = vmatprep.subr.bf16.mxu0 %v3348
      %3888 = vmatpush1.bf16.msra.mxu0 %v3347
      %3889 = vmatprep.subr.bf16.mxu0 %v3352
      %3890 = vmatpush1.bf16.msra.mxu0 %v3351
      %3891 = vmatprep.subr.bf16.mxu0 %v3356
      %3892 = vmatpush1.bf16.msra.mxu0 %v3355
      %3893 = vmatprep.subr.bf16.mxu0 %v3360
      %3894 = vmatpush1.bf16.msra.mxu0 %v3359
      %3895 = vmatprep.subr.bf16.mxu0 %v3364
      %3896 = vmatpush1.bf16.msra.mxu0 %v3363
      %3897 = vmatprep.subr.bf16.mxu0 %v3368
      %3898 = vmatpush1.bf16.msra.mxu0 %v3367
      %3899 = vmatprep.subr.bf16.mxu0 %v3372
      %3900 = vmatpush1.bf16.msra.mxu0 %v3371
      %3901 = vmatprep.subr.bf16.mxu0 %v3376
      %3902 = vmatpush1.bf16.msra.mxu0 %v3375
      %3903 = vmatprep.subr.bf16.mxu0 %v3380
      %3904 = vmatpush1.bf16.msra.mxu0 %v3379
      %3905 = vmatprep.subr.bf16.mxu0 %v3384
      %3906 = vmatpush1.bf16.msra.mxu0 %v3383
      %3907 = vmatprep.subr.bf16.mxu0 %v3388
      %3908 = vmatpush1.bf16.msra.mxu0 %v3387
      %3909 = vmatprep.subr.bf16.mxu0 %v3392
      %3910 = vmatpush1.bf16.msra.mxu0 %v3391
      %3911 = vmatprep.mubr.bf16.mxu0 %v1794
      %3912 = vmatmul.mubr.bf16.gmra.mrb[0].mxu0 %v1793
      %v3913 = vpop.f32.mrb[0].mxu0
      %v3914 = vadd.f32 %v3873, %v3913
      %v3915 = vpop.f32.mrb[0].mxu0
      %v3916 = vadd.f32 %v3875, %v3915
      %v3917 = vpop.f32.mrb[0].mxu0
      %v3918 = vpop.f32.mrb[0].mxu0
      %3919 = vdwg.mxu0
      %3920 = vmatprep.subr.bf16.mxu0 %v3078
      %3921 = vmatpush1.bf16.msra.mxu0 %v3077
      %3922 = vmatprep.subr.bf16.mxu0 %v3082
      %3923 = vmatpush1.bf16.msra.mxu0 %v3081
      %3924 = vmatprep.subr.bf16.mxu0 %v3086
      %3925 = vmatpush1.bf16.msra.mxu0 %v3085
      %3926 = vmatprep.subr.bf16.mxu0 %v3090
      %3927 = vmatpush1.bf16.msra.mxu0 %v3089
      %3928 = vmatprep.subr.bf16.mxu0 %v3094
      %3929 = vmatpush1.bf16.msra.mxu0 %v3093
      %3930 = vmatprep.subr.bf16.mxu0 %v3098
      %3931 = vmatpush1.bf16.msra.mxu0 %v3097
      %3932 = vmatprep.subr.bf16.mxu0 %v3102
      %3933 = vmatpush1.bf16.msra.mxu0 %v3101
      %3934 = vmatprep.subr.bf16.mxu0 %v3106
      %3935 = vmatpush1.bf16.msra.mxu0 %v3105
      %3936 = vmatprep.subr.bf16.mxu0 %v3110
      %3937 = vmatpush1.bf16.msra.mxu0 %v3109
      %3938 = vmatprep.subr.bf16.mxu0 %v3114
      %3939 = vmatpush1.bf16.msra.mxu0 %v3113
      %3940 = vmatprep.subr.bf16.mxu0 %v3118
      %3941 = vmatpush1.bf16.msra.mxu0 %v3117
      %3942 = vmatprep.subr.bf16.mxu0 %v3122
      %3943 = vmatpush1.bf16.msra.mxu0 %v3121
      %3944 = vmatprep.subr.bf16.mxu0 %v3126
      %3945 = vmatpush1.bf16.msra.mxu0 %v3125
      %3946 = vmatprep.subr.bf16.mxu0 %v3130
      %3947 = vmatpush1.bf16.msra.mxu0 %v3129
      %3948 = vmatprep.subr.bf16.mxu0 %v3134
      %3949 = vmatpush1.bf16.msra.mxu0 %v3133
      %3950 = vmatprep.subr.bf16.mxu0 %v3138
      %3951 = vmatpush1.bf16.msra.mxu0 %v3137
      %3952 = vmatprep.mubr.bf16.mxu0 %v1786
      %3953 = vmatmul.mubr.bf16.gmra.mrb[0].mxu0 %v1785
      %v3954 = vpop.f32.mrb[0].mxu0
      %v3955 = vadd.f32 0.0, %v3954
      %v3956 = vpop.f32.mrb[0].mxu0
      %v3957 = vadd.f32 0.0, %v3956
      %v3958 = vpop.f32.mrb[0].mxu0
      %v3959 = vpop.f32.mrb[0].mxu0
      %3960 = vdwg.mxu0
      %3961 = vmatprep.subr.bf16.mxu0 %v3142
      %3962 = vmatpush1.bf16.msra.mxu0 %v3141
      %3963 = vmatprep.subr.bf16.mxu0 %v3146
      %3964 = vmatpush1.bf16.msra.mxu0 %v3145
      %3965 = vmatprep.subr.bf16.mxu0 %v3150
      %3966 = vmatpush1.bf16.msra.mxu0 %v3149
      %3967 = vmatprep.subr.bf16.mxu0 %v3154
      %3968 = vmatpush1.bf16.msra.mxu0 %v3153
      %3969 = vmatprep.subr.bf16.mxu0 %v3158
      %3970 = vmatpush1.bf16.msra.mxu0 %v3157
      %3971 = vmatprep.subr.bf16.mxu0 %v3162
      %3972 = vmatpush1.bf16.msra.mxu0 %v3161
      %3973 = vmatprep.subr.bf16.mxu0 %v3166
      %3974 = vmatpush1.bf16.msra.mxu0 %v3165
      %3975 = vmatprep.subr.bf16.mxu0 %v3170
      %3976 = vmatpush1.bf16.msra.mxu0 %v3169
      %3977 = vmatprep.subr.bf16.mxu0 %v3174
      %3978 = vmatpush1.bf16.msra.mxu0 %v3173
      %3979 = vmatprep.subr.bf16.mxu0 %v3178
      %3980 = vmatpush1.bf16.msra.mxu0 %v3177
      %3981 = vmatprep.subr.bf16.mxu0 %v3182
      %3982 = vmatpush1.bf16.msra.mxu0 %v3181
      %3983 = vmatprep.subr.bf16.mxu0 %v3186
      %3984 = vmatpush1.bf16.msra.mxu0 %v3185
      %3985 = vmatprep.subr.bf16.mxu0 %v3190
      %3986 = vmatpush1.bf16.msra.mxu0 %v3189
      %3987 = vmatprep.subr.bf16.mxu0 %v3194
      %3988 = vmatpush1.bf16.msra.mxu0 %v3193
      %3989 = vmatprep.subr.bf16.mxu0 %v3198
      %3990 = vmatpush1.bf16.msra.mxu0 %v3197
      %3991 = vmatprep.subr.bf16.mxu0 %v3202
      %3992 = vmatpush1.bf16.msra.mxu0 %v3201
      %3993 = vmatprep.mubr.bf16.mxu0 %v1788
      %3994 = vmatmul.mubr.bf16.gmra.mrb[0].mxu0 %v1787
      %v3995 = vpop.f32.mrb[0].mxu0
      %v3996 = vadd.f32 %v3955, %v3995
      %v3997 = vpop.f32.mrb[0].mxu0
      %v3998 = vadd.f32 %v3957, %v3997
      %v3999 = vpop.f32.mrb[0].mxu0
      %v4000 = vpop.f32.mrb[0].mxu0
      %4001 = vdwg.mxu0
      %4002 = vmatprep.subr.bf16.mxu0 %v3206
      %4003 = vmatpush1.bf16.msra.mxu0 %v3205
      %4004 = vmatprep.subr.bf16.mxu0 %v3210
      %4005 = vmatpush1.bf16.msra.mxu0 %v3209
      %4006 = vmatprep.subr.bf16.mxu0 %v3214
      %4007 = vmatpush1.bf16.msra.mxu0 %v3213
      %4008 = vmatprep.subr.bf16.mxu0 %v3218
      %4009 = vmatpush1.bf16.msra.mxu0 %v3217
      %4010 = vmatprep.subr.bf16.mxu0 %v3222
      %4011 = vmatpush1.bf16.msra.mxu0 %v3221
      %4012 = vmatprep.subr.bf16.mxu0 %v3226
      %4013 = vmatpush1.bf16.msra.mxu0 %v3225
      %4014 = vmatprep.subr.bf16.mxu0 %v3230
      %4015 = vmatpush1.bf16.msra.mxu0 %v3229
      %4016 = vmatprep.subr.bf16.mxu0 %v3234
      %4017 = vmatpush1.bf16.msra.mxu0 %v3233
      %4018 = vmatprep.subr.bf16.mxu0 %v3238
      %4019 = vmatpush1.bf16.msra.mxu0 %v3237
      %4020 = vmatprep.subr.bf16.mxu0 %v3242
      %4021 = vmatpush1.bf16.msra.mxu0 %v3241
      %4022 = vmatprep.subr.bf16.mxu0 %v3246
      %4023 = vmatpush1.bf16.msra.mxu0 %v3245
      %4024 = vmatprep.subr.bf16.mxu0 %v3250
      %4025 = vmatpush1.bf16.msra.mxu0 %v3249
      %4026 = vmatprep.subr.bf16.mxu0 %v3254
      %4027 = vmatpush1.bf16.msra.mxu0 %v3253
      %4028 = vmatprep.subr.bf16.mxu0 %v3258
      %4029 = vmatpush1.bf16.msra.mxu0 %v3257
      %4030 = vmatprep.subr.bf16.mxu0 %v3262
      %4031 = vmatpush1.bf16.msra.mxu0 %v3261
      %4032 = vmatprep.subr.bf16.mxu0 %v3266
      %4033 = vmatpush1.bf16.msra.mxu0 %v3265
      %4034 = vmatprep.mubr.bf16.mxu0 %v1790
      %4035 = vmatmul.mubr.bf16.gmra.mrb[0].mxu0 %v1789
      %v4036 = vpop.f32.mrb[0].mxu0
      %v4037 = vadd.f32 %v3996, %v4036
      %v4038 = vpop.f32.mrb[0].mxu0
      %v4039 = vadd.f32 %v3998, %v4038
      %v4040 = vpop.f32.mrb[0].mxu0
      %v4041 = vpop.f32.mrb[0].mxu0
      %4042 = vdwg.mxu0
      %4043 = vmatprep.subr.bf16.mxu0 %v3270
      %4044 = vmatpush1.bf16.msra.mxu0 %v3269
      %4045 = vmatprep.subr.bf16.mxu0 %v3274
      %4046 = vmatpush1.bf16.msra.mxu0 %v3273
      %4047 = vmatprep.subr.bf16.mxu0 %v3278
      %4048 = vmatpush1.bf16.msra.mxu0 %v3277
      %4049 = vmatprep.subr.bf16.mxu0 %v3282
      %4050 = vmatpush1.bf16.msra.mxu0 %v3281
      %4051 = vmatprep.subr.bf16.mxu0 %v3286
      %4052 = vmatpush1.bf16.msra.mxu0 %v3285
      %4053 = vmatprep.subr.bf16.mxu0 %v3290
      %4054 = vmatpush1.bf16.msra.mxu0 %v3289
      %4055 = vmatprep.subr.bf16.mxu0 %v3294
      %4056 = vmatpush1.bf16.msra.mxu0 %v3293
      %4057 = vmatprep.subr.bf16.mxu0 %v3298
      %4058 = vmatpush1.bf16.msra.mxu0 %v3297
      %4059 = vmatprep.subr.bf16.mxu0 %v3302
      %4060 = vmatpush1.bf16.msra.mxu0 %v3301
      %4061 = vmatprep.subr.bf16.mxu0 %v3306
      %4062 = vmatpush1.bf16.msra.mxu0 %v3305
      %4063 = vmatprep.subr.bf16.mxu0 %v3310
      %4064 = vmatpush1.bf16.msra.mxu0 %v3309
      %4065 = vmatprep.subr.bf16.mxu0 %v3314
      %4066 = vmatpush1.bf16.msra.mxu0 %v3313
      %4067 = vmatprep.subr.bf16.mxu0 %v3318
      %4068 = vmatpush1.bf16.msra.mxu0 %v3317
      %4069 = vmatprep.subr.bf16.mxu0 %v3322
      %4070 = vmatpush1.bf16.msra.mxu0 %v3321
      %4071 = vmatprep.subr.bf16.mxu0 %v3326
      %4072 = vmatpush1.bf16.msra.mxu0 %v3325
      %4073 = vmatprep.subr.bf16.mxu0 %v3330
      %4074 = vmatpush1.bf16.msra.mxu0 %v3329
      %4075 = vmatprep.mubr.bf16.mxu0 %v1792
      %4076 = vmatmul.mubr.bf16.gmra.mrb[0].mxu0 %v1791
      %v4077 = vpop.f32.mrb[0].mxu0
      %v4078 = vadd.f32 %v4037, %v4077
      %v4079 = vpop.f32.mrb[0].mxu0
      %v4080 = vadd.f32 %v4039, %v4079
      %v4081 = vpop.f32.mrb[0].mxu0
      %v4082 = vpop.f32.mrb[0].mxu0
      %4083 = vdwg.mxu0
      %4084 = vmatprep.subr.bf16.mxu0 %v3334
      %4085 = vmatpush1.bf16.msra.mxu0 %v3333
      %4086 = vmatprep.subr.bf16.mxu0 %v3338
      %4087 = vmatpush1.bf16.msra.mxu0 %v3337
      %4088 = vmatprep.subr.bf16.mxu0 %v3342
      %4089 = vmatpush1.bf16.msra.mxu0 %v3341
      %4090 = vmatprep.subr.bf16.mxu0 %v3346
      %4091 = vmatpush1.bf16.msra.mxu0 %v3345
      %4092 = vmatprep.subr.bf16.mxu0 %v3350
      %4093 = vmatpush1.bf16.msra.mxu0 %v3349
      %4094 = vmatprep.subr.bf16.mxu0 %v3354
      %4095 = vmatpush1.bf16.msra.mxu0 %v3353
      %4096 = vmatprep.subr.bf16.mxu0 %v3358
      %4097 = vmatpush1.bf16.msra.mxu0 %v3357
      %4098 = vmatprep.subr.bf16.mxu0 %v3362
      %4099 = vmatpush1.bf16.msra.mxu0 %v3361
      %4100 = vmatprep.subr.bf16.mxu0 %v3366
      %4101 = vmatpush1.bf16.msra.mxu0 %v3365
      %4102 = vmatprep.subr.bf16.mxu0 %v3370
      %4103 = vmatpush1.bf16.msra.mxu0 %v3369
      %4104 = vmatprep.subr.bf16.mxu0 %v3374
      %4105 = vmatpush1.bf16.msra.mxu0 %v3373
      %4106 = vmatprep.subr.bf16.mxu0 %v3378
      %4107 = vmatpush1.bf16.msra.mxu0 %v3377
      %4108 = vmatprep.subr.bf16.mxu0 %v3382
      %4109 = vmatpush1.bf16.msra.mxu0 %v3381
      %4110 = vmatprep.subr.bf16.mxu0 %v3386
      %4111 = vmatpush1.bf16.msra.mxu0 %v3385
      %4112 = vmatprep.subr.bf16.mxu0 %v3390
      %4113 = vmatpush1.bf16.msra.mxu0 %v3389
      %4114 = vmatprep.subr.bf16.mxu0 %v3394
      %4115 = vmatpush1.bf16.msra.mxu0 %v3393
      %4116 = vmatprep.mubr.bf16.mxu0 %v1794
      %4117 = vmatmul.mubr.bf16.gmra.mrb[0].mxu0 %v1793
      %v4118 = vpop.f32.mrb[0].mxu0
      %v4119 = vadd.f32 %v4078, %v4118
      %v4120 = vpop.f32.mrb[0].mxu0
      %v4121 = vadd.f32 %v4080, %v4120
      %v4122 = vpop.f32.mrb[0].mxu0
      %v4123 = vpop.f32.mrb[0].mxu0
      %4124 = vdwg.mxu0
      %v4445 = vunpack.c.l.b16 %v1465
      %v4446 = vunpack.c.h.b16 %v1465
      %v4447 = vunpack.c.l.b16 %v1466
      %v4448 = vunpack.c.h.b16 %v1466
      %v4449 = vunpack.c.l.b16 %v1467
      %v4450 = vunpack.c.h.b16 %v1467
      %v4451 = vunpack.c.l.b16 %v1468
      %v4452 = vunpack.c.h.b16 %v1468
      %v4453 = vunpack.c.l.b16 %v1469
      %v4454 = vunpack.c.h.b16 %v1469
      %v4455 = vunpack.c.l.b16 %v1470
      %v4456 = vunpack.c.h.b16 %v1470
      %v4457 = vunpack.c.l.b16 %v1471
      %v4458 = vunpack.c.h.b16 %v1471
      %v4459 = vunpack.c.l.b16 %v1472
      %v4460 = vunpack.c.h.b16 %v1472
      %v4461 = vunpack.c.l.b16 %v1473
      %v4462 = vunpack.c.h.b16 %v1473
      %v4463 = vunpack.c.l.b16 %v1474
      %v4464 = vunpack.c.h.b16 %v1474
      %v4465 = vunpack.c.l.b16 %v1475
      %v4466 = vunpack.c.h.b16 %v1475
      %v4467 = vunpack.c.l.b16 %v1476
      %v4468 = vunpack.c.h.b16 %v1476
      %v4469 = vunpack.c.l.b16 %v1477
      %v4470 = vunpack.c.h.b16 %v1477
      %v4471 = vunpack.c.l.b16 %v1478
      %v4472 = vunpack.c.h.b16 %v1478
      %v4473 = vunpack.c.l.b16 %v1479
      %v4474 = vunpack.c.h.b16 %v1479
      %v4475 = vunpack.c.l.b16 %v1480
      %v4476 = vunpack.c.h.b16 %v1480
      %v4477 = vunpack.c.l.b16 %v1481
      %v4478 = vunpack.c.h.b16 %v1481
      %v4479 = vunpack.c.l.b16 %v1482
      %v4480 = vunpack.c.h.b16 %v1482
      %v4481 = vunpack.c.l.b16 %v1483
      %v4482 = vunpack.c.h.b16 %v1483
      %v4483 = vunpack.c.l.b16 %v1484
      %v4484 = vunpack.c.h.b16 %v1484
      %v4485 = vunpack.c.l.b16 %v1485
      %v4486 = vunpack.c.h.b16 %v1485
      %v4487 = vunpack.c.l.b16 %v1486
      %v4488 = vunpack.c.h.b16 %v1486
      %v4489 = vunpack.c.l.b16 %v1487
      %v4490 = vunpack.c.h.b16 %v1487
      %v4491 = vunpack.c.l.b16 %v1488
      %v4492 = vunpack.c.h.b16 %v1488
      %v4493 = vunpack.c.l.b16 %v1489
      %v4494 = vunpack.c.h.b16 %v1489
      %v4495 = vunpack.c.l.b16 %v1490
      %v4496 = vunpack.c.h.b16 %v1490
      %v4497 = vunpack.c.l.b16 %v1491
      %v4498 = vunpack.c.h.b16 %v1491
      %v4499 = vunpack.c.l.b16 %v1492
      %v4500 = vunpack.c.h.b16 %v1492
      %v4501 = vunpack.c.l.b16 %v1493
      %v4502 = vunpack.c.h.b16 %v1493
      %v4503 = vunpack.c.l.b16 %v1494
      %v4504 = vunpack.c.h.b16 %v1494
      %v4505 = vunpack.c.l.b16 %v1495
      %v4506 = vunpack.c.h.b16 %v1495
      %v4507 = vunpack.c.l.b16 %v1496
      %v4508 = vunpack.c.h.b16 %v1496
      %v4509 = vunpack.c.l.b16 %v1497
      %v4510 = vunpack.c.h.b16 %v1497
      %v4511 = vunpack.c.l.b16 %v1498
      %v4512 = vunpack.c.h.b16 %v1498
      %v4513 = vunpack.c.l.b16 %v1499
      %v4514 = vunpack.c.h.b16 %v1499
      %v4515 = vunpack.c.l.b16 %v1500
      %v4516 = vunpack.c.h.b16 %v1500
      %v4517 = vunpack.c.l.b16 %v1501
      %v4518 = vunpack.c.h.b16 %v1501
      %v4519 = vunpack.c.l.b16 %v1502
      %v4520 = vunpack.c.h.b16 %v1502
      %v4521 = vunpack.c.l.b16 %v1503
      %v4522 = vunpack.c.h.b16 %v1503
      %v4523 = vunpack.c.l.b16 %v1504
      %v4524 = vunpack.c.h.b16 %v1504
      %v4525 = vunpack.c.l.b16 %v1505
      %v4526 = vunpack.c.h.b16 %v1505
      %v4527 = vunpack.c.l.b16 %v1506
      %v4528 = vunpack.c.h.b16 %v1506
      %v4529 = vunpack.c.l.b16 %v1507
      %v4530 = vunpack.c.h.b16 %v1507
      %v4531 = vunpack.c.l.b16 %v1508
      %v4532 = vunpack.c.h.b16 %v1508
      %v4533 = vunpack.c.l.b16 %v1509
      %v4534 = vunpack.c.h.b16 %v1509
      %v4535 = vunpack.c.l.b16 %v1510
      %v4536 = vunpack.c.h.b16 %v1510
      %v4537 = vunpack.c.l.b16 %v1511
      %v4538 = vunpack.c.h.b16 %v1511
      %v4539 = vunpack.c.l.b16 %v1512
      %v4540 = vunpack.c.h.b16 %v1512
      %v4541 = vunpack.c.l.b16 %v1513
      %v4542 = vunpack.c.h.b16 %v1513
      %v4543 = vunpack.c.l.b16 %v1514
      %v4544 = vunpack.c.h.b16 %v1514
      %v4545 = vunpack.c.l.b16 %v1515
      %v4546 = vunpack.c.h.b16 %v1515
      %v4547 = vunpack.c.l.b16 %v1516
      %v4548 = vunpack.c.h.b16 %v1516
      %v4549 = vunpack.c.l.b16 %v1517
      %v4550 = vunpack.c.h.b16 %v1517
      %v4551 = vunpack.c.l.b16 %v1518
      %v4552 = vunpack.c.h.b16 %v1518
      %v4553 = vunpack.c.l.b16 %v1519
      %v4554 = vunpack.c.h.b16 %v1519
      %v4555 = vunpack.c.l.b16 %v1520
      %v4556 = vunpack.c.h.b16 %v1520
      %v4557 = vunpack.c.l.b16 %v1521
      %v4558 = vunpack.c.h.b16 %v1521
      %v4559 = vunpack.c.l.b16 %v1522
      %v4560 = vunpack.c.h.b16 %v1522
      %v4561 = vunpack.c.l.b16 %v1523
      %v4562 = vunpack.c.h.b16 %v1523
      %v4563 = vunpack.c.l.b16 %v1524
      %v4564 = vunpack.c.h.b16 %v1524
      %v4565 = vunpack.c.l.b16 %v1525
      %v4566 = vunpack.c.h.b16 %v1525
      %v4567 = vunpack.c.l.b16 %v1526
      %v4568 = vunpack.c.h.b16 %v1526
      %v4569 = vunpack.c.l.b16 %v1527
      %v4570 = vunpack.c.h.b16 %v1527
      %v4571 = vunpack.c.l.b16 %v1528
      %v4572 = vunpack.c.h.b16 %v1528
      %v4573 = vunpack.c.l.b16 %v1529
      %v4574 = vunpack.c.h.b16 %v1529
      %v4575 = vunpack.c.l.b16 %v1530
      %v4576 = vunpack.c.h.b16 %v1530
      %v4577 = vunpack.c.l.b16 %v1531
      %v4578 = vunpack.c.h.b16 %v1531
      %v4579 = vunpack.c.l.b16 %v1532
      %v4580 = vunpack.c.h.b16 %v1532
      %v4581 = vunpack.c.l.b16 %v1533
      %v4582 = vunpack.c.h.b16 %v1533
      %v4583 = vunpack.c.l.b16 %v1534
      %v4584 = vunpack.c.h.b16 %v1534
      %v4585 = vunpack.c.l.b16 %v1535
      %v4586 = vunpack.c.h.b16 %v1535
      %v4587 = vunpack.c.l.b16 %v1536
      %v4588 = vunpack.c.h.b16 %v1536
      %v4589 = vunpack.c.l.b16 %v1537
      %v4590 = vunpack.c.h.b16 %v1537
      %v4591 = vunpack.c.l.b16 %v1538
      %v4592 = vunpack.c.h.b16 %v1538
      %v4593 = vunpack.c.l.b16 %v1539
      %v4594 = vunpack.c.h.b16 %v1539
      %v4595 = vunpack.c.l.b16 %v1540
      %v4596 = vunpack.c.h.b16 %v1540
      %v4597 = vunpack.c.l.b16 %v1541
      %v4598 = vunpack.c.h.b16 %v1541
      %v4599 = vunpack.c.l.b16 %v1542
      %v4600 = vunpack.c.h.b16 %v1542
      %v4601 = vunpack.c.l.b16 %v1543
      %v4602 = vunpack.c.h.b16 %v1543
      %v4603 = vunpack.c.l.b16 %v1544
      %v4604 = vunpack.c.h.b16 %v1544
      %v4605 = vunpack.c.l.b16 %v1545
      %v4606 = vunpack.c.h.b16 %v1545
      %v4607 = vunpack.c.l.b16 %v1546
      %v4608 = vunpack.c.h.b16 %v1546
      %v4609 = vunpack.c.l.b16 %v1547
      %v4610 = vunpack.c.h.b16 %v1547
      %v4611 = vunpack.c.l.b16 %v1548
      %v4612 = vunpack.c.h.b16 %v1548
      %v4613 = vunpack.c.l.b16 %v1549
      %v4614 = vunpack.c.h.b16 %v1549
      %v4615 = vunpack.c.l.b16 %v1550
      %v4616 = vunpack.c.h.b16 %v1550
      %v4617 = vunpack.c.l.b16 %v1551
      %v4618 = vunpack.c.h.b16 %v1551
      %v4619 = vunpack.c.l.b16 %v1552
      %v4620 = vunpack.c.h.b16 %v1552
      %v4621 = vunpack.c.l.b16 %v1553
      %v4622 = vunpack.c.h.b16 %v1553
      %v4623 = vunpack.c.l.b16 %v1554
      %v4624 = vunpack.c.h.b16 %v1554
      %v4625 = vunpack.c.l.b16 %v1555
      %v4626 = vunpack.c.h.b16 %v1555
      %v4627 = vunpack.c.l.b16 %v1556
      %v4628 = vunpack.c.h.b16 %v1556
      %v4629 = vunpack.c.l.b16 %v1557
      %v4630 = vunpack.c.h.b16 %v1557
      %v4631 = vunpack.c.l.b16 %v1558
      %v4632 = vunpack.c.h.b16 %v1558
      %v4633 = vunpack.c.l.b16 %v1559
      %v4634 = vunpack.c.h.b16 %v1559
      %v4635 = vunpack.c.l.b16 %v1560
      %v4636 = vunpack.c.h.b16 %v1560
      %v4637 = vunpack.c.l.b16 %v1561
      %v4638 = vunpack.c.h.b16 %v1561
      %v4639 = vunpack.c.l.b16 %v1562
      %v4640 = vunpack.c.h.b16 %v1562
      %v4641 = vunpack.c.l.b16 %v1563
      %v4642 = vunpack.c.h.b16 %v1563
      %v4643 = vunpack.c.l.b16 %v1564
      %v4644 = vunpack.c.h.b16 %v1564
      %v4645 = vunpack.c.l.b16 %v1565
      %v4646 = vunpack.c.h.b16 %v1565
      %v4647 = vunpack.c.l.b16 %v1566
      %v4648 = vunpack.c.h.b16 %v1566
      %v4649 = vunpack.c.l.b16 %v1567
      %v4650 = vunpack.c.h.b16 %v1567
      %v4651 = vunpack.c.l.b16 %v1568
      %v4652 = vunpack.c.h.b16 %v1568
      %v4653 = vunpack.c.l.b16 %v1569
      %v4654 = vunpack.c.h.b16 %v1569
      %v4655 = vunpack.c.l.b16 %v1570
      %v4656 = vunpack.c.h.b16 %v1570
      %v4657 = vunpack.c.l.b16 %v1571
      %v4658 = vunpack.c.h.b16 %v1571
      %v4659 = vunpack.c.l.b16 %v1572
      %v4660 = vunpack.c.h.b16 %v1572
      %v4661 = vunpack.c.l.b16 %v1573
      %v4662 = vunpack.c.h.b16 %v1573
      %v4663 = vunpack.c.l.b16 %v1574
      %v4664 = vunpack.c.h.b16 %v1574
      %v4665 = vunpack.c.l.b16 %v1575
      %v4666 = vunpack.c.h.b16 %v1575
      %v4667 = vunpack.c.l.b16 %v1576
      %v4668 = vunpack.c.h.b16 %v1576
      %v4669 = vunpack.c.l.b16 %v1577
      %v4670 = vunpack.c.h.b16 %v1577
      %v4671 = vunpack.c.l.b16 %v1578
      %v4672 = vunpack.c.h.b16 %v1578
      %v4673 = vunpack.c.l.b16 %v1579
      %v4674 = vunpack.c.h.b16 %v1579
      %v4675 = vunpack.c.l.b16 %v1580
      %v4676 = vunpack.c.h.b16 %v1580
      %v4677 = vunpack.c.l.b16 %v1581
      %v4678 = vunpack.c.h.b16 %v1581
      %v4679 = vunpack.c.l.b16 %v1582
      %v4680 = vunpack.c.h.b16 %v1582
      %v4681 = vunpack.c.l.b16 %v1583
      %v4682 = vunpack.c.h.b16 %v1583
      %v4683 = vunpack.c.l.b16 %v1584
      %v4684 = vunpack.c.h.b16 %v1584
      %v4685 = vunpack.c.l.b16 %v1585
      %v4686 = vunpack.c.h.b16 %v1585
      %v4687 = vunpack.c.l.b16 %v1586
      %v4688 = vunpack.c.h.b16 %v1586
      %v4689 = vunpack.c.l.b16 %v1587
      %v4690 = vunpack.c.h.b16 %v1587
      %v4691 = vunpack.c.l.b16 %v1588
      %v4692 = vunpack.c.h.b16 %v1588
      %v4693 = vunpack.c.l.b16 %v1589
      %v4694 = vunpack.c.h.b16 %v1589
      %v4695 = vunpack.c.l.b16 %v1590
      %v4696 = vunpack.c.h.b16 %v1590
      %v4697 = vunpack.c.l.b16 %v1591
      %v4698 = vunpack.c.h.b16 %v1591
      %v4699 = vunpack.c.l.b16 %v1592
      %v4700 = vunpack.c.h.b16 %v1592
      %v4701 = vunpack.c.l.b16 %v1593
      %v4702 = vunpack.c.h.b16 %v1593
      %v4703 = vunpack.c.l.b16 %v1594
      %v4704 = vunpack.c.h.b16 %v1594
      %v4705 = vunpack.c.l.b16 %v1595
      %v4706 = vunpack.c.h.b16 %v1595
      %v4707 = vunpack.c.l.b16 %v1596
      %v4708 = vunpack.c.h.b16 %v1596
      %v4709 = vunpack.c.l.b16 %v1597
      %v4710 = vunpack.c.h.b16 %v1597
      %v4711 = vunpack.c.l.b16 %v1598
      %v4712 = vunpack.c.h.b16 %v1598
      %v4713 = vunpack.c.l.b16 %v1599
      %v4714 = vunpack.c.h.b16 %v1599
      %v4715 = vunpack.c.l.b16 %v1600
      %v4716 = vunpack.c.h.b16 %v1600
      %v4717 = vunpack.c.l.b16 %v1601
      %v4718 = vunpack.c.h.b16 %v1601
      %v4719 = vunpack.c.l.b16 %v1602
      %v4720 = vunpack.c.h.b16 %v1602
      %v4721 = vunpack.c.l.b16 %v1603
      %v4722 = vunpack.c.h.b16 %v1603
      %v4723 = vunpack.c.l.b16 %v1604
      %v4724 = vunpack.c.h.b16 %v1604
      %v4725 = vunpack.c.l.b16 %v1605
      %v4726 = vunpack.c.h.b16 %v1605
      %v4727 = vunpack.c.l.b16 %v1606
      %v4728 = vunpack.c.h.b16 %v1606
      %v4729 = vunpack.c.l.b16 %v1607
      %v4730 = vunpack.c.h.b16 %v1607
      %v4731 = vunpack.c.l.b16 %v1608
      %v4732 = vunpack.c.h.b16 %v1608
      %v4733 = vunpack.c.l.b16 %v1609
      %v4734 = vunpack.c.h.b16 %v1609
      %v4735 = vunpack.c.l.b16 %v1610
      %v4736 = vunpack.c.h.b16 %v1610
      %v4737 = vunpack.c.l.b16 %v1611
      %v4738 = vunpack.c.h.b16 %v1611
      %v4739 = vunpack.c.l.b16 %v1612
      %v4740 = vunpack.c.h.b16 %v1612
      %v4741 = vunpack.c.l.b16 %v1613
      %v4742 = vunpack.c.h.b16 %v1613
      %v4743 = vunpack.c.l.b16 %v1614
      %v4744 = vunpack.c.h.b16 %v1614
      %v4745 = vunpack.c.l.b16 %v1615
      %v4746 = vunpack.c.h.b16 %v1615
      %v4747 = vunpack.c.l.b16 %v1616
      %v4748 = vunpack.c.h.b16 %v1616
      %v4749 = vunpack.c.l.b16 %v1617
      %v4750 = vunpack.c.h.b16 %v1617
      %v4751 = vunpack.c.l.b16 %v1618
      %v4752 = vunpack.c.h.b16 %v1618
      %v4753 = vunpack.c.l.b16 %v1619
      %v4754 = vunpack.c.h.b16 %v1619
      %v4755 = vunpack.c.l.b16 %v1620
      %v4756 = vunpack.c.h.b16 %v1620
      %v4757 = vunpack.c.l.b16 %v1621
      %v4758 = vunpack.c.h.b16 %v1621
      %v4759 = vunpack.c.l.b16 %v1622
      %v4760 = vunpack.c.h.b16 %v1622
      %v4761 = vunpack.c.l.b16 %v1623
      %v4762 = vunpack.c.h.b16 %v1623
      %v4763 = vunpack.c.l.b16 %v1624
      %v4764 = vunpack.c.h.b16 %v1624
      %v4765 = vunpack.c.l.b16 %v1625
      %v4766 = vunpack.c.h.b16 %v1625
      %v4767 = vunpack.c.l.b16 %v1626
      %v4768 = vunpack.c.h.b16 %v1626
      %v4769 = vunpack.c.l.b16 %v1627
      %v4770 = vunpack.c.h.b16 %v1627
      %v4771 = vunpack.c.l.b16 %v1628
      %v4772 = vunpack.c.h.b16 %v1628
      %v4773 = vunpack.c.l.b16 %v1629
      %v4774 = vunpack.c.h.b16 %v1629
      %v4775 = vunpack.c.l.b16 %v1630
      %v4776 = vunpack.c.h.b16 %v1630
      %v4777 = vunpack.c.l.b16 %v1631
      %v4778 = vunpack.c.h.b16 %v1631
      %v4779 = vunpack.c.l.b16 %v1632
      %v4780 = vunpack.c.h.b16 %v1632
      %v4781 = vunpack.c.l.b16 %v1633
      %v4782 = vunpack.c.h.b16 %v1633
      %v4783 = vunpack.c.l.b16 %v1634
      %v4784 = vunpack.c.h.b16 %v1634
      %v4785 = vunpack.c.l.b16 %v1635
      %v4786 = vunpack.c.h.b16 %v1635
      %v4787 = vunpack.c.l.b16 %v1636
      %v4788 = vunpack.c.h.b16 %v1636
      %v4789 = vunpack.c.l.b16 %v1637
      %v4790 = vunpack.c.h.b16 %v1637
      %v4791 = vunpack.c.l.b16 %v1638
      %v4792 = vunpack.c.h.b16 %v1638
      %v4793 = vunpack.c.l.b16 %v1639
      %v4794 = vunpack.c.h.b16 %v1639
      %v4795 = vunpack.c.l.b16 %v1640
      %v4796 = vunpack.c.h.b16 %v1640
      %v4797 = vunpack.c.l.b16 %v1641
      %v4798 = vunpack.c.h.b16 %v1641
      %v4799 = vunpack.c.l.b16 %v1642
      %v4800 = vunpack.c.h.b16 %v1642
      %v4801 = vunpack.c.l.b16 %v1643
      %v4802 = vunpack.c.h.b16 %v1643
      %v4803 = vunpack.c.l.b16 %v1644
      %v4804 = vunpack.c.h.b16 %v1644
      %v4805 = vunpack.c.l.b16 %v1645
      %v4806 = vunpack.c.h.b16 %v1645
      %v4807 = vunpack.c.l.b16 %v1646
      %v4808 = vunpack.c.h.b16 %v1646
      %v4809 = vunpack.c.l.b16 %v1647
      %v4810 = vunpack.c.h.b16 %v1647
      %v4811 = vunpack.c.l.b16 %v1648
      %v4812 = vunpack.c.h.b16 %v1648
      %v4813 = vunpack.c.l.b16 %v1649
      %v4814 = vunpack.c.h.b16 %v1649
      %v4815 = vunpack.c.l.b16 %v1650
      %v4816 = vunpack.c.h.b16 %v1650
      %v4817 = vunpack.c.l.b16 %v1651
      %v4818 = vunpack.c.h.b16 %v1651
      %v4819 = vunpack.c.l.b16 %v1652
      %v4820 = vunpack.c.h.b16 %v1652
      %v4821 = vunpack.c.l.b16 %v1653
      %v4822 = vunpack.c.h.b16 %v1653
      %v4823 = vunpack.c.l.b16 %v1654
      %v4824 = vunpack.c.h.b16 %v1654
      %v4825 = vunpack.c.l.b16 %v1655
      %v4826 = vunpack.c.h.b16 %v1655
      %v4827 = vunpack.c.l.b16 %v1656
      %v4828 = vunpack.c.h.b16 %v1656
      %v4829 = vunpack.c.l.b16 %v1657
      %v4830 = vunpack.c.h.b16 %v1657
      %v4831 = vunpack.c.l.b16 %v1658
      %v4832 = vunpack.c.h.b16 %v1658
      %v4833 = vunpack.c.l.b16 %v1659
      %v4834 = vunpack.c.h.b16 %v1659
      %v4835 = vunpack.c.l.b16 %v1660
      %v4836 = vunpack.c.h.b16 %v1660
      %v4837 = vunpack.c.l.b16 %v1661
      %v4838 = vunpack.c.h.b16 %v1661
      %v4839 = vunpack.c.l.b16 %v1662
      %v4840 = vunpack.c.h.b16 %v1662
      %v4841 = vunpack.c.l.b16 %v1663
      %v4842 = vunpack.c.h.b16 %v1663
      %v4843 = vunpack.c.l.b16 %v1664
      %v4844 = vunpack.c.h.b16 %v1664
      %v4845 = vunpack.c.l.b16 %v1665
      %v4846 = vunpack.c.h.b16 %v1665
      %v4847 = vunpack.c.l.b16 %v1666
      %v4848 = vunpack.c.h.b16 %v1666
      %v4849 = vunpack.c.l.b16 %v1667
      %v4850 = vunpack.c.h.b16 %v1667
      %v4851 = vunpack.c.l.b16 %v1668
      %v4852 = vunpack.c.h.b16 %v1668
      %v4853 = vunpack.c.l.b16 %v1669
      %v4854 = vunpack.c.h.b16 %v1669
      %v4855 = vunpack.c.l.b16 %v1670
      %v4856 = vunpack.c.h.b16 %v1670
      %v4857 = vunpack.c.l.b16 %v1671
      %v4858 = vunpack.c.h.b16 %v1671
      %v4859 = vunpack.c.l.b16 %v1672
      %v4860 = vunpack.c.h.b16 %v1672
      %v4861 = vunpack.c.l.b16 %v1673
      %v4862 = vunpack.c.h.b16 %v1673
      %v4863 = vunpack.c.l.b16 %v1674
      %v4864 = vunpack.c.h.b16 %v1674
      %v4865 = vunpack.c.l.b16 %v1675
      %v4866 = vunpack.c.h.b16 %v1675
      %v4867 = vunpack.c.l.b16 %v1676
      %v4868 = vunpack.c.h.b16 %v1676
      %v4869 = vunpack.c.l.b16 %v1677
      %v4870 = vunpack.c.h.b16 %v1677
      %v4871 = vunpack.c.l.b16 %v1678
      %v4872 = vunpack.c.h.b16 %v1678
      %v4873 = vunpack.c.l.b16 %v1679
      %v4874 = vunpack.c.h.b16 %v1679
      %v4875 = vunpack.c.l.b16 %v1680
      %v4876 = vunpack.c.h.b16 %v1680
      %v4877 = vunpack.c.l.b16 %v1681
      %v4878 = vunpack.c.h.b16 %v1681
      %v4879 = vunpack.c.l.b16 %v1682
      %v4880 = vunpack.c.h.b16 %v1682
      %v4881 = vunpack.c.l.b16 %v1683
      %v4882 = vunpack.c.h.b16 %v1683
      %v4883 = vunpack.c.l.b16 %v1684
      %v4884 = vunpack.c.h.b16 %v1684
      %v4885 = vunpack.c.l.b16 %v1685
      %v4886 = vunpack.c.h.b16 %v1685
      %v4887 = vunpack.c.l.b16 %v1686
      %v4888 = vunpack.c.h.b16 %v1686
      %v4889 = vunpack.c.l.b16 %v1687
      %v4890 = vunpack.c.h.b16 %v1687
      %v4891 = vunpack.c.l.b16 %v1688
      %v4892 = vunpack.c.h.b16 %v1688
      %v4893 = vunpack.c.l.b16 %v1689
      %v4894 = vunpack.c.h.b16 %v1689
      %v4895 = vunpack.c.l.b16 %v1690
      %v4896 = vunpack.c.h.b16 %v1690
      %v4897 = vunpack.c.l.b16 %v1691
      %v4898 = vunpack.c.h.b16 %v1691
      %v4899 = vunpack.c.l.b16 %v1692
      %v4900 = vunpack.c.h.b16 %v1692
      %v4901 = vunpack.c.l.b16 %v1693
      %v4902 = vunpack.c.h.b16 %v1693
      %v4903 = vunpack.c.l.b16 %v1694
      %v4904 = vunpack.c.h.b16 %v1694
      %v4905 = vunpack.c.l.b16 %v1695
      %v4906 = vunpack.c.h.b16 %v1695
      %v4907 = vunpack.c.l.b16 %v1696
      %v4908 = vunpack.c.h.b16 %v1696
      %v4909 = vunpack.c.l.b16 %v1697
      %v4910 = vunpack.c.h.b16 %v1697
      %v4911 = vunpack.c.l.b16 %v1698
      %v4912 = vunpack.c.h.b16 %v1698
      %v4913 = vunpack.c.l.b16 %v1699
      %v4914 = vunpack.c.h.b16 %v1699
      %v4915 = vunpack.c.l.b16 %v1700
      %v4916 = vunpack.c.h.b16 %v1700
      %v4917 = vunpack.c.l.b16 %v1701
      %v4918 = vunpack.c.h.b16 %v1701
      %v4919 = vunpack.c.l.b16 %v1702
      %v4920 = vunpack.c.h.b16 %v1702
      %v4921 = vunpack.c.l.b16 %v1703
      %v4922 = vunpack.c.h.b16 %v1703
      %v4923 = vunpack.c.l.b16 %v1704
      %v4924 = vunpack.c.h.b16 %v1704
      %v4925 = vunpack.c.l.b16 %v1705
      %v4926 = vunpack.c.h.b16 %v1705
      %v4927 = vunpack.c.l.b16 %v1706
      %v4928 = vunpack.c.h.b16 %v1706
      %v4929 = vunpack.c.l.b16 %v1707
      %v4930 = vunpack.c.h.b16 %v1707
      %v4931 = vunpack.c.l.b16 %v1708
      %v4932 = vunpack.c.h.b16 %v1708
      %v4933 = vunpack.c.l.b16 %v1709
      %v4934 = vunpack.c.h.b16 %v1709
      %v4935 = vunpack.c.l.b16 %v1710
      %v4936 = vunpack.c.h.b16 %v1710
      %v4937 = vunpack.c.l.b16 %v1711
      %v4938 = vunpack.c.h.b16 %v1711
      %v4939 = vunpack.c.l.b16 %v1712
      %v4940 = vunpack.c.h.b16 %v1712
      %v4941 = vunpack.c.l.b16 %v1713
      %v4942 = vunpack.c.h.b16 %v1713
      %v4943 = vunpack.c.l.b16 %v1714
      %v4944 = vunpack.c.h.b16 %v1714
      %v4945 = vunpack.c.l.b16 %v1715
      %v4946 = vunpack.c.h.b16 %v1715
      %v4947 = vunpack.c.l.b16 %v1716
      %v4948 = vunpack.c.h.b16 %v1716
      %v4949 = vunpack.c.l.b16 %v1717
      %v4950 = vunpack.c.h.b16 %v1717
      %v4951 = vunpack.c.l.b16 %v1718
      %v4952 = vunpack.c.h.b16 %v1718
      %v4953 = vunpack.c.l.b16 %v1719
      %v4954 = vunpack.c.h.b16 %v1719
      %v4955 = vunpack.c.l.b16 %v1720
      %v4956 = vunpack.c.h.b16 %v1720
      %v4957 = vunpack.c.l.b16 %v1721
      %v4958 = vunpack.c.h.b16 %v1721
      %v4959 = vunpack.c.l.b16 %v1722
      %v4960 = vunpack.c.h.b16 %v1722
      %v4961 = vunpack.c.l.b16 %v1723
      %v4962 = vunpack.c.h.b16 %v1723
      %v4963 = vunpack.c.l.b16 %v1724
      %v4964 = vunpack.c.h.b16 %v1724
      %v4965 = vunpack.c.l.b16 %v1725
      %v4966 = vunpack.c.h.b16 %v1725
      %v4967 = vunpack.c.l.b16 %v1726
      %v4968 = vunpack.c.h.b16 %v1726
      %v4969 = vunpack.c.l.b16 %v1727
      %v4970 = vunpack.c.h.b16 %v1727
      %v4971 = vunpack.c.l.b16 %v1728
      %v4972 = vunpack.c.h.b16 %v1728
      %v4973 = vunpack.c.l.b16 %v1729
      %v4974 = vunpack.c.h.b16 %v1729
      %v4975 = vunpack.c.l.b16 %v1730
      %v4976 = vunpack.c.h.b16 %v1730
      %v4977 = vunpack.c.l.b16 %v1731
      %v4978 = vunpack.c.h.b16 %v1731
      %v4979 = vunpack.c.l.b16 %v1732
      %v4980 = vunpack.c.h.b16 %v1732
      %v4981 = vunpack.c.l.b16 %v1733
      %v4982 = vunpack.c.h.b16 %v1733
      %v4983 = vunpack.c.l.b16 %v1734
      %v4984 = vunpack.c.h.b16 %v1734
      %v4985 = vunpack.c.l.b16 %v1735
      %v4986 = vunpack.c.h.b16 %v1735
      %v4987 = vunpack.c.l.b16 %v1736
      %v4988 = vunpack.c.h.b16 %v1736
      %v4989 = vunpack.c.l.b16 %v1737
      %v4990 = vunpack.c.h.b16 %v1737
      %v4991 = vunpack.c.l.b16 %v1738
      %v4992 = vunpack.c.h.b16 %v1738
      %v4993 = vunpack.c.l.b16 %v1739
      %v4994 = vunpack.c.h.b16 %v1739
      %v4995 = vunpack.c.l.b16 %v1740
      %v4996 = vunpack.c.h.b16 %v1740
      %v4997 = vunpack.c.l.b16 %v1741
      %v4998 = vunpack.c.h.b16 %v1741
      %v4999 = vunpack.c.l.b16 %v1742
      %v5000 = vunpack.c.h.b16 %v1742
      %v5001 = vunpack.c.l.b16 %v1743
      %v5002 = vunpack.c.h.b16 %v1743
      %v5003 = vunpack.c.l.b16 %v1744
      %v5004 = vunpack.c.h.b16 %v1744
      %v5005 = vunpack.c.l.b16 %v1745
      %v5006 = vunpack.c.h.b16 %v1745
      %v5007 = vunpack.c.l.b16 %v1746
      %v5008 = vunpack.c.h.b16 %v1746
      %v5009 = vunpack.c.l.b16 %v1747
      %v5010 = vunpack.c.h.b16 %v1747
      %v5011 = vunpack.c.l.b16 %v1748
      %v5012 = vunpack.c.h.b16 %v1748
      %v5013 = vunpack.c.l.b16 %v1749
      %v5014 = vunpack.c.h.b16 %v1749
      %v5015 = vunpack.c.l.b16 %v1750
      %v5016 = vunpack.c.h.b16 %v1750
      %v5017 = vunpack.c.l.b16 %v1751
      %v5018 = vunpack.c.h.b16 %v1751
      %v5019 = vunpack.c.l.b16 %v1752
      %v5020 = vunpack.c.h.b16 %v1752
      %v5021 = vunpack.c.l.b16 %v1753
      %v5022 = vunpack.c.h.b16 %v1753
      %v5023 = vunpack.c.l.b16 %v1754
      %v5024 = vunpack.c.h.b16 %v1754
      %v5025 = vunpack.c.l.b16 %v1755
      %v5026 = vunpack.c.h.b16 %v1755
      %v5027 = vunpack.c.l.b16 %v1756
      %v5028 = vunpack.c.h.b16 %v1756
      %v5029 = vunpack.c.l.b16 %v1757
      %v5030 = vunpack.c.h.b16 %v1757
      %v5031 = vunpack.c.l.b16 %v1758
      %v5032 = vunpack.c.h.b16 %v1758
      %v5033 = vunpack.c.l.b16 %v1759
      %v5034 = vunpack.c.h.b16 %v1759
      %v5035 = vunpack.c.l.b16 %v1760
      %v5036 = vunpack.c.h.b16 %v1760
      %v5037 = vunpack.c.l.b16 %v1761
      %v5038 = vunpack.c.h.b16 %v1761
      %v5039 = vunpack.c.l.b16 %v1762
      %v5040 = vunpack.c.h.b16 %v1762
      %v5041 = vunpack.c.l.b16 %v1763
      %v5042 = vunpack.c.h.b16 %v1763
      %v5043 = vunpack.c.l.b16 %v1764
      %v5044 = vunpack.c.h.b16 %v1764
      %v5045 = vunpack.c.l.b16 %v1765
      %v5046 = vunpack.c.h.b16 %v1765
      %v5047 = vunpack.c.l.b16 %v1766
      %v5048 = vunpack.c.h.b16 %v1766
      %v5049 = vunpack.c.l.b16 %v1767
      %v5050 = vunpack.c.h.b16 %v1767
      %v5051 = vunpack.c.l.b16 %v1768
      %v5052 = vunpack.c.h.b16 %v1768
      %v5053 = vunpack.c.l.b16 %v1769
      %v5054 = vunpack.c.h.b16 %v1769
      %v5055 = vunpack.c.l.b16 %v1770
      %v5056 = vunpack.c.h.b16 %v1770
      %v5057 = vunpack.c.l.b16 %v1771
      %v5058 = vunpack.c.h.b16 %v1771
      %v5059 = vunpack.c.l.b16 %v1772
      %v5060 = vunpack.c.h.b16 %v1772
      %v5061 = vunpack.c.l.b16 %v1773
      %v5062 = vunpack.c.h.b16 %v1773
      %v5063 = vunpack.c.l.b16 %v1774
      %v5064 = vunpack.c.h.b16 %v1774
      %v5065 = vunpack.c.l.b16 %v1775
      %v5066 = vunpack.c.h.b16 %v1775
      %v5067 = vunpack.c.l.b16 %v1776
      %v5068 = vunpack.c.h.b16 %v1776
      %v5069 = vunpack.c.l.b16 %v1777
      %v5070 = vunpack.c.h.b16 %v1777
      %v5071 = vunpack.c.l.b16 %v1778
      %v5072 = vunpack.c.h.b16 %v1778
      %v5073 = vunpack.c.l.b16 %v1779
      %v5074 = vunpack.c.h.b16 %v1779
      %v5075 = vunpack.c.l.b16 %v1780
      %v5076 = vunpack.c.h.b16 %v1780
      %v5077 = vunpack.c.l.b16 %v1781
      %v5078 = vunpack.c.h.b16 %v1781
      %v5079 = vunpack.c.l.b16 %v1782
      %v5080 = vunpack.c.h.b16 %v1782
      %v5081 = vunpack.c.l.b16 %v1783
      %v5082 = vunpack.c.h.b16 %v1783
      %v5083 = vunpack.c.l.b16 %v1784
      %v5084 = vunpack.c.h.b16 %v1784
      %v5085 = vpack.c.b16 %v4449, %v4445
      %v5086 = vpack.c.b16 %v4450, %v4446
      %v5087 = vpack.c.b16 %v4451, %v4447
      %v5088 = vpack.c.b16 %v4452, %v4448
      %v5089 = vpack.c.b16 %v4457, %v4453
      %v5090 = vpack.c.b16 %v4458, %v4454
      %v5091 = vpack.c.b16 %v4459, %v4455
      %v5092 = vpack.c.b16 %v4460, %v4456
      %v5093 = vpack.c.b16 %v4465, %v4461
      %v5094 = vpack.c.b16 %v4466, %v4462
      %v5095 = vpack.c.b16 %v4467, %v4463
      %v5096 = vpack.c.b16 %v4468, %v4464
      %v5097 = vpack.c.b16 %v4473, %v4469
      %v5098 = vpack.c.b16 %v4474, %v4470
      %v5099 = vpack.c.b16 %v4475, %v4471
      %v5100 = vpack.c.b16 %v4476, %v4472
      %v5101 = vpack.c.b16 %v4481, %v4477
      %v5102 = vpack.c.b16 %v4482, %v4478
      %v5103 = vpack.c.b16 %v4483, %v4479
      %v5104 = vpack.c.b16 %v4484, %v4480
      %v5105 = vpack.c.b16 %v4489, %v4485
      %v5106 = vpack.c.b16 %v4490, %v4486
      %v5107 = vpack.c.b16 %v4491, %v4487
      %v5108 = vpack.c.b16 %v4492, %v4488
      %v5109 = vpack.c.b16 %v4497, %v4493
      %v5110 = vpack.c.b16 %v4498, %v4494
      %v5111 = vpack.c.b16 %v4499, %v4495
      %v5112 = vpack.c.b16 %v4500, %v4496
      %v5113 = vpack.c.b16 %v4505, %v4501
      %v5114 = vpack.c.b16 %v4506, %v4502
      %v5115 = vpack.c.b16 %v4507, %v4503
      %v5116 = vpack.c.b16 %v4508, %v4504
      %v5117 = vpack.c.b16 %v4513, %v4509
      %v5118 = vpack.c.b16 %v4514, %v4510
      %v5119 = vpack.c.b16 %v4515, %v4511
      %v5120 = vpack.c.b16 %v4516, %v4512
      %v5121 = vpack.c.b16 %v4521, %v4517
      %v5122 = vpack.c.b16 %v4522, %v4518
      %v5123 = vpack.c.b16 %v4523, %v4519
      %v5124 = vpack.c.b16 %v4524, %v4520
      %v5125 = vpack.c.b16 %v4529, %v4525
      %v5126 = vpack.c.b16 %v4530, %v4526
      %v5127 = vpack.c.b16 %v4531, %v4527
      %v5128 = vpack.c.b16 %v4532, %v4528
      %v5129 = vpack.c.b16 %v4537, %v4533
      %v5130 = vpack.c.b16 %v4538, %v4534
      %v5131 = vpack.c.b16 %v4539, %v4535
      %v5132 = vpack.c.b16 %v4540, %v4536
      %v5133 = vpack.c.b16 %v4545, %v4541
      %v5134 = vpack.c.b16 %v4546, %v4542
      %v5135 = vpack.c.b16 %v4547, %v4543
      %v5136 = vpack.c.b16 %v4548, %v4544
      %v5137 = vpack.c.b16 %v4553, %v4549
      %v5138 = vpack.c.b16 %v4554, %v4550
      %v5139 = vpack.c.b16 %v4555, %v4551
      %v5140 = vpack.c.b16 %v4556, %v4552
      %v5141 = vpack.c.b16 %v4561, %v4557
      %v5142 = vpack.c.b16 %v4562, %v4558
      %v5143 = vpack.c.b16 %v4563, %v4559
      %v5144 = vpack.c.b16 %v4564, %v4560
      %v5145 = vpack.c.b16 %v4569, %v4565
      %v5146 = vpack.c.b16 %v4570, %v4566
      %v5147 = vpack.c.b16 %v4571, %v4567
      %v5148 = vpack.c.b16 %v4572, %v4568
      %v5149 = vpack.c.b16 %v4577, %v4573
      %v5150 = vpack.c.b16 %v4578, %v4574
      %v5151 = vpack.c.b16 %v4579, %v4575
      %v5152 = vpack.c.b16 %v4580, %v4576
      %v5153 = vpack.c.b16 %v4585, %v4581
      %v5154 = vpack.c.b16 %v4586, %v4582
      %v5155 = vpack.c.b16 %v4587, %v4583
      %v5156 = vpack.c.b16 %v4588, %v4584
      %v5157 = vpack.c.b16 %v4593, %v4589
      %v5158 = vpack.c.b16 %v4594, %v4590
      %v5159 = vpack.c.b16 %v4595, %v4591
      %v5160 = vpack.c.b16 %v4596, %v4592
      %v5161 = vpack.c.b16 %v4601, %v4597
      %v5162 = vpack.c.b16 %v4602, %v4598
      %v5163 = vpack.c.b16 %v4603, %v4599
      %v5164 = vpack.c.b16 %v4604, %v4600
      %v5165 = vpack.c.b16 %v4609, %v4605
      %v5166 = vpack.c.b16 %v4610, %v4606
      %v5167 = vpack.c.b16 %v4611, %v4607
      %v5168 = vpack.c.b16 %v4612, %v4608
      %v5169 = vpack.c.b16 %v4617, %v4613
      %v5170 = vpack.c.b16 %v4618, %v4614
      %v5171 = vpack.c.b16 %v4619, %v4615
      %v5172 = vpack.c.b16 %v4620, %v4616
      %v5173 = vpack.c.b16 %v4625, %v4621
      %v5174 = vpack.c.b16 %v4626, %v4622
      %v5175 = vpack.c.b16 %v4627, %v4623
      %v5176 = vpack.c.b16 %v4628, %v4624
      %v5177 = vpack.c.b16 %v4633, %v4629
      %v5178 = vpack.c.b16 %v4634, %v4630
      %v5179 = vpack.c.b16 %v4635, %v4631
      %v5180 = vpack.c.b16 %v4636, %v4632
      %v5181 = vpack.c.b16 %v4641, %v4637
      %v5182 = vpack.c.b16 %v4642, %v4638
      %v5183 = vpack.c.b16 %v4643, %v4639
      %v5184 = vpack.c.b16 %v4644, %v4640
      %v5185 = vpack.c.b16 %v4649, %v4645
      %v5186 = vpack.c.b16 %v4650, %v4646
      %v5187 = vpack.c.b16 %v4651, %v4647
      %v5188 = vpack.c.b16 %v4652, %v4648
      %v5189 = vpack.c.b16 %v4657, %v4653
      %v5190 = vpack.c.b16 %v4658, %v4654
      %v5191 = vpack.c.b16 %v4659, %v4655
      %v5192 = vpack.c.b16 %v4660, %v4656
      %v5193 = vpack.c.b16 %v4665, %v4661
      %v5194 = vpack.c.b16 %v4666, %v4662
      %v5195 = vpack.c.b16 %v4667, %v4663
      %v5196 = vpack.c.b16 %v4668, %v4664
      %v5197 = vpack.c.b16 %v4673, %v4669
      %v5198 = vpack.c.b16 %v4674, %v4670
      %v5199 = vpack.c.b16 %v4675, %v4671
      %v5200 = vpack.c.b16 %v4676, %v4672
      %v5201 = vpack.c.b16 %v4681, %v4677
      %v5202 = vpack.c.b16 %v4682, %v4678
      %v5203 = vpack.c.b16 %v4683, %v4679
      %v5204 = vpack.c.b16 %v4684, %v4680
      %v5205 = vpack.c.b16 %v4689, %v4685
      %v5206 = vpack.c.b16 %v4690, %v4686
      %v5207 = vpack.c.b16 %v4691, %v4687
      %v5208 = vpack.c.b16 %v4692, %v4688
      %v5209 = vpack.c.b16 %v4697, %v4693
      %v5210 = vpack.c.b16 %v4698, %v4694
      %v5211 = vpack.c.b16 %v4699, %v4695
      %v5212 = vpack.c.b16 %v4700, %v4696
      %v5213 = vpack.c.b16 %v4705, %v4701
      %v5214 = vpack.c.b16 %v4706, %v4702
      %v5215 = vpack.c.b16 %v4707, %v4703
      %v5216 = vpack.c.b16 %v4708, %v4704
      %v5217 = vpack.c.b16 %v4713, %v4709
      %v5218 = vpack.c.b16 %v4714, %v4710
      %v5219 = vpack.c.b16 %v4715, %v4711
      %v5220 = vpack.c.b16 %v4716, %v4712
      %v5221 = vpack.c.b16 %v4721, %v4717
      %v5222 = vpack.c.b16 %v4722, %v4718
      %v5223 = vpack.c.b16 %v4723, %v4719
      %v5224 = vpack.c.b16 %v4724, %v4720
      %v5225 = vpack.c.b16 %v4729, %v4725
      %v5226 = vpack.c.b16 %v4730, %v4726
      %v5227 = vpack.c.b16 %v4731, %v4727
      %v5228 = vpack.c.b16 %v4732, %v4728
      %v5229 = vpack.c.b16 %v4737, %v4733
      %v5230 = vpack.c.b16 %v4738, %v4734
      %v5231 = vpack.c.b16 %v4739, %v4735
      %v5232 = vpack.c.b16 %v4740, %v4736
      %v5233 = vpack.c.b16 %v4745, %v4741
      %v5234 = vpack.c.b16 %v4746, %v4742
      %v5235 = vpack.c.b16 %v4747, %v4743
      %v5236 = vpack.c.b16 %v4748, %v4744
      %v5237 = vpack.c.b16 %v4753, %v4749
      %v5238 = vpack.c.b16 %v4754, %v4750
      %v5239 = vpack.c.b16 %v4755, %v4751
      %v5240 = vpack.c.b16 %v4756, %v4752
      %v5241 = vpack.c.b16 %v4761, %v4757
      %v5242 = vpack.c.b16 %v4762, %v4758
      %v5243 = vpack.c.b16 %v4763, %v4759
      %v5244 = vpack.c.b16 %v4764, %v4760
      %v5245 = vpack.c.b16 %v4769, %v4765
      %v5246 = vpack.c.b16 %v4770, %v4766
      %v5247 = vpack.c.b16 %v4771, %v4767
      %v5248 = vpack.c.b16 %v4772, %v4768
      %v5249 = vpack.c.b16 %v4777, %v4773
      %v5250 = vpack.c.b16 %v4778, %v4774
      %v5251 = vpack.c.b16 %v4779, %v4775
      %v5252 = vpack.c.b16 %v4780, %v4776
      %v5253 = vpack.c.b16 %v4785, %v4781
      %v5254 = vpack.c.b16 %v4786, %v4782
      %v5255 = vpack.c.b16 %v4787, %v4783
      %v5256 = vpack.c.b16 %v4788, %v4784
      %v5257 = vpack.c.b16 %v4793, %v4789
      %v5258 = vpack.c.b16 %v4794, %v4790
      %v5259 = vpack.c.b16 %v4795, %v4791
      %v5260 = vpack.c.b16 %v4796, %v4792
      %v5261 = vpack.c.b16 %v4801, %v4797
      %v5262 = vpack.c.b16 %v4802, %v4798
      %v5263 = vpack.c.b16 %v4803, %v4799
      %v5264 = vpack.c.b16 %v4804, %v4800
      %v5265 = vpack.c.b16 %v4809, %v4805
      %v5266 = vpack.c.b16 %v4810, %v4806
      %v5267 = vpack.c.b16 %v4811, %v4807
      %v5268 = vpack.c.b16 %v4812, %v4808
      %v5269 = vpack.c.b16 %v4817, %v4813
      %v5270 = vpack.c.b16 %v4818, %v4814
      %v5271 = vpack.c.b16 %v4819, %v4815
      %v5272 = vpack.c.b16 %v4820, %v4816
      %v5273 = vpack.c.b16 %v4825, %v4821
      %v5274 = vpack.c.b16 %v4826, %v4822
      %v5275 = vpack.c.b16 %v4827, %v4823
      %v5276 = vpack.c.b16 %v4828, %v4824
      %v5277 = vpack.c.b16 %v4833, %v4829
      %v5278 = vpack.c.b16 %v4834, %v4830
      %v5279 = vpack.c.b16 %v4835, %v4831
      %v5280 = vpack.c.b16 %v4836, %v4832
      %v5281 = vpack.c.b16 %v4841, %v4837
      %v5282 = vpack.c.b16 %v4842, %v4838
      %v5283 = vpack.c.b16 %v4843, %v4839
      %v5284 = vpack.c.b16 %v4844, %v4840
      %v5285 = vpack.c.b16 %v4849, %v4845
      %v5286 = vpack.c.b16 %v4850, %v4846
      %v5287 = vpack.c.b16 %v4851, %v4847
      %v5288 = vpack.c.b16 %v4852, %v4848
      %v5289 = vpack.c.b16 %v4857, %v4853
      %v5290 = vpack.c.b16 %v4858, %v4854
      %v5291 = vpack.c.b16 %v4859, %v4855
      %v5292 = vpack.c.b16 %v4860, %v4856
      %v5293 = vpack.c.b16 %v4865, %v4861
      %v5294 = vpack.c.b16 %v4866, %v4862
      %v5295 = vpack.c.b16 %v4867, %v4863
      %v5296 = vpack.c.b16 %v4868, %v4864
      %v5297 = vpack.c.b16 %v4873, %v4869
      %v5298 = vpack.c.b16 %v4874, %v4870
      %v5299 = vpack.c.b16 %v4875, %v4871
      %v5300 = vpack.c.b16 %v4876, %v4872
      %v5301 = vpack.c.b16 %v4881, %v4877
      %v5302 = vpack.c.b16 %v4882, %v4878
      %v5303 = vpack.c.b16 %v4883, %v4879
      %v5304 = vpack.c.b16 %v4884, %v4880
      %v5305 = vpack.c.b16 %v4889, %v4885
      %v5306 = vpack.c.b16 %v4890, %v4886
      %v5307 = vpack.c.b16 %v4891, %v4887
      %v5308 = vpack.c.b16 %v4892, %v4888
      %v5309 = vpack.c.b16 %v4897, %v4893
      %v5310 = vpack.c.b16 %v4898, %v4894
      %v5311 = vpack.c.b16 %v4899, %v4895
      %v5312 = vpack.c.b16 %v4900, %v4896
      %v5313 = vpack.c.b16 %v4905, %v4901
      %v5314 = vpack.c.b16 %v4906, %v4902
      %v5315 = vpack.c.b16 %v4907, %v4903
      %v5316 = vpack.c.b16 %v4908, %v4904
      %v5317 = vpack.c.b16 %v4913, %v4909
      %v5318 = vpack.c.b16 %v4914, %v4910
      %v5319 = vpack.c.b16 %v4915, %v4911
      %v5320 = vpack.c.b16 %v4916, %v4912
      %v5321 = vpack.c.b16 %v4921, %v4917
      %v5322 = vpack.c.b16 %v4922, %v4918
      %v5323 = vpack.c.b16 %v4923, %v4919
      %v5324 = vpack.c.b16 %v4924, %v4920
      %v5325 = vpack.c.b16 %v4929, %v4925
      %v5326 = vpack.c.b16 %v4930, %v4926
      %v5327 = vpack.c.b16 %v4931, %v4927
      %v5328 = vpack.c.b16 %v4932, %v4928
      %v5329 = vpack.c.b16 %v4937, %v4933
      %v5330 = vpack.c.b16 %v4938, %v4934
      %v5331 = vpack.c.b16 %v4939, %v4935
      %v5332 = vpack.c.b16 %v4940, %v4936
      %v5333 = vpack.c.b16 %v4945, %v4941
      %v5334 = vpack.c.b16 %v4946, %v4942
      %v5335 = vpack.c.b16 %v4947, %v4943
      %v5336 = vpack.c.b16 %v4948, %v4944
      %v5337 = vpack.c.b16 %v4953, %v4949
      %v5338 = vpack.c.b16 %v4954, %v4950
      %v5339 = vpack.c.b16 %v4955, %v4951
      %v5340 = vpack.c.b16 %v4956, %v4952
      %v5341 = vpack.c.b16 %v4961, %v4957
      %v5342 = vpack.c.b16 %v4962, %v4958
      %v5343 = vpack.c.b16 %v4963, %v4959
      %v5344 = vpack.c.b16 %v4964, %v4960
      %v5345 = vpack.c.b16 %v4969, %v4965
      %v5346 = vpack.c.b16 %v4970, %v4966
      %v5347 = vpack.c.b16 %v4971, %v4967
      %v5348 = vpack.c.b16 %v4972, %v4968
      %v5349 = vpack.c.b16 %v4977, %v4973
      %v5350 = vpack.c.b16 %v4978, %v4974
      %v5351 = vpack.c.b16 %v4979, %v4975
      %v5352 = vpack.c.b16 %v4980, %v4976
      %v5353 = vpack.c.b16 %v4985, %v4981
      %v5354 = vpack.c.b16 %v4986, %v4982
      %v5355 = vpack.c.b16 %v4987, %v4983
      %v5356 = vpack.c.b16 %v4988, %v4984
      %v5357 = vpack.c.b16 %v4993, %v4989
      %v5358 = vpack.c.b16 %v4994, %v4990
      %v5359 = vpack.c.b16 %v4995, %v4991
      %v5360 = vpack.c.b16 %v4996, %v4992
      %v5361 = vpack.c.b16 %v5001, %v4997
      %v5362 = vpack.c.b16 %v5002, %v4998
      %v5363 = vpack.c.b16 %v5003, %v4999
      %v5364 = vpack.c.b16 %v5004, %v5000
      %v5365 = vpack.c.b16 %v5009, %v5005
      %v5366 = vpack.c.b16 %v5010, %v5006
      %v5367 = vpack.c.b16 %v5011, %v5007
      %v5368 = vpack.c.b16 %v5012, %v5008
      %v5369 = vpack.c.b16 %v5017, %v5013
      %v5370 = vpack.c.b16 %v5018, %v5014
      %v5371 = vpack.c.b16 %v5019, %v5015
      %v5372 = vpack.c.b16 %v5020, %v5016
      %v5373 = vpack.c.b16 %v5025, %v5021
      %v5374 = vpack.c.b16 %v5026, %v5022
      %v5375 = vpack.c.b16 %v5027, %v5023
      %v5376 = vpack.c.b16 %v5028, %v5024
      %v5377 = vpack.c.b16 %v5033, %v5029
      %v5378 = vpack.c.b16 %v5034, %v5030
      %v5379 = vpack.c.b16 %v5035, %v5031
      %v5380 = vpack.c.b16 %v5036, %v5032
      %v5381 = vpack.c.b16 %v5041, %v5037
      %v5382 = vpack.c.b16 %v5042, %v5038
      %v5383 = vpack.c.b16 %v5043, %v5039
      %v5384 = vpack.c.b16 %v5044, %v5040
      %v5385 = vpack.c.b16 %v5049, %v5045
      %v5386 = vpack.c.b16 %v5050, %v5046
      %v5387 = vpack.c.b16 %v5051, %v5047
      %v5388 = vpack.c.b16 %v5052, %v5048
      %v5389 = vpack.c.b16 %v5057, %v5053
      %v5390 = vpack.c.b16 %v5058, %v5054
      %v5391 = vpack.c.b16 %v5059, %v5055
      %v5392 = vpack.c.b16 %v5060, %v5056
      %v5393 = vpack.c.b16 %v5065, %v5061
      %v5394 = vpack.c.b16 %v5066, %v5062
      %v5395 = vpack.c.b16 %v5067, %v5063
      %v5396 = vpack.c.b16 %v5068, %v5064
      %v5397 = vpack.c.b16 %v5073, %v5069
      %v5398 = vpack.c.b16 %v5074, %v5070
      %v5399 = vpack.c.b16 %v5075, %v5071
      %v5400 = vpack.c.b16 %v5076, %v5072
      %v5401 = vpack.c.b16 %v5081, %v5077
      %v5402 = vpack.c.b16 %v5082, %v5078
      %v5403 = vpack.c.b16 %v5083, %v5079
      %v5404 = vpack.c.b16 %v5084, %v5080
      %5725 = vmatprep.subr.bf16.mxu0 %v5086
      %5726 = vmatpush1.bf16.msra.mxu0 %v5085
      %5727 = vmatprep.subr.bf16.mxu0 %v5090
      %5728 = vmatpush1.bf16.msra.mxu0 %v5089
      %5729 = vmatprep.subr.bf16.mxu0 %v5094
      %5730 = vmatpush1.bf16.msra.mxu0 %v5093
      %5731 = vmatprep.subr.bf16.mxu0 %v5098
      %5732 = vmatpush1.bf16.msra.mxu0 %v5097
      %5733 = vmatprep.subr.bf16.mxu0 %v5102
      %5734 = vmatpush1.bf16.msra.mxu0 %v5101
      %5735 = vmatprep.subr.bf16.mxu0 %v5106
      %5736 = vmatpush1.bf16.msra.mxu0 %v5105
      %5737 = vmatprep.subr.bf16.mxu0 %v5110
      %5738 = vmatpush1.bf16.msra.mxu0 %v5109
      %5739 = vmatprep.subr.bf16.mxu0 %v5114
      %5740 = vmatpush1.bf16.msra.mxu0 %v5113
      %5741 = vmatprep.subr.bf16.mxu0 %v5118
      %5742 = vmatpush1.bf16.msra.mxu0 %v5117
      %5743 = vmatprep.subr.bf16.mxu0 %v5122
      %5744 = vmatpush1.bf16.msra.mxu0 %v5121
      %5745 = vmatprep.subr.bf16.mxu0 %v5126
      %5746 = vmatpush1.bf16.msra.mxu0 %v5125
      %5747 = vmatprep.subr.bf16.mxu0 %v5130
      %5748 = vmatpush1.bf16.msra.mxu0 %v5129
      %5749 = vmatprep.subr.bf16.mxu0 %v5134
      %5750 = vmatpush1.bf16.msra.mxu0 %v5133
      %5751 = vmatprep.subr.bf16.mxu0 %v5138
      %5752 = vmatpush1.bf16.msra.mxu0 %v5137
      %5753 = vmatprep.subr.bf16.mxu0 %v5142
      %5754 = vmatpush1.bf16.msra.mxu0 %v5141
      %5755 = vmatprep.subr.bf16.mxu0 %v5146
      %5756 = vmatpush1.bf16.msra.mxu0 %v5145
      %5757 = vmatprep.mubr.bf16.mxu0 %v1456
      %5758 = vmatmul.mubr.bf16.gmra.mrb[0].mxu0 %v1455
      %v5759 = vpop.f32.mrb[0].mxu0
      %v5760 = vadd.f32 %v3914, %v5759
      %v5761 = vpop.f32.mrb[0].mxu0
      %v5762 = vadd.f32 %v3916, %v5761
      %v5763 = vpop.f32.mrb[0].mxu0
      %v5764 = vpop.f32.mrb[0].mxu0
      %5765 = vdwg.mxu0
      %5766 = vmatprep.subr.bf16.mxu0 %v5150
      %5767 = vmatpush1.bf16.msra.mxu0 %v5149
      %5768 = vmatprep.subr.bf16.mxu0 %v5154
      %5769 = vmatpush1.bf16.msra.mxu0 %v5153
      %5770 = vmatprep.subr.bf16.mxu0 %v5158
      %5771 = vmatpush1.bf16.msra.mxu0 %v5157
      %5772 = vmatprep.subr.bf16.mxu0 %v5162
      %5773 = vmatpush1.bf16.msra.mxu0 %v5161
      %5774 = vmatprep.subr.bf16.mxu0 %v5166
      %5775 = vmatpush1.bf16.msra.mxu0 %v5165
      %5776 = vmatprep.subr.bf16.mxu0 %v5170
      %5777 = vmatpush1.bf16.msra.mxu0 %v5169
      %5778 = vmatprep.subr.bf16.mxu0 %v5174
      %5779 = vmatpush1.bf16.msra.mxu0 %v5173
      %5780 = vmatprep.subr.bf16.mxu0 %v5178
      %5781 = vmatpush1.bf16.msra.mxu0 %v5177
      %5782 = vmatprep.subr.bf16.mxu0 %v5182
      %5783 = vmatpush1.bf16.msra.mxu0 %v5181
      %5784 = vmatprep.subr.bf16.mxu0 %v5186
      %5785 = vmatpush1.bf16.msra.mxu0 %v5185
      %5786 = vmatprep.subr.bf16.mxu0 %v5190
      %5787 = vmatpush1.bf16.msra.mxu0 %v5189
      %5788 = vmatprep.subr.bf16.mxu0 %v5194
      %5789 = vmatpush1.bf16.msra.mxu0 %v5193
      %5790 = vmatprep.subr.bf16.mxu0 %v5198
      %5791 = vmatpush1.bf16.msra.mxu0 %v5197
      %5792 = vmatprep.subr.bf16.mxu0 %v5202
      %5793 = vmatpush1.bf16.msra.mxu0 %v5201
      %5794 = vmatprep.subr.bf16.mxu0 %v5206
      %5795 = vmatpush1.bf16.msra.mxu0 %v5205
      %5796 = vmatprep.subr.bf16.mxu0 %v5210
      %5797 = vmatpush1.bf16.msra.mxu0 %v5209
      %5798 = vmatprep.mubr.bf16.mxu0 %v1458
      %5799 = vmatmul.mubr.bf16.gmra.mrb[0].mxu0 %v1457
      %v5800 = vpop.f32.mrb[0].mxu0
      %v5801 = vadd.f32 %v5760, %v5800
      %v5802 = vpop.f32.mrb[0].mxu0
      %v5803 = vadd.f32 %v5762, %v5802
      %v5804 = vpop.f32.mrb[0].mxu0
      %v5805 = vpop.f32.mrb[0].mxu0
      %5806 = vdwg.mxu0
      %5807 = vmatprep.subr.bf16.mxu0 %v5214
      %5808 = vmatpush1.bf16.msra.mxu0 %v5213
      %5809 = vmatprep.subr.bf16.mxu0 %v5218
      %5810 = vmatpush1.bf16.msra.mxu0 %v5217
      %5811 = vmatprep.subr.bf16.mxu0 %v5222
      %5812 = vmatpush1.bf16.msra.mxu0 %v5221
      %5813 = vmatprep.subr.bf16.mxu0 %v5226
      %5814 = vmatpush1.bf16.msra.mxu0 %v5225
      %5815 = vmatprep.subr.bf16.mxu0 %v5230
      %5816 = vmatpush1.bf16.msra.mxu0 %v5229
      %5817 = vmatprep.subr.bf16.mxu0 %v5234
      %5818 = vmatpush1.bf16.msra.mxu0 %v5233
      %5819 = vmatprep.subr.bf16.mxu0 %v5238
      %5820 = vmatpush1.bf16.msra.mxu0 %v5237
      %5821 = vmatprep.subr.bf16.mxu0 %v5242
      %5822 = vmatpush1.bf16.msra.mxu0 %v5241
      %5823 = vmatprep.subr.bf16.mxu0 %v5246
      %5824 = vmatpush1.bf16.msra.mxu0 %v5245
      %5825 = vmatprep.subr.bf16.mxu0 %v5250
      %5826 = vmatpush1.bf16.msra.mxu0 %v5249
      %5827 = vmatprep.subr.bf16.mxu0 %v5254
      %5828 = vmatpush1.bf16.msra.mxu0 %v5253
      %5829 = vmatprep.subr.bf16.mxu0 %v5258
      %5830 = vmatpush1.bf16.msra.mxu0 %v5257
      %5831 = vmatprep.subr.bf16.mxu0 %v5262
      %5832 = vmatpush1.bf16.msra.mxu0 %v5261
      %5833 = vmatprep.subr.bf16.mxu0 %v5266
      %5834 = vmatpush1.bf16.msra.mxu0 %v5265
      %5835 = vmatprep.subr.bf16.mxu0 %v5270
      %5836 = vmatpush1.bf16.msra.mxu0 %v5269
      %5837 = vmatprep.subr.bf16.mxu0 %v5274
      %5838 = vmatpush1.bf16.msra.mxu0 %v5273
      %5839 = vmatprep.mubr.bf16.mxu0 %v1460
      %5840 = vmatmul.mubr.bf16.gmra.mrb[0].mxu0 %v1459
      %v5841 = vpop.f32.mrb[0].mxu0
      %v5842 = vadd.f32 %v5801, %v5841
      %v5843 = vpop.f32.mrb[0].mxu0
      %v5844 = vadd.f32 %v5803, %v5843
      %v5845 = vpop.f32.mrb[0].mxu0
      %v5846 = vpop.f32.mrb[0].mxu0
      %5847 = vdwg.mxu0
      %5848 = vmatprep.subr.bf16.mxu0 %v5278
      %5849 = vmatpush1.bf16.msra.mxu0 %v5277
      %5850 = vmatprep.subr.bf16.mxu0 %v5282
      %5851 = vmatpush1.bf16.msra.mxu0 %v5281
      %5852 = vmatprep.subr.bf16.mxu0 %v5286
      %5853 = vmatpush1.bf16.msra.mxu0 %v5285
      %5854 = vmatprep.subr.bf16.mxu0 %v5290
      %5855 = vmatpush1.bf16.msra.mxu0 %v5289
      %5856 = vmatprep.subr.bf16.mxu0 %v5294
      %5857 = vmatpush1.bf16.msra.mxu0 %v5293
      %5858 = vmatprep.subr.bf16.mxu0 %v5298
      %5859 = vmatpush1.bf16.msra.mxu0 %v5297
      %5860 = vmatprep.subr.bf16.mxu0 %v5302
      %5861 = vmatpush1.bf16.msra.mxu0 %v5301
      %5862 = vmatprep.subr.bf16.mxu0 %v5306
      %5863 = vmatpush1.bf16.msra.mxu0 %v5305
      %5864 = vmatprep.subr.bf16.mxu0 %v5310
      %5865 = vmatpush1.bf16.msra.mxu0 %v5309
      %5866 = vmatprep.subr.bf16.mxu0 %v5314
      %5867 = vmatpush1.bf16.msra.mxu0 %v5313
      %5868 = vmatprep.subr.bf16.mxu0 %v5318
      %5869 = vmatpush1.bf16.msra.mxu0 %v5317
      %5870 = vmatprep.subr.bf16.mxu0 %v5322
      %5871 = vmatpush1.bf16.msra.mxu0 %v5321
      %5872 = vmatprep.subr.bf16.mxu0 %v5326
      %5873 = vmatpush1.bf16.msra.mxu0 %v5325
      %5874 = vmatprep.subr.bf16.mxu0 %v5330
      %5875 = vmatpush1.bf16.msra.mxu0 %v5329
      %5876 = vmatprep.subr.bf16.mxu0 %v5334
      %5877 = vmatpush1.bf16.msra.mxu0 %v5333
      %5878 = vmatprep.subr.bf16.mxu0 %v5338
      %5879 = vmatpush1.bf16.msra.mxu0 %v5337
      %5880 = vmatprep.mubr.bf16.mxu0 %v1462
      %5881 = vmatmul.mubr.bf16.gmra.mrb[0].mxu0 %v1461
      %v5882 = vpop.f32.mrb[0].mxu0
      %v5883 = vadd.f32 %v5842, %v5882
      %v5884 = vpop.f32.mrb[0].mxu0
      %v5885 = vadd.f32 %v5844, %v5884
      %v5886 = vpop.f32.mrb[0].mxu0
      %v5887 = vpop.f32.mrb[0].mxu0
      %5888 = vdwg.mxu0
      %5889 = vmatprep.subr.bf16.mxu0 %v5342
      %5890 = vmatpush1.bf16.msra.mxu0 %v5341
      %5891 = vmatprep.subr.bf16.mxu0 %v5346
      %5892 = vmatpush1.bf16.msra.mxu0 %v5345
      %5893 = vmatprep.subr.bf16.mxu0 %v5350
      %5894 = vmatpush1.bf16.msra.mxu0 %v5349
      %5895 = vmatprep.subr.bf16.mxu0 %v5354
      %5896 = vmatpush1.bf16.msra.mxu0 %v5353
      %5897 = vmatprep.subr.bf16.mxu0 %v5358
      %5898 = vmatpush1.bf16.msra.mxu0 %v5357
      %5899 = vmatprep.subr.bf16.mxu0 %v5362
      %5900 = vmatpush1.bf16.msra.mxu0 %v5361
      %5901 = vmatprep.subr.bf16.mxu0 %v5366
      %5902 = vmatpush1.bf16.msra.mxu0 %v5365
      %5903 = vmatprep.subr.bf16.mxu0 %v5370
      %5904 = vmatpush1.bf16.msra.mxu0 %v5369
      %5905 = vmatprep.subr.bf16.mxu0 %v5374
      %5906 = vmatpush1.bf16.msra.mxu0 %v5373
      %5907 = vmatprep.subr.bf16.mxu0 %v5378
      %5908 = vmatpush1.bf16.msra.mxu0 %v5377
      %5909 = vmatprep.subr.bf16.mxu0 %v5382
      %5910 = vmatpush1.bf16.msra.mxu0 %v5381
      %5911 = vmatprep.subr.bf16.mxu0 %v5386
      %5912 = vmatpush1.bf16.msra.mxu0 %v5385
      %5913 = vmatprep.subr.bf16.mxu0 %v5390
      %5914 = vmatpush1.bf16.msra.mxu0 %v5389
      %5915 = vmatprep.subr.bf16.mxu0 %v5394
      %5916 = vmatpush1.bf16.msra.mxu0 %v5393
      %5917 = vmatprep.subr.bf16.mxu0 %v5398
      %5918 = vmatpush1.bf16.msra.mxu0 %v5397
      %5919 = vmatprep.subr.bf16.mxu0 %v5402
      %5920 = vmatpush1.bf16.msra.mxu0 %v5401
      %5921 = vmatprep.mubr.bf16.mxu0 %v1464
      %5922 = vmatmul.mubr.bf16.gmra.mrb[0].mxu0 %v1463
      %v5923 = vpop.f32.mrb[0].mxu0
      %v5924 = vadd.f32 %v5883, %v5923
      %v5925 = vpop.f32.mrb[0].mxu0
      %v5926 = vadd.f32 %v5885, %v5925
      %v5927 = vpop.f32.mrb[0].mxu0
      %v5928 = vpop.f32.mrb[0].mxu0
      %5929 = vdwg.mxu0
      %5930 = vmatprep.subr.bf16.mxu0 %v5088
      %5931 = vmatpush1.bf16.msra.mxu0 %v5087
      %5932 = vmatprep.subr.bf16.mxu0 %v5092
      %5933 = vmatpush1.bf16.msra.mxu0 %v5091
      %5934 = vmatprep.subr.bf16.mxu0 %v5096
      %5935 = vmatpush1.bf16.msra.mxu0 %v5095
      %5936 = vmatprep.subr.bf16.mxu0 %v5100
      %5937 = vmatpush1.bf16.msra.mxu0 %v5099
      %5938 = vmatprep.subr.bf16.mxu0 %v5104
      %5939 = vmatpush1.bf16.msra.mxu0 %v5103
      %5940 = vmatprep.subr.bf16.mxu0 %v5108
      %5941 = vmatpush1.bf16.msra.mxu0 %v5107
      %5942 = vmatprep.subr.bf16.mxu0 %v5112
      %5943 = vmatpush1.bf16.msra.mxu0 %v5111
      %5944 = vmatprep.subr.bf16.mxu0 %v5116
      %5945 = vmatpush1.bf16.msra.mxu0 %v5115
      %5946 = vmatprep.subr.bf16.mxu0 %v5120
      %5947 = vmatpush1.bf16.msra.mxu0 %v5119
      %5948 = vmatprep.subr.bf16.mxu0 %v5124
      %5949 = vmatpush1.bf16.msra.mxu0 %v5123
      %5950 = vmatprep.subr.bf16.mxu0 %v5128
      %5951 = vmatpush1.bf16.msra.mxu0 %v5127
      %5952 = vmatprep.subr.bf16.mxu0 %v5132
      %5953 = vmatpush1.bf16.msra.mxu0 %v5131
      %5954 = vmatprep.subr.bf16.mxu0 %v5136
      %5955 = vmatpush1.bf16.msra.mxu0 %v5135
      %5956 = vmatprep.subr.bf16.mxu0 %v5140
      %5957 = vmatpush1.bf16.msra.mxu0 %v5139
      %5958 = vmatprep.subr.bf16.mxu0 %v5144
      %5959 = vmatpush1.bf16.msra.mxu0 %v5143
      %5960 = vmatprep.subr.bf16.mxu0 %v5148
      %5961 = vmatpush1.bf16.msra.mxu0 %v5147
      %5962 = vmatprep.mubr.bf16.mxu0 %v1456
      %5963 = vmatmul.mubr.bf16.gmra.mrb[0].mxu0 %v1455
      %v5964 = vpop.f32.mrb[0].mxu0
      %v5965 = vadd.f32 %v4119, %v5964
      %v5966 = vpop.f32.mrb[0].mxu0
      %v5967 = vadd.f32 %v4121, %v5966
      %v5968 = vpop.f32.mrb[0].mxu0
      %v5969 = vpop.f32.mrb[0].mxu0
      %5970 = vdwg.mxu0
      %5971 = vmatprep.subr.bf16.mxu0 %v5152
      %5972 = vmatpush1.bf16.msra.mxu0 %v5151
      %5973 = vmatprep.subr.bf16.mxu0 %v5156
      %5974 = vmatpush1.bf16.msra.mxu0 %v5155
      %5975 = vmatprep.subr.bf16.mxu0 %v5160
      %5976 = vmatpush1.bf16.msra.mxu0 %v5159
      %5977 = vmatprep.subr.bf16.mxu0 %v5164
      %5978 = vmatpush1.bf16.msra.mxu0 %v5163
      %5979 = vmatprep.subr.bf16.mxu0 %v5168
      %5980 = vmatpush1.bf16.msra.mxu0 %v5167
      %5981 = vmatprep.subr.bf16.mxu0 %v5172
      %5982 = vmatpush1.bf16.msra.mxu0 %v5171
      %5983 = vmatprep.subr.bf16.mxu0 %v5176
      %5984 = vmatpush1.bf16.msra.mxu0 %v5175
      %5985 = vmatprep.subr.bf16.mxu0 %v5180
      %5986 = vmatpush1.bf16.msra.mxu0 %v5179
      %5987 = vmatprep.subr.bf16.mxu0 %v5184
      %5988 = vmatpush1.bf16.msra.mxu0 %v5183
      %5989 = vmatprep.subr.bf16.mxu0 %v5188
      %5990 = vmatpush1.bf16.msra.mxu0 %v5187
      %5991 = vmatprep.subr.bf16.mxu0 %v5192
      %5992 = vmatpush1.bf16.msra.mxu0 %v5191
      %5993 = vmatprep.subr.bf16.mxu0 %v5196
      %5994 = vmatpush1.bf16.msra.mxu0 %v5195
      %5995 = vmatprep.subr.bf16.mxu0 %v5200
      %5996 = vmatpush1.bf16.msra.mxu0 %v5199
      %5997 = vmatprep.subr.bf16.mxu0 %v5204
      %5998 = vmatpush1.bf16.msra.mxu0 %v5203
      %5999 = vmatprep.subr.bf16.mxu0 %v5208
      %6000 = vmatpush1.bf16.msra.mxu0 %v5207
      %6001 = vmatprep.subr.bf16.mxu0 %v5212
      %6002 = vmatpush1.bf16.msra.mxu0 %v5211
      %6003 = vmatprep.mubr.bf16.mxu0 %v1458
      %6004 = vmatmul.mubr.bf16.gmra.mrb[0].mxu0 %v1457
      %v6005 = vpop.f32.mrb[0].mxu0
      %v6006 = vadd.f32 %v5965, %v6005
      %v6007 = vpop.f32.mrb[0].mxu0
      %v6008 = vadd.f32 %v5967, %v6007
      %v6009 = vpop.f32.mrb[0].mxu0
      %v6010 = vpop.f32.mrb[0].mxu0
      %6011 = vdwg.mxu0
      %6012 = vmatprep.subr.bf16.mxu0 %v5216
      %6013 = vmatpush1.bf16.msra.mxu0 %v5215
      %6014 = vmatprep.subr.bf16.mxu0 %v5220
      %6015 = vmatpush1.bf16.msra.mxu0 %v5219
      %6016 = vmatprep.subr.bf16.mxu0 %v5224
      %6017 = vmatpush1.bf16.msra.mxu0 %v5223
      %6018 = vmatprep.subr.bf16.mxu0 %v5228
      %6019 = vmatpush1.bf16.msra.mxu0 %v5227
      %6020 = vmatprep.subr.bf16.mxu0 %v5232
      %6021 = vmatpush1.bf16.msra.mxu0 %v5231
      %6022 = vmatprep.subr.bf16.mxu0 %v5236
      %6023 = vmatpush1.bf16.msra.mxu0 %v5235
      %6024 = vmatprep.subr.bf16.mxu0 %v5240
      %6025 = vmatpush1.bf16.msra.mxu0 %v5239
      %6026 = vmatprep.subr.bf16.mxu0 %v5244
      %6027 = vmatpush1.bf16.msra.mxu0 %v5243
      %6028 = vmatprep.subr.bf16.mxu0 %v5248
      %6029 = vmatpush1.bf16.msra.mxu0 %v5247
      %6030 = vmatprep.subr.bf16.mxu0 %v5252
      %6031 = vmatpush1.bf16.msra.mxu0 %v5251
      %6032 = vmatprep.subr.bf16.mxu0 %v5256
      %6033 = vmatpush1.bf16.msra.mxu0 %v5255
      %6034 = vmatprep.subr.bf16.mxu0 %v5260
      %6035 = vmatpush1.bf16.msra.mxu0 %v5259
      %6036 = vmatprep.subr.bf16.mxu0 %v5264
      %6037 = vmatpush1.bf16.msra.mxu0 %v5263
      %6038 = vmatprep.subr.bf16.mxu0 %v5268
      %6039 = vmatpush1.bf16.msra.mxu0 %v5267
      %6040 = vmatprep.subr.bf16.mxu0 %v5272
      %6041 = vmatpush1.bf16.msra.mxu0 %v5271
      %6042 = vmatprep.subr.bf16.mxu0 %v5276
      %6043 = vmatpush1.bf16.msra.mxu0 %v5275
      %6044 = vmatprep.mubr.bf16.mxu0 %v1460
      %6045 = vmatmul.mubr.bf16.gmra.mrb[0].mxu0 %v1459
      %v6046 = vpop.f32.mrb[0].mxu0
      %v6047 = vadd.f32 %v6006, %v6046
      %v6048 = vpop.f32.mrb[0].mxu0
      %v6049 = vadd.f32 %v6008, %v6048
      %v6050 = vpop.f32.mrb[0].mxu0
      %v6051 = vpop.f32.mrb[0].mxu0
      %6052 = vdwg.mxu0
      %6053 = vmatprep.subr.bf16.mxu0 %v5280
      %6054 = vmatpush1.bf16.msra.mxu0 %v5279
      %6055 = vmatprep.subr.bf16.mxu0 %v5284
      %6056 = vmatpush1.bf16.msra.mxu0 %v5283
      %6057 = vmatprep.subr.bf16.mxu0 %v5288
      %6058 = vmatpush1.bf16.msra.mxu0 %v5287
      %6059 = vmatprep.subr.bf16.mxu0 %v5292
      %6060 = vmatpush1.bf16.msra.mxu0 %v5291
      %6061 = vmatprep.subr.bf16.mxu0 %v5296
      %6062 = vmatpush1.bf16.msra.mxu0 %v5295
      %6063 = vmatprep.subr.bf16.mxu0 %v5300
      %6064 = vmatpush1.bf16.msra.mxu0 %v5299
      %6065 = vmatprep.subr.bf16.mxu0 %v5304
      %6066 = vmatpush1.bf16.msra.mxu0 %v5303
      %6067 = vmatprep.subr.bf16.mxu0 %v5308
      %6068 = vmatpush1.bf16.msra.mxu0 %v5307
      %6069 = vmatprep.subr.bf16.mxu0 %v5312
      %6070 = vmatpush1.bf16.msra.mxu0 %v5311
      %6071 = vmatprep.subr.bf16.mxu0 %v5316
      %6072 = vmatpush1.bf16.msra.mxu0 %v5315
      %6073 = vmatprep.subr.bf16.mxu0 %v5320
      %6074 = vmatpush1.bf16.msra.mxu0 %v5319
      %6075 = vmatprep.subr.bf16.mxu0 %v5324
      %6076 = vmatpush1.bf16.msra.mxu0 %v5323
      %6077 = vmatprep.subr.bf16.mxu0 %v5328
      %6078 = vmatpush1.bf16.msra.mxu0 %v5327
      %6079 = vmatprep.subr.bf16.mxu0 %v5332
      %6080 = vmatpush1.bf16.msra.mxu0 %v5331
      %6081 = vmatprep.subr.bf16.mxu0 %v5336
      %6082 = vmatpush1.bf16.msra.mxu0 %v5335
      %6083 = vmatprep.subr.bf16.mxu0 %v5340
      %6084 = vmatpush1.bf16.msra.mxu0 %v5339
      %6085 = vmatprep.mubr.bf16.mxu0 %v1462
      %6086 = vmatmul.mubr.bf16.gmra.mrb[0].mxu0 %v1461
      %v6087 = vpop.f32.mrb[0].mxu0
      %v6088 = vadd.f32 %v6047, %v6087
      %v6089 = vpop.f32.mrb[0].mxu0
      %v6090 = vadd.f32 %v6049, %v6089
      %v6091 = vpop.f32.mrb[0].mxu0
      %v6092 = vpop.f32.mrb[0].mxu0
      %6093 = vdwg.mxu0
      %6094 = vmatprep.subr.bf16.mxu0 %v5344
      %6095 = vmatpush1.bf16.msra.mxu0 %v5343
      %6096 = vmatprep.subr.bf16.mxu0 %v5348
      %6097 = vmatpush1.bf16.msra.mxu0 %v5347
      %6098 = vmatprep.subr.bf16.mxu0 %v5352
      %6099 = vmatpush1.bf16.msra.mxu0 %v5351
      %6100 = vmatprep.subr.bf16.mxu0 %v5356
      %6101 = vmatpush1.bf16.msra.mxu0 %v5355
      %6102 = vmatprep.subr.bf16.mxu0 %v5360
      %6103 = vmatpush1.bf16.msra.mxu0 %v5359
      %6104 = vmatprep.subr.bf16.mxu0 %v5364
      %6105 = vmatpush1.bf16.msra.mxu0 %v5363
      %6106 = vmatprep.subr.bf16.mxu0 %v5368
      %6107 = vmatpush1.bf16.msra.mxu0 %v5367
      %6108 = vmatprep.subr.bf16.mxu0 %v5372
      %6109 = vmatpush1.bf16.msra.mxu0 %v5371
      %6110 = vmatprep.subr.bf16.mxu0 %v5376
      %6111 = vmatpush1.bf16.msra.mxu0 %v5375
      %6112 = vmatprep.subr.bf16.mxu0 %v5380
      %6113 = vmatpush1.bf16.msra.mxu0 %v5379
      %6114 = vmatprep.subr.bf16.mxu0 %v5384
      %6115 = vmatpush1.bf16.msra.mxu0 %v5383
      %6116 = vmatprep.subr.bf16.mxu0 %v5388
      %6117 = vmatpush1.bf16.msra.mxu0 %v5387
      %6118 = vmatprep.subr.bf16.mxu0 %v5392
      %6119 = vmatpush1.bf16.msra.mxu0 %v5391
      %6120 = vmatprep.subr.bf16.mxu0 %v5396
      %6121 = vmatpush1.bf16.msra.mxu0 %v5395
      %6122 = vmatprep.subr.bf16.mxu0 %v5400
      %6123 = vmatpush1.bf16.msra.mxu0 %v5399
      %6124 = vmatprep.subr.bf16.mxu0 %v5404
      %6125 = vmatpush1.bf16.msra.mxu0 %v5403
      %6126 = vmatprep.mubr.bf16.mxu0 %v1464
      %6127 = vmatmul.mubr.bf16.gmra.mrb[0].mxu0 %v1463
      %v6128 = vpop.f32.mrb[0].mxu0
      %v6129 = vadd.f32 %v6088, %v6128
      %v6130 = vpop.f32.mrb[0].mxu0
      %v6131 = vadd.f32 %v6090, %v6130
      %v6132 = vpop.f32.mrb[0].mxu0
      %v6133 = vpop.f32.mrb[0].mxu0
      %6134 = vdwg.mxu0
      %v6135 = vld [vmem:[%s10] sm:$0xf]
      %v6137 = vlaneseq
      %v6138 = vshrl.u32 %v6137, 7
      %v6139 = vsub.s32 0, %v6138
      %v6140 = vrot.slane %v6135, %v6139
      %v6141 = vlaneseq
      %v6142 = vshrl.u32 %v6141, 7
      %v6143 = vsub.s32 1, %v6142
      %v6144 = vrot.slane %v6135, %v6143
      %v6145 = vlaneseq
      %v6146 = vshrl.u32 %v6145, 7
      %v6147 = vsub.s32 2, %v6146
      %v6148 = vrot.slane %v6135, %v6147
      %v6149 = vlaneseq
      %v6150 = vshrl.u32 %v6149, 7
      %v6151 = vsub.s32 3, %v6150
      %v6152 = vrot.slane %v6135, %v6151
      %v6157 = vadd.f32 %v5924, %v6140
      %v6158 = vadd.f32 %v5926, %v6144
      %v6159 = vadd.f32 %v6129, %v6148
      %v6160 = vadd.f32 %v6131, %v6152
      %v6161 = vmax.f32 %v6157, 0.0
      %v6162 = vmax.f32 %v6158, 0.0
      %v6163 = vmax.f32 %v6159, 0.0
      %v6164 = vmax.f32 %v6160, 0.0
      %v6165 = vpack.c.bf16 %v6161, %v6161
      %v6166 = vpack.c.bf16 %v6162, %v6162
      %v6167 = vpack.c.bf16 %v6163, %v6163
      %v6168 = vpack.c.bf16 %v6164, %v6164
      %v6169 = vld [vmem:[%s11] sm:$0xf]
      %v6170 = vld [vmem:[%s11 + $0x4] sm:$0xf]
      %v6171 = vld [vmem:[%s11 + $0x8] sm:$0xf]
      %v6172 = vld [vmem:[%s11 + $0xc] sm:$0xf]
      %v6173 = vld [vmem:[%s11 + $0x10] sm:$0xf]
      %v6174 = vld [vmem:[%s11 + $0x14] sm:$0xf]
      %v6175 = vld [vmem:[%s11 + $0x18] sm:$0xf]
      %v6176 = vld [vmem:[%s11 + $0x1c] sm:$0xf]
      %v6177 = vld [vmem:[%s11 + $0x20] sm:$0xf]
      %v6178 = vld [vmem:[%s11 + $0x24] sm:$0xf]
      %v6179 = vld [vmem:[%s11 + $0x28] sm:$0xf]
      %v6180 = vld [vmem:[%s11 + $0x2c] sm:$0xf]
      %v6181 = vld [vmem:[%s11 + $0x30] sm:$0xf]
      %v6182 = vld [vmem:[%s11 + $0x34] sm:$0xf]
      %v6183 = vld [vmem:[%s11 + $0x38] sm:$0xf]
      %v6184 = vld [vmem:[%s11 + $0x3c] sm:$0xf]
      %v6185 = vld [vmem:[%s11 + $0x40] sm:$0xf]
      %v6186 = vld [vmem:[%s11 + $0x44] sm:$0xf]
      %v6187 = vld [vmem:[%s11 + $0x48] sm:$0xf]
      %v6188 = vld [vmem:[%s11 + $0x4c] sm:$0xf]
      %v6189 = vld [vmem:[%s11 + $0x50] sm:$0xf]
      %v6190 = vld [vmem:[%s11 + $0x54] sm:$0xf]
      %v6191 = vld [vmem:[%s11 + $0x58] sm:$0xf]
      %v6192 = vld [vmem:[%s11 + $0x5c] sm:$0xf]
      %v6193 = vld [vmem:[%s11 + $0x60] sm:$0xf]
      %v6194 = vld [vmem:[%s11 + $0x64] sm:$0xf]
      %v6195 = vld [vmem:[%s11 + $0x68] sm:$0xf]
      %v6196 = vld [vmem:[%s11 + $0x6c] sm:$0xf]
      %v6197 = vld [vmem:[%s11 + $0x70] sm:$0xf]
      %v6198 = vld [vmem:[%s11 + $0x74] sm:$0xf]
      %v6199 = vld [vmem:[%s11 + $0x78] sm:$0xf]
      %v6200 = vld [vmem:[%s11 + $0x7c] sm:$0xf]
      %v6201 = vld [vmem:[%s11 + $0x80] sm:$0xf]
      %v6202 = vld [vmem:[%s11 + $0x84] sm:$0xf]
      %v6203 = vld [vmem:[%s11 + $0x88] sm:$0xf]
      %v6204 = vld [vmem:[%s11 + $0x8c] sm:$0xf]
      %v6205 = vld [vmem:[%s11 + $0x90] sm:$0xf]
      %v6206 = vld [vmem:[%s11 + $0x94] sm:$0xf]
      %v6207 = vld [vmem:[%s11 + $0x98] sm:$0xf]
      %v6208 = vld [vmem:[%s11 + $0x9c] sm:$0xf]
      %v6209 = vld [vmem:[%s11 + $0xa0] sm:$0xf]
      %v6210 = vld [vmem:[%s11 + $0xa4] sm:$0xf]
      %v6211 = vld [vmem:[%s11 + $0xa8] sm:$0xf]
      %v6212 = vld [vmem:[%s11 + $0xac] sm:$0xf]
      %v6213 = vld [vmem:[%s11 + $0xb0] sm:$0xf]
      %v6214 = vld [vmem:[%s11 + $0xb4] sm:$0xf]
      %v6215 = vld [vmem:[%s11 + $0xb8] sm:$0xf]
      %v6216 = vld [vmem:[%s11 + $0xbc] sm:$0xf]
      %v6217 = vld [vmem:[%s11 + $0xc0] sm:$0xf]
      %v6218 = vld [vmem:[%s11 + $0xc4] sm:$0xf]
      %v6219 = vld [vmem:[%s11 + $0xc8] sm:$0xf]
      %v6220 = vld [vmem:[%s11 + $0xcc] sm:$0xf]
      %v6221 = vld [vmem:[%s11 + $0xd0] sm:$0xf]
      %v6222 = vld [vmem:[%s11 + $0xd4] sm:$0xf]
      %v6223 = vld [vmem:[%s11 + $0xd8] sm:$0xf]
      %v6224 = vld [vmem:[%s11 + $0xdc] sm:$0xf]
      %v6225 = vld [vmem:[%s11 + $0xe0] sm:$0xf]
      %v6226 = vld [vmem:[%s11 + $0xe4] sm:$0xf]
      %v6227 = vld [vmem:[%s11 + $0xe8] sm:$0xf]
      %v6228 = vld [vmem:[%s11 + $0xec] sm:$0xf]
      %v6229 = vld [vmem:[%s11 + $0xf0] sm:$0xf]
      %v6230 = vld [vmem:[%s11 + $0xf4] sm:$0xf]
      %v6231 = vld [vmem:[%s11 + $0xf8] sm:$0xf]
      %v6232 = vld [vmem:[%s11 + $0xfc] sm:$0xf]
      %v6233 = vld [vmem:[%s12] sm:$0x1]
      %v6235 = vlaneseq
      %v6236 = vshrl.u32 %v6235, 7
      %v6237 = vsub.s32 0, %v6236
      %v6238 = vrot.slane %v6233, %v6237
      %v6304 = vunpack.c.l.b16 %v6169
      %v6305 = vunpack.c.l.b16 %v6170
      %v6306 = vunpack.c.l.b16 %v6171
      %v6307 = vunpack.c.l.b16 %v6172
      %v6308 = vunpack.c.l.b16 %v6173
      %v6309 = vunpack.c.l.b16 %v6174
      %v6310 = vunpack.c.l.b16 %v6175
      %v6311 = vunpack.c.l.b16 %v6176
      %v6312 = vunpack.c.l.b16 %v6177
      %v6313 = vunpack.c.l.b16 %v6178
      %v6314 = vunpack.c.l.b16 %v6179
      %v6315 = vunpack.c.l.b16 %v6180
      %v6316 = vunpack.c.l.b16 %v6181
      %v6317 = vunpack.c.l.b16 %v6182
      %v6318 = vunpack.c.l.b16 %v6183
      %v6319 = vunpack.c.l.b16 %v6184
      %v6320 = vunpack.c.l.b16 %v6185
      %v6321 = vunpack.c.l.b16 %v6186
      %v6322 = vunpack.c.l.b16 %v6187
      %v6323 = vunpack.c.l.b16 %v6188
      %v6324 = vunpack.c.l.b16 %v6189
      %v6325 = vunpack.c.l.b16 %v6190
      %v6326 = vunpack.c.l.b16 %v6191
      %v6327 = vunpack.c.l.b16 %v6192
      %v6328 = vunpack.c.l.b16 %v6193
      %v6329 = vunpack.c.l.b16 %v6194
      %v6330 = vunpack.c.l.b16 %v6195
      %v6331 = vunpack.c.l.b16 %v6196
      %v6332 = vunpack.c.l.b16 %v6197
      %v6333 = vunpack.c.l.b16 %v6198
      %v6334 = vunpack.c.l.b16 %v6199
      %v6335 = vunpack.c.l.b16 %v6200
      %v6336 = vunpack.c.l.b16 %v6201
      %v6337 = vunpack.c.l.b16 %v6202
      %v6338 = vunpack.c.l.b16 %v6203
      %v6339 = vunpack.c.l.b16 %v6204
      %v6340 = vunpack.c.l.b16 %v6205
      %v6341 = vunpack.c.l.b16 %v6206
      %v6342 = vunpack.c.l.b16 %v6207
      %v6343 = vunpack.c.l.b16 %v6208
      %v6344 = vunpack.c.l.b16 %v6209
      %v6345 = vunpack.c.l.b16 %v6210
      %v6346 = vunpack.c.l.b16 %v6211
      %v6347 = vunpack.c.l.b16 %v6212
      %v6348 = vunpack.c.l.b16 %v6213
      %v6349 = vunpack.c.l.b16 %v6214
      %v6350 = vunpack.c.l.b16 %v6215
      %v6351 = vunpack.c.l.b16 %v6216
      %v6352 = vunpack.c.l.b16 %v6217
      %v6353 = vunpack.c.l.b16 %v6218
      %v6354 = vunpack.c.l.b16 %v6219
      %v6355 = vunpack.c.l.b16 %v6220
      %v6356 = vunpack.c.l.b16 %v6221
      %v6357 = vunpack.c.l.b16 %v6222
      %v6358 = vunpack.c.l.b16 %v6223
      %v6359 = vunpack.c.l.b16 %v6224
      %v6360 = vunpack.c.l.b16 %v6225
      %v6361 = vunpack.c.l.b16 %v6226
      %v6362 = vunpack.c.l.b16 %v6227
      %v6363 = vunpack.c.l.b16 %v6228
      %v6364 = vunpack.c.l.b16 %v6229
      %v6365 = vunpack.c.l.b16 %v6230
      %v6366 = vunpack.c.l.b16 %v6231
      %v6367 = vunpack.c.l.b16 %v6232
      %v6368 = vpack.c.b16 %v6305, %v6304
      %v6369 = vpack.c.b16 %v6307, %v6306
      %v6370 = vpack.c.b16 %v6309, %v6308
      %v6371 = vpack.c.b16 %v6311, %v6310
      %v6372 = vpack.c.b16 %v6313, %v6312
      %v6373 = vpack.c.b16 %v6315, %v6314
      %v6374 = vpack.c.b16 %v6317, %v6316
      %v6375 = vpack.c.b16 %v6319, %v6318
      %v6376 = vpack.c.b16 %v6321, %v6320
      %v6377 = vpack.c.b16 %v6323, %v6322
      %v6378 = vpack.c.b16 %v6325, %v6324
      %v6379 = vpack.c.b16 %v6327, %v6326
      %v6380 = vpack.c.b16 %v6329, %v6328
      %v6381 = vpack.c.b16 %v6331, %v6330
      %v6382 = vpack.c.b16 %v6333, %v6332
      %v6383 = vpack.c.b16 %v6335, %v6334
      %v6384 = vpack.c.b16 %v6337, %v6336
      %v6385 = vpack.c.b16 %v6339, %v6338
      %v6386 = vpack.c.b16 %v6341, %v6340
      %v6387 = vpack.c.b16 %v6343, %v6342
      %v6388 = vpack.c.b16 %v6345, %v6344
      %v6389 = vpack.c.b16 %v6347, %v6346
      %v6390 = vpack.c.b16 %v6349, %v6348
      %v6391 = vpack.c.b16 %v6351, %v6350
      %v6392 = vpack.c.b16 %v6353, %v6352
      %v6393 = vpack.c.b16 %v6355, %v6354
      %v6394 = vpack.c.b16 %v6357, %v6356
      %v6395 = vpack.c.b16 %v6359, %v6358
      %v6396 = vpack.c.b16 %v6361, %v6360
      %v6397 = vpack.c.b16 %v6363, %v6362
      %v6398 = vpack.c.b16 %v6365, %v6364
      %v6399 = vpack.c.b16 %v6367, %v6366
      %6432 = vmatprep.subr.bf16.mxu0 0
      %6433 = vmatpush1.bf16.msra.mxu0 %v6368
      %6434 = vmatprep.subr.bf16.mxu0 0
      %6435 = vmatpush1.bf16.msra.mxu0 %v6369
      %6436 = vmatprep.subr.bf16.mxu0 0
      %6437 = vmatpush1.bf16.msra.mxu0 %v6370
      %6438 = vmatprep.subr.bf16.mxu0 0
      %6439 = vmatpush1.bf16.msra.mxu0 %v6371
      %6440 = vmatprep.subr.bf16.mxu0 0
      %6441 = vmatpush1.bf16.msra.mxu0 %v6372
      %6442 = vmatprep.subr.bf16.mxu0 0
      %6443 = vmatpush1.bf16.msra.mxu0 %v6373
      %6444 = vmatprep.subr.bf16.mxu0 0
      %6445 = vmatpush1.bf16.msra.mxu0 %v6374
      %6446 = vmatprep.subr.bf16.mxu0 0
      %6447 = vmatpush1.bf16.msra.mxu0 %v6375
      %6448 = vmatprep.subr.bf16.mxu0 0
      %6449 = vmatpush1.bf16.msra.mxu0 %v6376
      %6450 = vmatprep.subr.bf16.mxu0 0
      %6451 = vmatpush1.bf16.msra.mxu0 %v6377
      %6452 = vmatprep.subr.bf16.mxu0 0
      %6453 = vmatpush1.bf16.msra.mxu0 %v6378
      %6454 = vmatprep.subr.bf16.mxu0 0
      %6455 = vmatpush1.bf16.msra.mxu0 %v6379
      %6456 = vmatprep.subr.bf16.mxu0 0
      %6457 = vmatpush1.bf16.msra.mxu0 %v6380
      %6458 = vmatprep.subr.bf16.mxu0 0
      %6459 = vmatpush1.bf16.msra.mxu0 %v6381
      %6460 = vmatprep.subr.bf16.mxu0 0
      %6461 = vmatpush1.bf16.msra.mxu0 %v6382
      %6462 = vmatprep.subr.bf16.mxu0 0
      %6463 = vmatpush1.bf16.msra.mxu0 %v6383
      %6464 = vmatprep.mubr.bf16.mxu0 %v6166
      %6465 = vmatmul.mubr.bf16.gmra.mrb[0].mxu0 %v6165
      %v6466 = vpop.f32.mrb[0].mxu0
      %v6467 = vadd.f32 %v6238, %v6466
      %v6468 = vpop.f32.mrb[0].mxu0
      %v6469 = vpop.f32.mrb[0].mxu0
      %v6470 = vpop.f32.mrb[0].mxu0
      %6471 = vdwg.mxu0
      %6472 = vmatprep.subr.bf16.mxu0 0
      %6473 = vmatpush1.bf16.msra.mxu0 %v6384
      %6474 = vmatprep.subr.bf16.mxu0 0
      %6475 = vmatpush1.bf16.msra.mxu0 %v6385
      %6476 = vmatprep.subr.bf16.mxu0 0
      %6477 = vmatpush1.bf16.msra.mxu0 %v6386
      %6478 = vmatprep.subr.bf16.mxu0 0
      %6479 = vmatpush1.bf16.msra.mxu0 %v6387
      %6480 = vmatprep.subr.bf16.mxu0 0
      %6481 = vmatpush1.bf16.msra.mxu0 %v6388
      %6482 = vmatprep.subr.bf16.mxu0 0
      %6483 = vmatpush1.bf16.msra.mxu0 %v6389
      %6484 = vmatprep.subr.bf16.mxu0 0
      %6485 = vmatpush1.bf16.msra.mxu0 %v6390
      %6486 = vmatprep.subr.bf16.mxu0 0
      %6487 = vmatpush1.bf16.msra.mxu0 %v6391
      %6488 = vmatprep.subr.bf16.mxu0 0
      %6489 = vmatpush1.bf16.msra.mxu0 %v6392
      %6490 = vmatprep.subr.bf16.mxu0 0
      %6491 = vmatpush1.bf16.msra.mxu0 %v6393
      %6492 = vmatprep.subr.bf16.mxu0 0
      %6493 = vmatpush1.bf16.msra.mxu0 %v6394
      %6494 = vmatprep.subr.bf16.mxu0 0
      %6495 = vmatpush1.bf16.msra.mxu0 %v6395
      %6496 = vmatprep.subr.bf16.mxu0 0
      %6497 = vmatpush1.bf16.msra.mxu0 %v6396
      %6498 = vmatprep.subr.bf16.mxu0 0
      %6499 = vmatpush1.bf16.msra.mxu0 %v6397
      %6500 = vmatprep.subr.bf16.mxu0 0
      %6501 = vmatpush1.bf16.msra.mxu0 %v6398
      %6502 = vmatprep.subr.bf16.mxu0 0
      %6503 = vmatpush1.bf16.msra.mxu0 %v6399
      %6504 = vmatprep.mubr.bf16.mxu0 %v6168
      %6505 = vmatmul.mubr.bf16.gmra.mrb[0].mxu0 %v6167
      %v6506 = vpop.f32.mrb[0].mxu0
      %v6507 = vadd.f32 %v6467, %v6506
      %v6508 = vpop.f32.mrb[0].mxu0
      %v6509 = vpop.f32.mrb[0].mxu0
      %v6510 = vpop.f32.mrb[0].mxu0
      %6511 = vdwg.mxu0
      %6512 = vst [vmem:[#allocation4] sm:$0x3] %v6507
    $region61: #{_lambda_.1} parent=1 // pred_fallthru
      _
    // Predicated region
    $region62: #{_lambda_.1} parent=1 // pred_check
      _
    $region63: #{_lambda_.1} parent=1 // pred_check_branch
      %6514 = sbr.rel (0) target = $region65
    $region64: #{_lambda_.1} parent=1 // pred_region
      %s6516 = ssub.s32 32, 32
      %6517 = vsyncadd [#allocation5], %s6516
      %s6519 = sshll.u32 [#allocation4], 4
      %s6520 = int_to_ptr.vmem [resolvable:$true] %s6519
      %6522 = dma.vmem_to_hbm [thread:$0]  %s6520, 32, %s13, [#allocation5]
    $region65: #{_lambda_.1} parent=1 // pred_fallthru
      _
    // Predicated region
    $region66: #{_lambda_.1} parent=1 // pred_check
      _
    $region67: #{_lambda_.1} parent=1 // pred_check_branch
      %6524 = sbr.rel (0) target = $region69
    $region68: #{_lambda_.1} parent=1 // pred_region
      %6525 = dma.done [#allocation5], 32
    $region69: #{_lambda_.1} parent=1 // pred_fallthru
      _
    %6526 = vsyncpa [#allocation5], 1

</llo_original>
